<compile_context>
chip_gen: v7x
topology: tpu7x:2x2x1
jax: 0.10.0
libtpu: 0.0.40
codegen_flags: <defaults>
</compile_context>

<pallas_src>
import functools

import jax
import jax.numpy as jnp
from jax.experimental import pallas as pl
from jax.experimental.pallas import tpu as pltpu


def _round_up(n, m):
    return ((n + m - 1) // m) * m


# ---------------------------------------------------------------------------
# Fused bidirectional LSTM layer kernel (single grid step, fused directions)
# ---------------------------------------------------------------------------
def _bilstm_layer_kernel(*refs, T, B, Bp, H, fuse_in, fuse_out):
    it = iter(refs)
    x_ref = next(it)
    if fuse_in:
        w1_ref = next(it)
        b1_ref = next(it)
    wih_ref = next(it)
    whh_ref = next(it)
    b_ref = next(it)
    if fuse_out:
        w2_ref = next(it)
        b2_ref = next(it)
    out_ref = next(it)
    hfin_ref = next(it)
    cfin_ref = next(it)
    gpre_sc = next(it)
    hs_sc = next(it) if fuse_out else None

    G = 4 * H
    # hidden-sequence destination: output ref directly unless linear2 is fused
    hs_dst = hs_sc if fuse_out else out_ref

    # ---- hoisted input projection (+ optional fused linear1/ReLU): one MXU
    #      matmul for every timestep and both directions at once -------------
    x = x_ref[...]                                              # (T*Bp, F_in)
    if fuse_in:                                                 # linear1 + ReLU
        x = jnp.maximum(
            jnp.dot(x, w1_ref[...], preferred_element_type=jnp.float32) + b1_ref[...],
            0.0)
    gpre_sc[...] = (jnp.dot(x, wih_ref[...], preferred_element_type=jnp.float32)
                    + b_ref[...])                               # (T*Bp, 8H)

    whh = whh_ref[...]                                          # (2H, 8H) block-diag

    def halfcell(gates, c_prev):
        # gate order [i, f, o, g]: batched sigmoid over contiguous i/f/o,
        # one tanh for g, one tanh for the new cell state.
        sio = jax.nn.sigmoid(gates[:, 0:3 * H])
        g = jnp.tanh(gates[:, 3 * H:4 * H])
        c = sio[:, H:2 * H] * c_prev + sio[:, 0:H] * g
        h = sio[:, 2 * H:3 * H] * jnp.tanh(c)
        return h, c

    def step(s, carry):
        h_cat, c_f, c_b = carry                                 # (Bp,2H),(Bp,H),(Bp,H)
        row_f = pl.multiple_of(s * Bp, Bp)                      # fwd reads time s
        row_b = pl.multiple_of((T - 1 - s) * Bp, Bp)            # bwd reads time T-1-s
        # ONE fused recurrent matmul for both directions (block-diagonal Whh)
        hh = jnp.dot(h_cat, whh, preferred_element_type=jnp.float32)   # (Bp, 8H)
        h_f, c_f = halfcell(gpre_sc[pl.ds(row_f, Bp), pl.ds(0, G)] + hh[:, 0:G], c_f)
        h_b, c_b = halfcell(gpre_sc[pl.ds(row_b, Bp), pl.ds(G, G)] + hh[:, G:2 * G], c_b)
        # write straight into the single (T*Bp, 2H) slab at column offsets
        hs_dst[pl.ds(row_f, Bp), pl.ds(0, H)] = h_f
        hs_dst[pl.ds(row_b, Bp), pl.ds(H, H)] = h_b
        return (jnp.concatenate([h_f, h_b], axis=-1), c_f, c_b)

    zeros_h = jnp.zeros((Bp, 2 * H), jnp.float32)
    zeros_c = jnp.zeros((Bp, H), jnp.float32)
    h_cat, c_f, c_b = jax.lax.fori_loop(0, T, step, (zeros_h, zeros_c, zeros_c),
                                        unroll=min(T, 8))      # cap unroll for large T

    hfin_ref[0] = h_cat[0:B, 0:H]
    hfin_ref[1] = h_cat[0:B, H:2 * H]
    cfin_ref[0] = c_f[0:B, :]
    cfin_ref[1] = c_b[0:B, :]

    if fuse_out:
        # fused linear2: emit y directly, no HBM writeback of the 2H activation
        out_ref[...] = (jnp.dot(hs_sc[...], w2_ref[...],
                                preferred_element_type=jnp.float32) + b2_ref[...])


def bilstm_layer(x2d, wih_cat, whh_blk, b_cat, T, B, Bp, *,
                 w1_t=None, b1=None, w2_t=None, b2=None):
    """Fused bidirectional LSTM layer.

    x2d:     (T*Bp, F_in)  input sequence, rows ordered (t, padded-batch)
    wih_cat: (F_in, 8H)    [fwd Wih^T | bwd Wih^T], gate order [i,f,o,g]
    whh_blk: (2H, 8H)      block-diagonal [Whh_f^T 0; 0 Whh_b^T]
    b_cat:   (1, 8H)       [fwd b_ih+b_hh | bwd b_ih+b_hh]
    w1_t/b1: optional fused linear1+ReLU applied to x2d first (first layer)
    w2_t/b2: optional fused linear2 applied to the hidden sequence (last layer)

    Returns (out (T*Bp, 2H) or (T*Bp, n_out), h_final (2,B,H), c_final (2,B,H)).
    """
    H = whh_blk.shape[0] // 2
    TBp, F_in = x2d.shape
    assert TBp == T * Bp
    fuse_in = w1_t is not None
    fuse_out = w2_t is not None
    n_out = w2_t.shape[1] if fuse_out else 2 * H

    kernel = functools.partial(_bilstm_layer_kernel, T=T, B=B, Bp=Bp, H=H,
                               fuse_in=fuse_in, fuse_out=fuse_out)

    inputs = [x2d]
    in_specs = [pl.BlockSpec((TBp, F_in), lambda i: (0, 0))]
    if fuse_in:
        inputs += [w1_t, b1]
        in_specs += [pl.BlockSpec(w1_t.shape, lambda i: (0, 0)),
                     pl.BlockSpec(b1.shape, lambda i: (0, 0))]
    inputs += [wih_cat, whh_blk, b_cat]
    in_specs += [pl.BlockSpec(wih_cat.shape, lambda i: (0, 0)),
                 pl.BlockSpec(whh_blk.shape, lambda i: (0, 0)),
                 pl.BlockSpec(b_cat.shape, lambda i: (0, 0))]
    if fuse_out:
        inputs += [w2_t, b2]
        in_specs += [pl.BlockSpec(w2_t.shape, lambda i: (0, 0)),
                     pl.BlockSpec(b2.shape, lambda i: (0, 0))]

    scratch = [pltpu.VMEM((TBp, 8 * H), jnp.float32)]           # precomputed gate inputs
    if fuse_out:
        scratch.append(pltpu.VMEM((TBp, 2 * H), jnp.float32))   # hidden slab for linear2

    return pl.pallas_call(
        kernel,
        out_shape=(
            jax.ShapeDtypeStruct((TBp, n_out), jnp.float32),
            jax.ShapeDtypeStruct((2, B, H), jnp.float32),
            jax.ShapeDtypeStruct((2, B, H), jnp.float32),
        ),
        grid=(1,),
        in_specs=in_specs,
        out_specs=(
            pl.BlockSpec((TBp, n_out), lambda i: (0, 0)),
            pl.BlockSpec((2, B, H), lambda i: (0, 0, 0)),
            pl.BlockSpec((2, B, H), lambda i: (0, 0, 0)),
        ),
        scratch_shapes=scratch,
        compiler_params=pltpu.CompilerParams(
            dimension_semantics=("arbitrary",),
            vmem_limit_bytes=32 * 1024 * 1024,
        ),
    )(*inputs)


# ---------------------------------------------------------------------------
# Parameter init (canonical PyTorch layout) + kernel-layout preparation
# ---------------------------------------------------------------------------
def init_params(key, n_input, n_output, n_hidden, n_layers=2, bidirectional=True):
    assert bidirectional
    ks = iter(jax.random.split(key, 64))

    def unif(shape, bound):
        return jax.random.uniform(next(ks), shape, jnp.float32, -bound, bound)

    H = n_hidden
    p = {}
    b1w = 1.0 / jnp.sqrt(n_input)
    p["w1_t"] = unif((n_input, H), b1w)       # linear1 (stored transposed)
    p["b1"] = unif((1, H), b1w)
    b2w = 1.0 / jnp.sqrt(2 * H)
    p["w2_t"] = unif((2 * H, n_output), b2w)  # linear2
    p["b2"] = unif((1, n_output), b2w)

    bl = 1.0 / jnp.sqrt(H)
    layers = []
    for layer in range(n_layers):
        f_in = H if layer == 0 else 2 * H
        layers.append({
            "wih_f": unif((f_in, 4 * H), bl),                  # gate order i,f,g,o
            "wih_b": unif((f_in, 4 * H), bl),
            "whh_f": unif((H, 4 * H), bl),
            "whh_b": unif((H, 4 * H), bl),
            "b_f": unif((4 * H,), bl) + unif((4 * H,), bl),    # b_ih + b_hh
            "b_b": unif((4 * H,), bl) + unif((4 * H,), bl),
        })
    p["lstm"] = layers
    return p


def prepare_params(params):
    """Canonical (PyTorch i,f,g,o) params -> kernel layout (i,f,o,g, fused dirs)."""
    H = params["w1_t"].shape[1]

    def perm(w):    # [..., i|f|g|o] -> [..., i|f|o|g]
        return jnp.concatenate(
            [w[..., 0:2 * H], w[..., 3 * H:4 * H], w[..., 2 * H:3 * H]], axis=-1)

    layers = []
    for lyr in params["lstm"]:
        wih_cat = jnp.concatenate([perm(lyr["wih_f"]), perm(lyr["wih_b"])], axis=-1)
        z = jnp.zeros((H, 4 * H), jnp.float32)
        whh_blk = jnp.concatenate([
            jnp.concatenate([perm(lyr["whh_f"]), z], axis=-1),
            jnp.concatenate([z, perm(lyr["whh_b"])], axis=-1)], axis=0)  # (2H, 8H)
        b_cat = jnp.concatenate([perm(lyr["b_f"]), perm(lyr["b_b"])],
                                axis=-1).reshape(1, 8 * H)
        layers.append({"wih_cat": wih_cat, "whh_blk": whh_blk, "b_cat": b_cat})
    return {"w1_t": params["w1_t"], "b1": params["b1"],
            "w2_t": params["w2_t"], "b2": params["b2"], "lstm": layers}


# ---------------------------------------------------------------------------
# Forward pass (glue in plain JAX, hot paths in Pallas)
# ---------------------------------------------------------------------------
def rnn_forward(prepped, x):
    B, T, n_input = x.shape
    Bp = _round_up(B, 8)                                        # sublane-align the batch
    xt = x.transpose(1, 0, 2)                                   # (T, B, F)
    if Bp != B:
        xt = jnp.pad(xt, ((0, 0), (0, Bp - B), (0, 0)))
    data = xt.reshape(T * Bp, n_input)

    n_layers = len(prepped["lstm"])
    h_fins, c_fins = [], []
    for li, lyr in enumerate(prepped["lstm"]):
        kw = {}
        if li == 0:                                             # fuse linear1+ReLU
            kw["w1_t"], kw["b1"] = prepped["w1_t"], prepped["b1"]
        if li == n_layers - 1:                                  # fuse linear2
            kw["w2_t"], kw["b2"] = prepped["w2_t"], prepped["b2"]
        data, hfin, cfin = bilstm_layer(data, lyr["wih_cat"], lyr["whh_blk"],
                                        lyr["b_cat"], T, B, Bp, **kw)
        h_fins.append(hfin)
        c_fins.append(cfin)

    y = data.reshape(T, Bp, -1)[:, :B].transpose(1, 0, 2)       # (B, T, n_out)
    h_n = jnp.concatenate(h_fins, axis=0)                       # (2*n_layers, B, H)
    c_n = jnp.concatenate(c_fins, axis=0)
    return y, None, (h_n, c_n)


# ---------------------------------------------------------------------------
# Pure-JAX reference (for correctness check; canonical PyTorch semantics)
# ---------------------------------------------------------------------------
def _lstm_dir_ref(x_tbf, wih_t, whh_t, b):
    T, B, _ = x_tbf.shape
    H = whh_t.shape[0]
    h = jnp.zeros((B, H), jnp.float32)
    c = jnp.zeros((B, H), jnp.float32)
    hs = []
    for t in range(T):
        gates = x_tbf[t] @ wih_t + h @ whh_t + b
        i = jax.nn.sigmoid(gates[:, :H])
        f = jax.nn.sigmoid(gates[:, H:2 * H])
        g = jnp.tanh(gates[:, 2 * H:3 * H])
        o = jax.nn.sigmoid(gates[:, 3 * H:])
        c = f * c + i * g
        h = o * jnp.tanh(c)
        hs.append(h)
    return jnp.stack(hs), h, c


def rnn_forward_ref(params, x):
    B, T, n_input = x.shape
    H = params["w1_t"].shape[1]
    h1 = jnp.maximum(x.reshape(B * T, n_input) @ params["w1_t"] + params["b1"], 0.0)
    data = h1.reshape(B, T, H).transpose(1, 0, 2)               # (T, B, H)
    h_fins, c_fins = [], []
    for layer in params["lstm"]:
        hs_f, hf, cf = _lstm_dir_ref(data, layer["wih_f"], layer["whh_f"], layer["b_f"])
        hs_b_rev, hb, cb = _lstm_dir_ref(data[::-1], layer["wih_b"], layer["whh_b"],
                                         layer["b_b"])
        h_fins += [hf, hb]
        c_fins += [cf, cb]
        data = jnp.concatenate([hs_f, hs_b_rev[::-1]], axis=-1)
    y = (data.transpose(1, 0, 2).reshape(B * T, 2 * H) @ params["w2_t"]
         + params["b2"]).reshape(B, T, -1)
    return y, None, (jnp.stack(h_fins), jnp.stack(c_fins))


# ---------------------------------------------------------------------------
if __name__ == "__main__":
    n_input, n_output, n_hidden, seq_length = 12, 6, 32, 8
    batch = 2

    key = jax.random.PRNGKey(0)
    kp, kx = jax.random.split(key)
    params = init_params(kp, n_input, n_output, n_hidden)
    prepped = prepare_params(params)
    x = jax.random.normal(kx, (batch, seq_length, n_input), jnp.float32)

    fwd = jax.jit(rnn_forward)
    y, out_lengths, (h_n, c_n) = fwd(prepped, x)
    jax.block_until_ready((y, h_n, c_n))

    y_ref, _, (h_ref, c_ref) = rnn_forward_ref(params, x)
    assert y.shape == (batch, seq_length, n_output)
    assert h_n.shape == (4, batch, n_hidden) and c_n.shape == (4, batch, n_hidden)
    assert out_lengths is None
    assert jnp.allclose(y, y_ref, rtol=1e-3, atol=1e-3)
    assert jnp.allclose(h_n, h_ref, rtol=1e-3, atol=1e-3)
    assert jnp.allclose(c_n, c_ref, rtol=1e-3, atol=1e-3)

    print("KERNEL_OK")
</pallas_src>

<mosaic_0001>
module attributes {stable_mosaic.version = 11 : i64} {
  func.func @_bilstm_layer_kernel(%arg0: i32, %arg1: memref<64x12xf32, #tpu.memory_space<vmem>>, %arg2: memref<12x32xf32, #tpu.memory_space<vmem>>, %arg3: memref<1x32xf32, #tpu.memory_space<vmem>>, %arg4: memref<32x256xf32, #tpu.memory_space<vmem>>, %arg5: memref<64x256xf32, #tpu.memory_space<vmem>>, %arg6: memref<1x256xf32, #tpu.memory_space<vmem>>, %arg7: memref<64x64xf32, #tpu.memory_space<vmem>>, %arg8: memref<2x2x32xf32, #tpu.memory_space<vmem>>, %arg9: memref<2x2x32xf32, #tpu.memory_space<vmem>>, %arg10: memref<64x256xf32, #tpu.memory_space<vmem>>) attributes {dimension_semantics = [#tpu.dimension_semantics<arbitrary>], iteration_bounds = array<i64: 1>, scalar_prefetch = 0 : i64, scratch_operands = 1 : i64, tpu.core_type = #tpu.core_type<tc>, window_params = [{pipeline_mode = #tpu.pipeline_mode<synchronous>, transform_indices = @transform_0, window_bounds = array<i64: 64, 12>}, {pipeline_mode = #tpu.pipeline_mode<synchronous>, transform_indices = @transform_1, window_bounds = array<i64: 12, 32>}, {pipeline_mode = #tpu.pipeline_mode<synchronous>, transform_indices = @transform_2, window_bounds = array<i64: 1, 32>}, {pipeline_mode = #tpu.pipeline_mode<synchronous>, transform_indices = @transform_3, window_bounds = array<i64: 32, 256>}, {pipeline_mode = #tpu.pipeline_mode<synchronous>, transform_indices = @transform_4, window_bounds = array<i64: 64, 256>}, {pipeline_mode = #tpu.pipeline_mode<synchronous>, transform_indices = @transform_5, window_bounds = array<i64: 1, 256>}, {pipeline_mode = #tpu.pipeline_mode<synchronous>, transform_indices = @transform_6, window_bounds = array<i64: 64, 64>}, {pipeline_mode = #tpu.pipeline_mode<synchronous>, transform_indices = @transform_7, window_bounds = array<i64: 2, 2, 32>}, {pipeline_mode = #tpu.pipeline_mode<synchronous>, transform_indices = @transform_8, window_bounds = array<i64: 2, 2, 32>}]} {
    %c0 = arith.constant 0 : index
    %c0_0 = arith.constant 0 : index
    %0 = vector.load %arg1[%c0, %c0_0] : memref<64x12xf32, #tpu.memory_space<vmem>>, vector<64x12xf32>
    %c0_1 = arith.constant 0 : index
    %c0_2 = arith.constant 0 : index
    %1 = vector.load %arg2[%c0_1, %c0_2] : memref<12x32xf32, #tpu.memory_space<vmem>>, vector<12x32xf32>
    %cst = arith.constant dense<0.000000e+00> : vector<64x32xf32>
    %2 = tpu.matmul %0, %1, %cst {dimension_numbers = #tpu.dot_dimension_numbers<[1], [0], [0], [1], [0, 0, 1, 1], [], []>} : vector<64x12xf32>, vector<12x32xf32>, vector<64x32xf32> -> vector<64x32xf32>
    %c0_3 = arith.constant 0 : index
    %c0_4 = arith.constant 0 : index
    %3 = vector.load %arg3[%c0_3, %c0_4] : memref<1x32xf32, #tpu.memory_space<vmem>>, vector<1x32xf32>
    %4 = vector.broadcast %3 : vector<1x32xf32> to vector<64x32xf32>
    %5 = arith.addf %2, %4 : vector<64x32xf32>
    %cst_5 = arith.constant 0.000000e+00 : f32
    %6 = vector.broadcast %cst_5 : f32 to vector<64x32xf32>
    %7 = arith.maximumf %5, %6 : vector<64x32xf32>
    %c0_6 = arith.constant 0 : index
    %c0_7 = arith.constant 0 : index
    %8 = vector.load %arg4[%c0_6, %c0_7] : memref<32x256xf32, #tpu.memory_space<vmem>>, vector<32x256xf32>
    %cst_8 = arith.constant dense<0.000000e+00> : vector<64x256xf32>
    %9 = tpu.matmul %7, %8, %cst_8 {dimension_numbers = #tpu.dot_dimension_numbers<[1], [0], [0], [1], [0, 0, 1, 1], [], []>} : vector<64x32xf32>, vector<32x256xf32>, vector<64x256xf32> -> vector<64x256xf32>
    %c0_9 = arith.constant 0 : index
    %c0_10 = arith.constant 0 : index
    %10 = vector.load %arg6[%c0_9, %c0_10] : memref<1x256xf32, #tpu.memory_space<vmem>>, vector<1x256xf32>
    %11 = vector.broadcast %10 : vector<1x256xf32> to vector<64x256xf32>
    %12 = arith.addf %9, %11 : vector<64x256xf32>
    %c0_11 = arith.constant 0 : index
    %c0_12 = arith.constant 0 : index
    %13 = vector.load %arg10[%c0_11, %c0_12] : memref<64x256xf32, #tpu.memory_space<vmem>>, vector<64x256xf32>
    tpu.vector_store %arg10[%c0_11, %c0_12], %12 {strides = array<i32>} : memref<64x256xf32, #tpu.memory_space<vmem>>, vector<64x256xf32>,
    %c0_13 = arith.constant 0 : index
    %c0_14 = arith.constant 0 : index
    %14 = vector.load %arg5[%c0_13, %c0_14] : memref<64x256xf32, #tpu.memory_space<vmem>>, vector<64x256xf32>
    %cst_15 = arith.constant 0.000000e+00 : f32
    %15 = vector.broadcast %cst_15 : f32 to vector<8x64xf32>
    %cst_16 = arith.constant 0.000000e+00 : f32
    %16 = vector.broadcast %cst_16 : f32 to vector<8x32xf32>
    %c0_i32 = arith.constant 0 : i32
    %c8_i32 = arith.constant 8 : i32
    %17 = arith.muli %c0_i32, %c8_i32 : i32
    %18 = tpu.assume_multiple %17, 8 : i32
    %c7_i32 = arith.constant 7 : i32
    %19 = arith.subi %c7_i32, %c0_i32 : i32
    %c8_i32_17 = arith.constant 8 : i32
    %20 = arith.muli %19, %c8_i32_17 : i32
    %21 = tpu.assume_multiple %20, 8 : i32
    %cst_18 = arith.constant dense<0.000000e+00> : vector<8x256xf32>
    %22 = tpu.matmul %15, %14, %cst_18 {dimension_numbers = #tpu.dot_dimension_numbers<[1], [0], [0], [1], [0, 0, 1, 1], [], []>} : vector<8x64xf32>, vector<64x256xf32>, vector<8x256xf32> -> vector<8x256xf32>
    %23 = arith.index_cast %18 : i32 to index
    %c0_19 = arith.constant 0 : index
    %24 = vector.load %arg10[%23, %c0_19] : memref<64x256xf32, #tpu.memory_space<vmem>>, vector<8x128xf32>
    %25 = vector.extract_strided_slice %22 {offsets = [0, 0], sizes = [8, 128], strides = [1, 1]} : vector<8x256xf32> to vector<8x128xf32>
    %26 = arith.addf %24, %25 : vector<8x128xf32>
    %27 = vector.extract_strided_slice %26 {offsets = [0, 0], sizes = [8, 96], strides = [1, 1]} : vector<8x128xf32> to vector<8x96xf32>
    %28 = arith.negf %27 : vector<8x96xf32>
    %29 = math.exp %28 : vector<8x96xf32>
    %cst_20 = arith.constant 1.000000e+00 : f32
    %30 = vector.broadcast %cst_20 : f32 to vector<8x96xf32>
    %31 = arith.addf %30, %29 : vector<8x96xf32>
    %32 = arith.divf %30, %31 : vector<8x96xf32>
    %33 = vector.extract_strided_slice %26 {offsets = [0, 96], sizes = [8, 32], strides = [1, 1]} : vector<8x128xf32> to vector<8x32xf32>
    %34 = math.tanh %33 : vector<8x32xf32>
    %35 = vector.extract_strided_slice %32 {offsets = [0, 32], sizes = [8, 32], strides = [1, 1]} : vector<8x96xf32> to vector<8x32xf32>
    %36 = arith.mulf %35, %16 : vector<8x32xf32>
    %37 = vector.extract_strided_slice %32 {offsets = [0, 0], sizes = [8, 32], strides = [1, 1]} : vector<8x96xf32> to vector<8x32xf32>
    %38 = arith.mulf %37, %34 : vector<8x32xf32>
    %39 = arith.addf %36, %38 : vector<8x32xf32>
    %40 = vector.extract_strided_slice %32 {offsets = [0, 64], sizes = [8, 32], strides = [1, 1]} : vector<8x96xf32> to vector<8x32xf32>
    %41 = math.tanh %39 : vector<8x32xf32>
    %42 = arith.mulf %40, %41 : vector<8x32xf32>
    %43 = arith.index_cast %21 : i32 to index
    %c128 = arith.constant 128 : index
    %44 = vector.load %arg10[%43, %c128] : memref<64x256xf32, #tpu.memory_space<vmem>>, vector<8x128xf32>
    %45 = vector.extract_strided_slice %22 {offsets = [0, 128], sizes = [8, 128], strides = [1, 1]} : vector<8x256xf32> to vector<8x128xf32>
    %46 = arith.addf %44, %45 : vector<8x128xf32>
    %47 = vector.extract_strided_slice %46 {offsets = [0, 0], sizes = [8, 96], strides = [1, 1]} : vector<8x128xf32> to vector<8x96xf32>
    %48 = arith.negf %47 : vector<8x96xf32>
    %49 = math.exp %48 : vector<8x96xf32>
    %cst_21 = arith.constant 1.000000e+00 : f32
    %50 = vector.broadcast %cst_21 : f32 to vector<8x96xf32>
    %51 = arith.addf %50, %49 : vector<8x96xf32>
    %52 = arith.divf %50, %51 : vector<8x96xf32>
    %53 = vector.extract_strided_slice %46 {offsets = [0, 96], sizes = [8, 32], strides = [1, 1]} : vector<8x128xf32> to vector<8x32xf32>
    %54 = math.tanh %53 : vector<8x32xf32>
    %55 = vector.extract_strided_slice %52 {offsets = [0, 32], sizes = [8, 32], strides = [1, 1]} : vector<8x96xf32> to vector<8x32xf32>
    %56 = arith.mulf %55, %16 : vector<8x32xf32>
    %57 = vector.extract_strided_slice %52 {offsets = [0, 0], sizes = [8, 32], strides = [1, 1]} : vector<8x96xf32> to vector<8x32xf32>
    %58 = arith.mulf %57, %54 : vector<8x32xf32>
    %59 = arith.addf %56, %58 : vector<8x32xf32>
    %60 = vector.extract_strided_slice %52 {offsets = [0, 64], sizes = [8, 32], strides = [1, 1]} : vector<8x96xf32> to vector<8x32xf32>
    %61 = math.tanh %59 : vector<8x32xf32>
    %62 = arith.mulf %60, %61 : vector<8x32xf32>
    %63 = arith.index_cast %18 : i32 to index
    %c0_22 = arith.constant 0 : index
    %64 = vector.load %arg7[%63, %c0_22] : memref<64x64xf32, #tpu.memory_space<vmem>>, vector<8x32xf32>
    tpu.vector_store %arg7[%63, %c0_22], %42 {strides = array<i32>} : memref<64x64xf32, #tpu.memory_space<vmem>>, vector<8x32xf32>,
    %65 = arith.index_cast %21 : i32 to index
    %c32 = arith.constant 32 : index
    %66 = vector.load %arg7[%65, %c32] : memref<64x64xf32, #tpu.memory_space<vmem>>, vector<8x32xf32>
    tpu.vector_store %arg7[%65, %c32], %62 {strides = array<i32>} : memref<64x64xf32, #tpu.memory_space<vmem>>, vector<8x32xf32>,
    %67 = tpu.concatenate %42, %62 in 1 : vector<8x32xf32>, vector<8x32xf32> -> vector<8x64xf32>
    %c1_i32 = arith.constant 1 : i32
    %c8_i32_23 = arith.constant 8 : i32
    %68 = arith.muli %c1_i32, %c8_i32_23 : i32
    %69 = tpu.assume_multiple %68, 8 : i32
    %c7_i32_24 = arith.constant 7 : i32
    %70 = arith.subi %c7_i32_24, %c1_i32 : i32
    %c8_i32_25 = arith.constant 8 : i32
    %71 = arith.muli %70, %c8_i32_25 : i32
    %72 = tpu.assume_multiple %71, 8 : i32
    %cst_26 = arith.constant dense<0.000000e+00> : vector<8x256xf32>
    %73 = tpu.matmul %67, %14, %cst_26 {dimension_numbers = #tpu.dot_dimension_numbers<[1], [0], [0], [1], [0, 0, 1, 1], [], []>} : vector<8x64xf32>, vector<64x256xf32>, vector<8x256xf32> -> vector<8x256xf32>
    %74 = arith.index_cast %69 : i32 to index
    %c0_27 = arith.constant 0 : index
    %75 = vector.load %arg10[%74, %c0_27] : memref<64x256xf32, #tpu.memory_space<vmem>>, vector<8x128xf32>
    %76 = vector.extract_strided_slice %73 {offsets = [0, 0], sizes = [8, 128], strides = [1, 1]} : vector<8x256xf32> to vector<8x128xf32>
    %77 = arith.addf %75, %76 : vector<8x128xf32>
    %78 = vector.extract_strided_slice %77 {offsets = [0, 0], sizes = [8, 96], strides = [1, 1]} : vector<8x128xf32> to vector<8x96xf32>
    %79 = arith.negf %78 : vector<8x96xf32>
    %80 = math.exp %79 : vector<8x96xf32>
    %cst_28 = arith.constant 1.000000e+00 : f32
    %81 = vector.broadcast %cst_28 : f32 to vector<8x96xf32>
    %82 = arith.addf %81, %80 : vector<8x96xf32>
    %83 = arith.divf %81, %82 : vector<8x96xf32>
    %84 = vector.extract_strided_slice %77 {offsets = [0, 96], sizes = [8, 32], strides = [1, 1]} : vector<8x128xf32> to vector<8x32xf32>
    %85 = math.tanh %84 : vector<8x32xf32>
    %86 = vector.extract_strided_slice %83 {offsets = [0, 32], sizes = [8, 32], strides = [1, 1]} : vector<8x96xf32> to vector<8x32xf32>
    %87 = arith.mulf %86, %39 : vector<8x32xf32>
    %88 = vector.extract_strided_slice %83 {offsets = [0, 0], sizes = [8, 32], strides = [1, 1]} : vector<8x96xf32> to vector<8x32xf32>
    %89 = arith.mulf %88, %85 : vector<8x32xf32>
    %90 = arith.addf %87, %89 : vector<8x32xf32>
    %91 = vector.extract_strided_slice %83 {offsets = [0, 64], sizes = [8, 32], strides = [1, 1]} : vector<8x96xf32> to vector<8x32xf32>
    %92 = math.tanh %90 : vector<8x32xf32>
    %93 = arith.mulf %91, %92 : vector<8x32xf32>
    %94 = arith.index_cast %72 : i32 to index
    %c128_29 = arith.constant 128 : index
    %95 = vector.load %arg10[%94, %c128_29] : memref<64x256xf32, #tpu.memory_space<vmem>>, vector<8x128xf32>
    %96 = vector.extract_strided_slice %73 {offsets = [0, 128], sizes = [8, 128], strides = [1, 1]} : vector<8x256xf32> to vector<8x128xf32>
    %97 = arith.addf %95, %96 : vector<8x128xf32>
    %98 = vector.extract_strided_slice %97 {offsets = [0, 0], sizes = [8, 96], strides = [1, 1]} : vector<8x128xf32> to vector<8x96xf32>
    %99 = arith.negf %98 : vector<8x96xf32>
    %100 = math.exp %99 : vector<8x96xf32>
    %cst_30 = arith.constant 1.000000e+00 : f32
    %101 = vector.broadcast %cst_30 : f32 to vector<8x96xf32>
    %102 = arith.addf %101, %100 : vector<8x96xf32>
    %103 = arith.divf %101, %102 : vector<8x96xf32>
    %104 = vector.extract_strided_slice %97 {offsets = [0, 96], sizes = [8, 32], strides = [1, 1]} : vector<8x128xf32> to vector<8x32xf32>
    %105 = math.tanh %104 : vector<8x32xf32>
    %106 = vector.extract_strided_slice %103 {offsets = [0, 32], sizes = [8, 32], strides = [1, 1]} : vector<8x96xf32> to vector<8x32xf32>
    %107 = arith.mulf %106, %59 : vector<8x32xf32>
    %108 = vector.extract_strided_slice %103 {offsets = [0, 0], sizes = [8, 32], strides = [1, 1]} : vector<8x96xf32> to vector<8x32xf32>
    %109 = arith.mulf %108, %105 : vector<8x32xf32>
    %110 = arith.addf %107, %109 : vector<8x32xf32>
    %111 = vector.extract_strided_slice %103 {offsets = [0, 64], sizes = [8, 32], strides = [1, 1]} : vector<8x96xf32> to vector<8x32xf32>
    %112 = math.tanh %110 : vector<8x32xf32>
    %113 = arith.mulf %111, %112 : vector<8x32xf32>
    %114 = arith.index_cast %69 : i32 to index
    %c0_31 = arith.constant 0 : index
    %115 = vector.load %arg7[%114, %c0_31] : memref<64x64xf32, #tpu.memory_space<vmem>>, vector<8x32xf32>
    tpu.vector_store %arg7[%114, %c0_31], %93 {strides = array<i32>} : memref<64x64xf32, #tpu.memory_space<vmem>>, vector<8x32xf32>,
    %116 = arith.index_cast %72 : i32 to index
    %c32_32 = arith.constant 32 : index
    %117 = vector.load %arg7[%116, %c32_32] : memref<64x64xf32, #tpu.memory_space<vmem>>, vector<8x32xf32>
    tpu.vector_store %arg7[%116, %c32_32], %113 {strides = array<i32>} : memref<64x64xf32, #tpu.memory_space<vmem>>, vector<8x32xf32>,
    %118 = tpu.concatenate %93, %113 in 1 : vector<8x32xf32>, vector<8x32xf32> -> vector<8x64xf32>
    %c2_i32 = arith.constant 2 : i32
    %c8_i32_33 = arith.constant 8 : i32
    %119 = arith.muli %c2_i32, %c8_i32_33 : i32
    %120 = tpu.assume_multiple %119, 8 : i32
    %c7_i32_34 = arith.constant 7 : i32
    %121 = arith.subi %c7_i32_34, %c2_i32 : i32
    %c8_i32_35 = arith.constant 8 : i32
    %122 = arith.muli %121, %c8_i32_35 : i32
    %123 = tpu.assume_multiple %122, 8 : i32
    %cst_36 = arith.constant dense<0.000000e+00> : vector<8x256xf32>
    %124 = tpu.matmul %118, %14, %cst_36 {dimension_numbers = #tpu.dot_dimension_numbers<[1], [0], [0], [1], [0, 0, 1, 1], [], []>} : vector<8x64xf32>, vector<64x256xf32>, vector<8x256xf32> -> vector<8x256xf32>
    %125 = arith.index_cast %120 : i32 to index
    %c0_37 = arith.constant 0 : index
    %126 = vector.load %arg10[%125, %c0_37] : memref<64x256xf32, #tpu.memory_space<vmem>>, vector<8x128xf32>
    %127 = vector.extract_strided_slice %124 {offsets = [0, 0], sizes = [8, 128], strides = [1, 1]} : vector<8x256xf32> to vector<8x128xf32>
    %128 = arith.addf %126, %127 : vector<8x128xf32>
    %129 = vector.extract_strided_slice %128 {offsets = [0, 0], sizes = [8, 96], strides = [1, 1]} : vector<8x128xf32> to vector<8x96xf32>
    %130 = arith.negf %129 : vector<8x96xf32>
    %131 = math.exp %130 : vector<8x96xf32>
    %cst_38 = arith.constant 1.000000e+00 : f32
    %132 = vector.broadcast %cst_38 : f32 to vector<8x96xf32>
    %133 = arith.addf %132, %131 : vector<8x96xf32>
    %134 = arith.divf %132, %133 : vector<8x96xf32>
    %135 = vector.extract_strided_slice %128 {offsets = [0, 96], sizes = [8, 32], strides = [1, 1]} : vector<8x128xf32> to vector<8x32xf32>
    %136 = math.tanh %135 : vector<8x32xf32>
    %137 = vector.extract_strided_slice %134 {offsets = [0, 32], sizes = [8, 32], strides = [1, 1]} : vector<8x96xf32> to vector<8x32xf32>
    %138 = arith.mulf %137, %90 : vector<8x32xf32>
    %139 = vector.extract_strided_slice %134 {offsets = [0, 0], sizes = [8, 32], strides = [1, 1]} : vector<8x96xf32> to vector<8x32xf32>
    %140 = arith.mulf %139, %136 : vector<8x32xf32>
    %141 = arith.addf %138, %140 : vector<8x32xf32>
    %142 = vector.extract_strided_slice %134 {offsets = [0, 64], sizes = [8, 32], strides = [1, 1]} : vector<8x96xf32> to vector<8x32xf32>
    %143 = math.tanh %141 : vector<8x32xf32>
    %144 = arith.mulf %142, %143 : vector<8x32xf32>
    %145 = arith.index_cast %123 : i32 to index
    %c128_39 = arith.constant 128 : index
    %146 = vector.load %arg10[%145, %c128_39] : memref<64x256xf32, #tpu.memory_space<vmem>>, vector<8x128xf32>
    %147 = vector.extract_strided_slice %124 {offsets = [0, 128], sizes = [8, 128], strides = [1, 1]} : vector<8x256xf32> to vector<8x128xf32>
    %148 = arith.addf %146, %147 : vector<8x128xf32>
    %149 = vector.extract_strided_slice %148 {offsets = [0, 0], sizes = [8, 96], strides = [1, 1]} : vector<8x128xf32> to vector<8x96xf32>
    %150 = arith.negf %149 : vector<8x96xf32>
    %151 = math.exp %150 : vector<8x96xf32>
    %cst_40 = arith.constant 1.000000e+00 : f32
    %152 = vector.broadcast %cst_40 : f32 to vector<8x96xf32>
    %153 = arith.addf %152, %151 : vector<8x96xf32>
    %154 = arith.divf %152, %153 : vector<8x96xf32>
    %155 = vector.extract_strided_slice %148 {offsets = [0, 96], sizes = [8, 32], strides = [1, 1]} : vector<8x128xf32> to vector<8x32xf32>
    %156 = math.tanh %155 : vector<8x32xf32>
    %157 = vector.extract_strided_slice %154 {offsets = [0, 32], sizes = [8, 32], strides = [1, 1]} : vector<8x96xf32> to vector<8x32xf32>
    %158 = arith.mulf %157, %110 : vector<8x32xf32>
    %159 = vector.extract_strided_slice %154 {offsets = [0, 0], sizes = [8, 32], strides = [1, 1]} : vector<8x96xf32> to vector<8x32xf32>
    %160 = arith.mulf %159, %156 : vector<8x32xf32>
    %161 = arith.addf %158, %160 : vector<8x32xf32>
    %162 = vector.extract_strided_slice %154 {offsets = [0, 64], sizes = [8, 32], strides = [1, 1]} : vector<8x96xf32> to vector<8x32xf32>
    %163 = math.tanh %161 : vector<8x32xf32>
    %164 = arith.mulf %162, %163 : vector<8x32xf32>
    %165 = arith.index_cast %120 : i32 to index
    %c0_41 = arith.constant 0 : index
    %166 = vector.load %arg7[%165, %c0_41] : memref<64x64xf32, #tpu.memory_space<vmem>>, vector<8x32xf32>
    tpu.vector_store %arg7[%165, %c0_41], %144 {strides = array<i32>} : memref<64x64xf32, #tpu.memory_space<vmem>>, vector<8x32xf32>,
    %167 = arith.index_cast %123 : i32 to index
    %c32_42 = arith.constant 32 : index
    %168 = vector.load %arg7[%167, %c32_42] : memref<64x64xf32, #tpu.memory_space<vmem>>, vector<8x32xf32>
    tpu.vector_store %arg7[%167, %c32_42], %164 {strides = array<i32>} : memref<64x64xf32, #tpu.memory_space<vmem>>, vector<8x32xf32>,
    %169 = tpu.concatenate %144, %164 in 1 : vector<8x32xf32>, vector<8x32xf32> -> vector<8x64xf32>
    %c3_i32 = arith.constant 3 : i32
    %c8_i32_43 = arith.constant 8 : i32
    %170 = arith.muli %c3_i32, %c8_i32_43 : i32
    %171 = tpu.assume_multiple %170, 8 : i32
    %c7_i32_44 = arith.constant 7 : i32
    %172 = arith.subi %c7_i32_44, %c3_i32 : i32
    %c8_i32_45 = arith.constant 8 : i32
    %173 = arith.muli %172, %c8_i32_45 : i32
    %174 = tpu.assume_multiple %173, 8 : i32
    %cst_46 = arith.constant dense<0.000000e+00> : vector<8x256xf32>
    %175 = tpu.matmul %169, %14, %cst_46 {dimension_numbers = #tpu.dot_dimension_numbers<[1], [0], [0], [1], [0, 0, 1, 1], [], []>} : vector<8x64xf32>, vector<64x256xf32>, vector<8x256xf32> -> vector<8x256xf32>
    %176 = arith.index_cast %171 : i32 to index
    %c0_47 = arith.constant 0 : index
    %177 = vector.load %arg10[%176, %c0_47] : memref<64x256xf32, #tpu.memory_space<vmem>>, vector<8x128xf32>
    %178 = vector.extract_strided_slice %175 {offsets = [0, 0], sizes = [8, 128], strides = [1, 1]} : vector<8x256xf32> to vector<8x128xf32>
    %179 = arith.addf %177, %178 : vector<8x128xf32>
    %180 = vector.extract_strided_slice %179 {offsets = [0, 0], sizes = [8, 96], strides = [1, 1]} : vector<8x128xf32> to vector<8x96xf32>
    %181 = arith.negf %180 : vector<8x96xf32>
    %182 = math.exp %181 : vector<8x96xf32>
    %cst_48 = arith.constant 1.000000e+00 : f32
    %183 = vector.broadcast %cst_48 : f32 to vector<8x96xf32>
    %184 = arith.addf %183, %182 : vector<8x96xf32>
    %185 = arith.divf %183, %184 : vector<8x96xf32>
    %186 = vector.extract_strided_slice %179 {offsets = [0, 96], sizes = [8, 32], strides = [1, 1]} : vector<8x128xf32> to vector<8x32xf32>
    %187 = math.tanh %186 : vector<8x32xf32>
    %188 = vector.extract_strided_slice %185 {offsets = [0, 32], sizes = [8, 32], strides = [1, 1]} : vector<8x96xf32> to vector<8x32xf32>
    %189 = arith.mulf %188, %141 : vector<8x32xf32>
    %190 = vector.extract_strided_slice %185 {offsets = [0, 0], sizes = [8, 32], strides = [1, 1]} : vector<8x96xf32> to vector<8x32xf32>
    %191 = arith.mulf %190, %187 : vector<8x32xf32>
    %192 = arith.addf %189, %191 : vector<8x32xf32>
    %193 = vector.extract_strided_slice %185 {offsets = [0, 64], sizes = [8, 32], strides = [1, 1]} : vector<8x96xf32> to vector<8x32xf32>
    %194 = math.tanh %192 : vector<8x32xf32>
    %195 = arith.mulf %193, %194 : vector<8x32xf32>
    %196 = arith.index_cast %174 : i32 to index
    %c128_49 = arith.constant 128 : index
    %197 = vector.load %arg10[%196, %c128_49] : memref<64x256xf32, #tpu.memory_space<vmem>>, vector<8x128xf32>
    %198 = vector.extract_strided_slice %175 {offsets = [0, 128], sizes = [8, 128], strides = [1, 1]} : vector<8x256xf32> to vector<8x128xf32>
    %199 = arith.addf %197, %198 : vector<8x128xf32>
    %200 = vector.extract_strided_slice %199 {offsets = [0, 0], sizes = [8, 96], strides = [1, 1]} : vector<8x128xf32> to vector<8x96xf32>
    %201 = arith.negf %200 : vector<8x96xf32>
    %202 = math.exp %201 : vector<8x96xf32>
    %cst_50 = arith.constant 1.000000e+00 : f32
    %203 = vector.broadcast %cst_50 : f32 to vector<8x96xf32>
    %204 = arith.addf %203, %202 : vector<8x96xf32>
    %205 = arith.divf %203, %204 : vector<8x96xf32>
    %206 = vector.extract_strided_slice %199 {offsets = [0, 96], sizes = [8, 32], strides = [1, 1]} : vector<8x128xf32> to vector<8x32xf32>
    %207 = math.tanh %206 : vector<8x32xf32>
    %208 = vector.extract_strided_slice %205 {offsets = [0, 32], sizes = [8, 32], strides = [1, 1]} : vector<8x96xf32> to vector<8x32xf32>
    %209 = arith.mulf %208, %161 : vector<8x32xf32>
    %210 = vector.extract_strided_slice %205 {offsets = [0, 0], sizes = [8, 32], strides = [1, 1]} : vector<8x96xf32> to vector<8x32xf32>
    %211 = arith.mulf %210, %207 : vector<8x32xf32>
    %212 = arith.addf %209, %211 : vector<8x32xf32>
    %213 = vector.extract_strided_slice %205 {offsets = [0, 64], sizes = [8, 32], strides = [1, 1]} : vector<8x96xf32> to vector<8x32xf32>
    %214 = math.tanh %212 : vector<8x32xf32>
    %215 = arith.mulf %213, %214 : vector<8x32xf32>
    %216 = arith.index_cast %171 : i32 to index
    %c0_51 = arith.constant 0 : index
    %217 = vector.load %arg7[%216, %c0_51] : memref<64x64xf32, #tpu.memory_space<vmem>>, vector<8x32xf32>
    tpu.vector_store %arg7[%216, %c0_51], %195 {strides = array<i32>} : memref<64x64xf32, #tpu.memory_space<vmem>>, vector<8x32xf32>,
    %218 = arith.index_cast %174 : i32 to index
    %c32_52 = arith.constant 32 : index
    %219 = vector.load %arg7[%218, %c32_52] : memref<64x64xf32, #tpu.memory_space<vmem>>, vector<8x32xf32>
    tpu.vector_store %arg7[%218, %c32_52], %215 {strides = array<i32>} : memref<64x64xf32, #tpu.memory_space<vmem>>, vector<8x32xf32>,
    %220 = tpu.concatenate %195, %215 in 1 : vector<8x32xf32>, vector<8x32xf32> -> vector<8x64xf32>
    %c4_i32 = arith.constant 4 : i32
    %c8_i32_53 = arith.constant 8 : i32
    %221 = arith.muli %c4_i32, %c8_i32_53 : i32
    %222 = tpu.assume_multiple %221, 8 : i32
    %c7_i32_54 = arith.constant 7 : i32
    %223 = arith.subi %c7_i32_54, %c4_i32 : i32
    %c8_i32_55 = arith.constant 8 : i32
    %224 = arith.muli %223, %c8_i32_55 : i32
    %225 = tpu.assume_multiple %224, 8 : i32
    %cst_56 = arith.constant dense<0.000000e+00> : vector<8x256xf32>
    %226 = tpu.matmul %220, %14, %cst_56 {dimension_numbers = #tpu.dot_dimension_numbers<[1], [0], [0], [1], [0, 0, 1, 1], [], []>} : vector<8x64xf32>, vector<64x256xf32>, vector<8x256xf32> -> vector<8x256xf32>
    %227 = arith.index_cast %222 : i32 to index
    %c0_57 = arith.constant 0 : index
    %228 = vector.load %arg10[%227, %c0_57] : memref<64x256xf32, #tpu.memory_space<vmem>>, vector<8x128xf32>
    %229 = vector.extract_strided_slice %226 {offsets = [0, 0], sizes = [8, 128], strides = [1, 1]} : vector<8x256xf32> to vector<8x128xf32>
    %230 = arith.addf %228, %229 : vector<8x128xf32>
    %231 = vector.extract_strided_slice %230 {offsets = [0, 0], sizes = [8, 96], strides = [1, 1]} : vector<8x128xf32> to vector<8x96xf32>
    %232 = arith.negf %231 : vector<8x96xf32>
    %233 = math.exp %232 : vector<8x96xf32>
    %cst_58 = arith.constant 1.000000e+00 : f32
    %234 = vector.broadcast %cst_58 : f32 to vector<8x96xf32>
    %235 = arith.addf %234, %233 : vector<8x96xf32>
    %236 = arith.divf %234, %235 : vector<8x96xf32>
    %237 = vector.extract_strided_slice %230 {offsets = [0, 96], sizes = [8, 32], strides = [1, 1]} : vector<8x128xf32> to vector<8x32xf32>
    %238 = math.tanh %237 : vector<8x32xf32>
    %239 = vector.extract_strided_slice %236 {offsets = [0, 32], sizes = [8, 32], strides = [1, 1]} : vector<8x96xf32> to vector<8x32xf32>
    %240 = arith.mulf %239, %192 : vector<8x32xf32>
    %241 = vector.extract_strided_slice %236 {offsets = [0, 0], sizes = [8, 32], strides = [1, 1]} : vector<8x96xf32> to vector<8x32xf32>
    %242 = arith.mulf %241, %238 : vector<8x32xf32>
    %243 = arith.addf %240, %242 : vector<8x32xf32>
    %244 = vector.extract_strided_slice %236 {offsets = [0, 64], sizes = [8, 32], strides = [1, 1]} : vector<8x96xf32> to vector<8x32xf32>
    %245 = math.tanh %243 : vector<8x32xf32>
    %246 = arith.mulf %244, %245 : vector<8x32xf32>
    %247 = arith.index_cast %225 : i32 to index
    %c128_59 = arith.constant 128 : index
    %248 = vector.load %arg10[%247, %c128_59] : memref<64x256xf32, #tpu.memory_space<vmem>>, vector<8x128xf32>
    %249 = vector.extract_strided_slice %226 {offsets = [0, 128], sizes = [8, 128], strides = [1, 1]} : vector<8x256xf32> to vector<8x128xf32>
    %250 = arith.addf %248, %249 : vector<8x128xf32>
    %251 = vector.extract_strided_slice %250 {offsets = [0, 0], sizes = [8, 96], strides = [1, 1]} : vector<8x128xf32> to vector<8x96xf32>
    %252 = arith.negf %251 : vector<8x96xf32>
    %253 = math.exp %252 : vector<8x96xf32>
    %cst_60 = arith.constant 1.000000e+00 : f32
    %254 = vector.broadcast %cst_60 : f32 to vector<8x96xf32>
    %255 = arith.addf %254, %253 : vector<8x96xf32>
    %256 = arith.divf %254, %255 : vector<8x96xf32>
    %257 = vector.extract_strided_slice %250 {offsets = [0, 96], sizes = [8, 32], strides = [1, 1]} : vector<8x128xf32> to vector<8x32xf32>
    %258 = math.tanh %257 : vector<8x32xf32>
    %259 = vector.extract_strided_slice %256 {offsets = [0, 32], sizes = [8, 32], strides = [1, 1]} : vector<8x96xf32> to vector<8x32xf32>
    %260 = arith.mulf %259, %212 : vector<8x32xf32>
    %261 = vector.extract_strided_slice %256 {offsets = [0, 0], sizes = [8, 32], strides = [1, 1]} : vector<8x96xf32> to vector<8x32xf32>
    %262 = arith.mulf %261, %258 : vector<8x32xf32>
    %263 = arith.addf %260, %262 : vector<8x32xf32>
    %264 = vector.extract_strided_slice %256 {offsets = [0, 64], sizes = [8, 32], strides = [1, 1]} : vector<8x96xf32> to vector<8x32xf32>
    %265 = math.tanh %263 : vector<8x32xf32>
    %266 = arith.mulf %264, %265 : vector<8x32xf32>
    %267 = arith.index_cast %222 : i32 to index
    %c0_61 = arith.constant 0 : index
    %268 = vector.load %arg7[%267, %c0_61] : memref<64x64xf32, #tpu.memory_space<vmem>>, vector<8x32xf32>
    tpu.vector_store %arg7[%267, %c0_61], %246 {strides = array<i32>} : memref<64x64xf32, #tpu.memory_space<vmem>>, vector<8x32xf32>,
    %269 = arith.index_cast %225 : i32 to index
    %c32_62 = arith.constant 32 : index
    %270 = vector.load %arg7[%269, %c32_62] : memref<64x64xf32, #tpu.memory_space<vmem>>, vector<8x32xf32>
    tpu.vector_store %arg7[%269, %c32_62], %266 {strides = array<i32>} : memref<64x64xf32, #tpu.memory_space<vmem>>, vector<8x32xf32>,
    %271 = tpu.concatenate %246, %266 in 1 : vector<8x32xf32>, vector<8x32xf32> -> vector<8x64xf32>
    %c5_i32 = arith.constant 5 : i32
    %c8_i32_63 = arith.constant 8 : i32
    %272 = arith.muli %c5_i32, %c8_i32_63 : i32
    %273 = tpu.assume_multiple %272, 8 : i32
    %c7_i32_64 = arith.constant 7 : i32
    %274 = arith.subi %c7_i32_64, %c5_i32 : i32
    %c8_i32_65 = arith.constant 8 : i32
    %275 = arith.muli %274, %c8_i32_65 : i32
    %276 = tpu.assume_multiple %275, 8 : i32
    %cst_66 = arith.constant dense<0.000000e+00> : vector<8x256xf32>
    %277 = tpu.matmul %271, %14, %cst_66 {dimension_numbers = #tpu.dot_dimension_numbers<[1], [0], [0], [1], [0, 0, 1, 1], [], []>} : vector<8x64xf32>, vector<64x256xf32>, vector<8x256xf32> -> vector<8x256xf32>
    %278 = arith.index_cast %273 : i32 to index
    %c0_67 = arith.constant 0 : index
    %279 = vector.load %arg10[%278, %c0_67] : memref<64x256xf32, #tpu.memory_space<vmem>>, vector<8x128xf32>
    %280 = vector.extract_strided_slice %277 {offsets = [0, 0], sizes = [8, 128], strides = [1, 1]} : vector<8x256xf32> to vector<8x128xf32>
    %281 = arith.addf %279, %280 : vector<8x128xf32>
    %282 = vector.extract_strided_slice %281 {offsets = [0, 0], sizes = [8, 96], strides = [1, 1]} : vector<8x128xf32> to vector<8x96xf32>
    %283 = arith.negf %282 : vector<8x96xf32>
    %284 = math.exp %283 : vector<8x96xf32>
    %cst_68 = arith.constant 1.000000e+00 : f32
    %285 = vector.broadcast %cst_68 : f32 to vector<8x96xf32>
    %286 = arith.addf %285, %284 : vector<8x96xf32>
    %287 = arith.divf %285, %286 : vector<8x96xf32>
    %288 = vector.extract_strided_slice %281 {offsets = [0, 96], sizes = [8, 32], strides = [1, 1]} : vector<8x128xf32> to vector<8x32xf32>
    %289 = math.tanh %288 : vector<8x32xf32>
    %290 = vector.extract_strided_slice %287 {offsets = [0, 32], sizes = [8, 32], strides = [1, 1]} : vector<8x96xf32> to vector<8x32xf32>
    %291 = arith.mulf %290, %243 : vector<8x32xf32>
    %292 = vector.extract_strided_slice %287 {offsets = [0, 0], sizes = [8, 32], strides = [1, 1]} : vector<8x96xf32> to vector<8x32xf32>
    %293 = arith.mulf %292, %289 : vector<8x32xf32>
    %294 = arith.addf %291, %293 : vector<8x32xf32>
    %295 = vector.extract_strided_slice %287 {offsets = [0, 64], sizes = [8, 32], strides = [1, 1]} : vector<8x96xf32> to vector<8x32xf32>
    %296 = math.tanh %294 : vector<8x32xf32>
    %297 = arith.mulf %295, %296 : vector<8x32xf32>
    %298 = arith.index_cast %276 : i32 to index
    %c128_69 = arith.constant 128 : index
    %299 = vector.load %arg10[%298, %c128_69] : memref<64x256xf32, #tpu.memory_space<vmem>>, vector<8x128xf32>
    %300 = vector.extract_strided_slice %277 {offsets = [0, 128], sizes = [8, 128], strides = [1, 1]} : vector<8x256xf32> to vector<8x128xf32>
    %301 = arith.addf %299, %300 : vector<8x128xf32>
    %302 = vector.extract_strided_slice %301 {offsets = [0, 0], sizes = [8, 96], strides = [1, 1]} : vector<8x128xf32> to vector<8x96xf32>
    %303 = arith.negf %302 : vector<8x96xf32>
    %304 = math.exp %303 : vector<8x96xf32>
    %cst_70 = arith.constant 1.000000e+00 : f32
    %305 = vector.broadcast %cst_70 : f32 to vector<8x96xf32>
    %306 = arith.addf %305, %304 : vector<8x96xf32>
    %307 = arith.divf %305, %306 : vector<8x96xf32>
    %308 = vector.extract_strided_slice %301 {offsets = [0, 96], sizes = [8, 32], strides = [1, 1]} : vector<8x128xf32> to vector<8x32xf32>
    %309 = math.tanh %308 : vector<8x32xf32>
    %310 = vector.extract_strided_slice %307 {offsets = [0, 32], sizes = [8, 32], strides = [1, 1]} : vector<8x96xf32> to vector<8x32xf32>
    %311 = arith.mulf %310, %263 : vector<8x32xf32>
    %312 = vector.extract_strided_slice %307 {offsets = [0, 0], sizes = [8, 32], strides = [1, 1]} : vector<8x96xf32> to vector<8x32xf32>
    %313 = arith.mulf %312, %309 : vector<8x32xf32>
    %314 = arith.addf %311, %313 : vector<8x32xf32>
    %315 = vector.extract_strided_slice %307 {offsets = [0, 64], sizes = [8, 32], strides = [1, 1]} : vector<8x96xf32> to vector<8x32xf32>
    %316 = math.tanh %314 : vector<8x32xf32>
    %317 = arith.mulf %315, %316 : vector<8x32xf32>
    %318 = arith.index_cast %273 : i32 to index
    %c0_71 = arith.constant 0 : index
    %319 = vector.load %arg7[%318, %c0_71] : memref<64x64xf32, #tpu.memory_space<vmem>>, vector<8x32xf32>
    tpu.vector_store %arg7[%318, %c0_71], %297 {strides = array<i32>} : memref<64x64xf32, #tpu.memory_space<vmem>>, vector<8x32xf32>,
    %320 = arith.index_cast %276 : i32 to index
    %c32_72 = arith.constant 32 : index
    %321 = vector.load %arg7[%320, %c32_72] : memref<64x64xf32, #tpu.memory_space<vmem>>, vector<8x32xf32>
    tpu.vector_store %arg7[%320, %c32_72], %317 {strides = array<i32>} : memref<64x64xf32, #tpu.memory_space<vmem>>, vector<8x32xf32>,
    %322 = tpu.concatenate %297, %317 in 1 : vector<8x32xf32>, vector<8x32xf32> -> vector<8x64xf32>
    %c6_i32 = arith.constant 6 : i32
    %c8_i32_73 = arith.constant 8 : i32
    %323 = arith.muli %c6_i32, %c8_i32_73 : i32
    %324 = tpu.assume_multiple %323, 8 : i32
    %c7_i32_74 = arith.constant 7 : i32
    %325 = arith.subi %c7_i32_74, %c6_i32 : i32
    %c8_i32_75 = arith.constant 8 : i32
    %326 = arith.muli %325, %c8_i32_75 : i32
    %327 = tpu.assume_multiple %326, 8 : i32
    %cst_76 = arith.constant dense<0.000000e+00> : vector<8x256xf32>
    %328 = tpu.matmul %322, %14, %cst_76 {dimension_numbers = #tpu.dot_dimension_numbers<[1], [0], [0], [1], [0, 0, 1, 1], [], []>} : vector<8x64xf32>, vector<64x256xf32>, vector<8x256xf32> -> vector<8x256xf32>
    %329 = arith.index_cast %324 : i32 to index
    %c0_77 = arith.constant 0 : index
    %330 = vector.load %arg10[%329, %c0_77] : memref<64x256xf32, #tpu.memory_space<vmem>>, vector<8x128xf32>
    %331 = vector.extract_strided_slice %328 {offsets = [0, 0], sizes = [8, 128], strides = [1, 1]} : vector<8x256xf32> to vector<8x128xf32>
    %332 = arith.addf %330, %331 : vector<8x128xf32>
    %333 = vector.extract_strided_slice %332 {offsets = [0, 0], sizes = [8, 96], strides = [1, 1]} : vector<8x128xf32> to vector<8x96xf32>
    %334 = arith.negf %333 : vector<8x96xf32>
    %335 = math.exp %334 : vector<8x96xf32>
    %cst_78 = arith.constant 1.000000e+00 : f32
    %336 = vector.broadcast %cst_78 : f32 to vector<8x96xf32>
    %337 = arith.addf %336, %335 : vector<8x96xf32>
    %338 = arith.divf %336, %337 : vector<8x96xf32>
    %339 = vector.extract_strided_slice %332 {offsets = [0, 96], sizes = [8, 32], strides = [1, 1]} : vector<8x128xf32> to vector<8x32xf32>
    %340 = math.tanh %339 : vector<8x32xf32>
    %341 = vector.extract_strided_slice %338 {offsets = [0, 32], sizes = [8, 32], strides = [1, 1]} : vector<8x96xf32> to vector<8x32xf32>
    %342 = arith.mulf %341, %294 : vector<8x32xf32>
    %343 = vector.extract_strided_slice %338 {offsets = [0, 0], sizes = [8, 32], strides = [1, 1]} : vector<8x96xf32> to vector<8x32xf32>
    %344 = arith.mulf %343, %340 : vector<8x32xf32>
    %345 = arith.addf %342, %344 : vector<8x32xf32>
    %346 = vector.extract_strided_slice %338 {offsets = [0, 64], sizes = [8, 32], strides = [1, 1]} : vector<8x96xf32> to vector<8x32xf32>
    %347 = math.tanh %345 : vector<8x32xf32>
    %348 = arith.mulf %346, %347 : vector<8x32xf32>
    %349 = arith.index_cast %327 : i32 to index
    %c128_79 = arith.constant 128 : index
    %350 = vector.load %arg10[%349, %c128_79] : memref<64x256xf32, #tpu.memory_space<vmem>>, vector<8x128xf32>
    %351 = vector.extract_strided_slice %328 {offsets = [0, 128], sizes = [8, 128], strides = [1, 1]} : vector<8x256xf32> to vector<8x128xf32>
    %352 = arith.addf %350, %351 : vector<8x128xf32>
    %353 = vector.extract_strided_slice %352 {offsets = [0, 0], sizes = [8, 96], strides = [1, 1]} : vector<8x128xf32> to vector<8x96xf32>
    %354 = arith.negf %353 : vector<8x96xf32>
    %355 = math.exp %354 : vector<8x96xf32>
    %cst_80 = arith.constant 1.000000e+00 : f32
    %356 = vector.broadcast %cst_80 : f32 to vector<8x96xf32>
    %357 = arith.addf %356, %355 : vector<8x96xf32>
    %358 = arith.divf %356, %357 : vector<8x96xf32>
    %359 = vector.extract_strided_slice %352 {offsets = [0, 96], sizes = [8, 32], strides = [1, 1]} : vector<8x128xf32> to vector<8x32xf32>
    %360 = math.tanh %359 : vector<8x32xf32>
    %361 = vector.extract_strided_slice %358 {offsets = [0, 32], sizes = [8, 32], strides = [1, 1]} : vector<8x96xf32> to vector<8x32xf32>
    %362 = arith.mulf %361, %314 : vector<8x32xf32>
    %363 = vector.extract_strided_slice %358 {offsets = [0, 0], sizes = [8, 32], strides = [1, 1]} : vector<8x96xf32> to vector<8x32xf32>
    %364 = arith.mulf %363, %360 : vector<8x32xf32>
    %365 = arith.addf %362, %364 : vector<8x32xf32>
    %366 = vector.extract_strided_slice %358 {offsets = [0, 64], sizes = [8, 32], strides = [1, 1]} : vector<8x96xf32> to vector<8x32xf32>
    %367 = math.tanh %365 : vector<8x32xf32>
    %368 = arith.mulf %366, %367 : vector<8x32xf32>
    %369 = arith.index_cast %324 : i32 to index
    %c0_81 = arith.constant 0 : index
    %370 = vector.load %arg7[%369, %c0_81] : memref<64x64xf32, #tpu.memory_space<vmem>>, vector<8x32xf32>
    tpu.vector_store %arg7[%369, %c0_81], %348 {strides = array<i32>} : memref<64x64xf32, #tpu.memory_space<vmem>>, vector<8x32xf32>,
    %371 = arith.index_cast %327 : i32 to index
    %c32_82 = arith.constant 32 : index
    %372 = vector.load %arg7[%371, %c32_82] : memref<64x64xf32, #tpu.memory_space<vmem>>, vector<8x32xf32>
    tpu.vector_store %arg7[%371, %c32_82], %368 {strides = array<i32>} : memref<64x64xf32, #tpu.memory_space<vmem>>, vector<8x32xf32>,
    %373 = tpu.concatenate %348, %368 in 1 : vector<8x32xf32>, vector<8x32xf32> -> vector<8x64xf32>
    %c7_i32_83 = arith.constant 7 : i32
    %c8_i32_84 = arith.constant 8 : i32
    %374 = arith.muli %c7_i32_83, %c8_i32_84 : i32
    %375 = tpu.assume_multiple %374, 8 : i32
    %c7_i32_85 = arith.constant 7 : i32
    %376 = arith.subi %c7_i32_85, %c7_i32_83 : i32
    %c8_i32_86 = arith.constant 8 : i32
    %377 = arith.muli %376, %c8_i32_86 : i32
    %378 = tpu.assume_multiple %377, 8 : i32
    %cst_87 = arith.constant dense<0.000000e+00> : vector<8x256xf32>
    %379 = tpu.matmul %373, %14, %cst_87 {dimension_numbers = #tpu.dot_dimension_numbers<[1], [0], [0], [1], [0, 0, 1, 1], [], []>} : vector<8x64xf32>, vector<64x256xf32>, vector<8x256xf32> -> vector<8x256xf32>
    %380 = arith.index_cast %375 : i32 to index
    %c0_88 = arith.constant 0 : index
    %381 = vector.load %arg10[%380, %c0_88] : memref<64x256xf32, #tpu.memory_space<vmem>>, vector<8x128xf32>
    %382 = vector.extract_strided_slice %379 {offsets = [0, 0], sizes = [8, 128], strides = [1, 1]} : vector<8x256xf32> to vector<8x128xf32>
    %383 = arith.addf %381, %382 : vector<8x128xf32>
    %384 = vector.extract_strided_slice %383 {offsets = [0, 0], sizes = [8, 96], strides = [1, 1]} : vector<8x128xf32> to vector<8x96xf32>
    %385 = arith.negf %384 : vector<8x96xf32>
    %386 = math.exp %385 : vector<8x96xf32>
    %cst_89 = arith.constant 1.000000e+00 : f32
    %387 = vector.broadcast %cst_89 : f32 to vector<8x96xf32>
    %388 = arith.addf %387, %386 : vector<8x96xf32>
    %389 = arith.divf %387, %388 : vector<8x96xf32>
    %390 = vector.extract_strided_slice %383 {offsets = [0, 96], sizes = [8, 32], strides = [1, 1]} : vector<8x128xf32> to vector<8x32xf32>
    %391 = math.tanh %390 : vector<8x32xf32>
    %392 = vector.extract_strided_slice %389 {offsets = [0, 32], sizes = [8, 32], strides = [1, 1]} : vector<8x96xf32> to vector<8x32xf32>
    %393 = arith.mulf %392, %345 : vector<8x32xf32>
    %394 = vector.extract_strided_slice %389 {offsets = [0, 0], sizes = [8, 32], strides = [1, 1]} : vector<8x96xf32> to vector<8x32xf32>
    %395 = arith.mulf %394, %391 : vector<8x32xf32>
    %396 = arith.addf %393, %395 : vector<8x32xf32>
    %397 = vector.extract_strided_slice %389 {offsets = [0, 64], sizes = [8, 32], strides = [1, 1]} : vector<8x96xf32> to vector<8x32xf32>
    %398 = math.tanh %396 : vector<8x32xf32>
    %399 = arith.mulf %397, %398 : vector<8x32xf32>
    %400 = arith.index_cast %378 : i32 to index
    %c128_90 = arith.constant 128 : index
    %401 = vector.load %arg10[%400, %c128_90] : memref<64x256xf32, #tpu.memory_space<vmem>>, vector<8x128xf32>
    %402 = vector.extract_strided_slice %379 {offsets = [0, 128], sizes = [8, 128], strides = [1, 1]} : vector<8x256xf32> to vector<8x128xf32>
    %403 = arith.addf %401, %402 : vector<8x128xf32>
    %404 = vector.extract_strided_slice %403 {offsets = [0, 0], sizes = [8, 96], strides = [1, 1]} : vector<8x128xf32> to vector<8x96xf32>
    %405 = arith.negf %404 : vector<8x96xf32>
    %406 = math.exp %405 : vector<8x96xf32>
    %cst_91 = arith.constant 1.000000e+00 : f32
    %407 = vector.broadcast %cst_91 : f32 to vector<8x96xf32>
    %408 = arith.addf %407, %406 : vector<8x96xf32>
    %409 = arith.divf %407, %408 : vector<8x96xf32>
    %410 = vector.extract_strided_slice %403 {offsets = [0, 96], sizes = [8, 32], strides = [1, 1]} : vector<8x128xf32> to vector<8x32xf32>
    %411 = math.tanh %410 : vector<8x32xf32>
    %412 = vector.extract_strided_slice %409 {offsets = [0, 32], sizes = [8, 32], strides = [1, 1]} : vector<8x96xf32> to vector<8x32xf32>
    %413 = arith.mulf %412, %365 : vector<8x32xf32>
    %414 = vector.extract_strided_slice %409 {offsets = [0, 0], sizes = [8, 32], strides = [1, 1]} : vector<8x96xf32> to vector<8x32xf32>
    %415 = arith.mulf %414, %411 : vector<8x32xf32>
    %416 = arith.addf %413, %415 : vector<8x32xf32>
    %417 = vector.extract_strided_slice %409 {offsets = [0, 64], sizes = [8, 32], strides = [1, 1]} : vector<8x96xf32> to vector<8x32xf32>
    %418 = math.tanh %416 : vector<8x32xf32>
    %419 = arith.mulf %417, %418 : vector<8x32xf32>
    %420 = arith.index_cast %375 : i32 to index
    %c0_92 = arith.constant 0 : index
    %421 = vector.load %arg7[%420, %c0_92] : memref<64x64xf32, #tpu.memory_space<vmem>>, vector<8x32xf32>
    tpu.vector_store %arg7[%420, %c0_92], %399 {strides = array<i32>} : memref<64x64xf32, #tpu.memory_space<vmem>>, vector<8x32xf32>,
    %422 = arith.index_cast %378 : i32 to index
    %c32_93 = arith.constant 32 : index
    %423 = vector.load %arg7[%422, %c32_93] : memref<64x64xf32, #tpu.memory_space<vmem>>, vector<8x32xf32>
    tpu.vector_store %arg7[%422, %c32_93], %419 {strides = array<i32>} : memref<64x64xf32, #tpu.memory_space<vmem>>, vector<8x32xf32>,
    %424 = tpu.concatenate %399, %419 in 1 : vector<8x32xf32>, vector<8x32xf32> -> vector<8x64xf32>
    %c8_i32_94 = arith.constant 8 : i32
    %425 = vector.extract_strided_slice %424 {offsets = [0, 0], sizes = [2, 32], strides = [1, 1]} : vector<8x64xf32> to vector<2x32xf32>
    %c0_95 = arith.constant 0 : index
    %c0_96 = arith.constant 0 : index
    %c0_97 = arith.constant 0 : index
    %426 = vector.load %arg8[%c0_95, %c0_96, %c0_97] : memref<2x2x32xf32, #tpu.memory_space<vmem>>, vector<1x2x32xf32>
    %427 = vector.shape_cast %426 : vector<1x2x32xf32> to vector<2x32xf32>
    %428 = vector.shape_cast %425 : vector<2x32xf32> to vector<1x2x32xf32>
    tpu.vector_store %arg8[%c0_95, %c0_96, %c0_97], %428 {strides = array<i32>} : memref<2x2x32xf32, #tpu.memory_space<vmem>>, vector<1x2x32xf32>,
    %429 = vector.extract_strided_slice %424 {offsets = [0, 32], sizes = [2, 32], strides = [1, 1]} : vector<8x64xf32> to vector<2x32xf32>
    %c1 = arith.constant 1 : index
    %c0_98 = arith.constant 0 : index
    %c0_99 = arith.constant 0 : index
    %430 = vector.load %arg8[%c1, %c0_98, %c0_99] : memref<2x2x32xf32, #tpu.memory_space<vmem>>, vector<1x2x32xf32>
    %431 = vector.shape_cast %430 : vector<1x2x32xf32> to vector<2x32xf32>
    %432 = vector.shape_cast %429 : vector<2x32xf32> to vector<1x2x32xf32>
    tpu.vector_store %arg8[%c1, %c0_98, %c0_99], %432 {strides = array<i32>} : memref<2x2x32xf32, #tpu.memory_space<vmem>>, vector<1x2x32xf32>,
    %433 = vector.extract_strided_slice %396 {offsets = [0, 0], sizes = [2, 32], strides = [1, 1]} : vector<8x32xf32> to vector<2x32xf32>
    %c0_100 = arith.constant 0 : index
    %c0_101 = arith.constant 0 : index
    %c0_102 = arith.constant 0 : index
    %434 = vector.load %arg9[%c0_100, %c0_101, %c0_102] : memref<2x2x32xf32, #tpu.memory_space<vmem>>, vector<1x2x32xf32>
    %435 = vector.shape_cast %434 : vector<1x2x32xf32> to vector<2x32xf32>
    %436 = vector.shape_cast %433 : vector<2x32xf32> to vector<1x2x32xf32>
    tpu.vector_store %arg9[%c0_100, %c0_101, %c0_102], %436 {strides = array<i32>} : memref<2x2x32xf32, #tpu.memory_space<vmem>>, vector<1x2x32xf32>,
    %437 = vector.extract_strided_slice %416 {offsets = [0, 0], sizes = [2, 32], strides = [1, 1]} : vector<8x32xf32> to vector<2x32xf32>
    %c1_103 = arith.constant 1 : index
    %c0_104 = arith.constant 0 : index
    %c0_105 = arith.constant 0 : index
    %438 = vector.load %arg9[%c1_103, %c0_104, %c0_105] : memref<2x2x32xf32, #tpu.memory_space<vmem>>, vector<1x2x32xf32>
    %439 = vector.shape_cast %438 : vector<1x2x32xf32> to vector<2x32xf32>
    %440 = vector.shape_cast %437 : vector<2x32xf32> to vector<1x2x32xf32>
    tpu.vector_store %arg9[%c1_103, %c0_104, %c0_105], %440 {strides = array<i32>} : memref<2x2x32xf32, #tpu.memory_space<vmem>>, vector<1x2x32xf32>,
    return
  }
  func.func @transform_0(%arg0: i32) -> (i32, i32) {
    %c0_i32 = arith.constant 0 : i32
    %c0_i32_0 = arith.constant 0 : i32
    %c0_i32_1 = arith.constant 0 : i32
    return %c0_i32, %c0_i32_0 : i32, i32
  }
  func.func @transform_1(%arg0: i32) -> (i32, i32) {
    %c0_i32 = arith.constant 0 : i32
    %c0_i32_0 = arith.constant 0 : i32
    %c0_i32_1 = arith.constant 0 : i32
    return %c0_i32, %c0_i32_0 : i32, i32
  }
  func.func @transform_2(%arg0: i32) -> (i32, i32) {
    %c0_i32 = arith.constant 0 : i32
    %c0_i32_0 = arith.constant 0 : i32
    %c0_i32_1 = arith.constant 0 : i32
    return %c0_i32, %c0_i32_0 : i32, i32
  }
  func.func @transform_3(%arg0: i32) -> (i32, i32) {
    %c0_i32 = arith.constant 0 : i32
    %c0_i32_0 = arith.constant 0 : i32
    %c0_i32_1 = arith.constant 0 : i32
    return %c0_i32, %c0_i32_0 : i32, i32
  }
  func.func @transform_4(%arg0: i32) -> (i32, i32) {
    %c0_i32 = arith.constant 0 : i32
    %c0_i32_0 = arith.constant 0 : i32
    %c0_i32_1 = arith.constant 0 : i32
    return %c0_i32, %c0_i32_0 : i32, i32
  }
  func.func @transform_5(%arg0: i32) -> (i32, i32) {
    %c0_i32 = arith.constant 0 : i32
    %c0_i32_0 = arith.constant 0 : i32
    %c0_i32_1 = arith.constant 0 : i32
    return %c0_i32, %c0_i32_0 : i32, i32
  }
  func.func @transform_6(%arg0: i32) -> (i32, i32) {
    %c0_i32 = arith.constant 0 : i32
    %c0_i32_0 = arith.constant 0 : i32
    %c0_i32_1 = arith.constant 0 : i32
    return %c0_i32, %c0_i32_0 : i32, i32
  }
  func.func @transform_7(%arg0: i32) -> (i32, i32, i32) {
    %c0_i32 = arith.constant 0 : i32
    %c0_i32_0 = arith.constant 0 : i32
    %c0_i32_1 = arith.constant 0 : i32
    %c0_i32_2 = arith.constant 0 : i32
    return %c0_i32, %c0_i32_0, %c0_i32_1 : i32, i32, i32
  }
  func.func @transform_8(%arg0: i32) -> (i32, i32, i32) {
    %c0_i32 = arith.constant 0 : i32
    %c0_i32_0 = arith.constant 0 : i32
    %c0_i32_1 = arith.constant 0 : i32
    %c0_i32_2 = arith.constant 0 : i32
    return %c0_i32, %c0_i32_0, %c0_i32_1 : i32, i32, i32
  }
}

module attributes {stable_mosaic.version = 11 : i64} {
  func.func @_bilstm_layer_kernel(%arg0: i32, %arg1: memref<64x64xf32, #tpu.memory_space<vmem>>, %arg2: memref<64x256xf32, #tpu.memory_space<vmem>>, %arg3: memref<64x256xf32, #tpu.memory_space<vmem>>, %arg4: memref<1x256xf32, #tpu.memory_space<vmem>>, %arg5: memref<64x6xf32, #tpu.memory_space<vmem>>, %arg6: memref<1x6xf32, #tpu.memory_space<vmem>>, %arg7: memref<64x6xf32, #tpu.memory_space<vmem>>, %arg8: memref<2x2x32xf32, #tpu.memory_space<vmem>>, %arg9: memref<2x2x32xf32, #tpu.memory_space<vmem>>, %arg10: memref<64x256xf32, #tpu.memory_space<vmem>>, %arg11: memref<64x64xf32, #tpu.memory_space<vmem>>) attributes {dimension_semantics = [#tpu.dimension_semantics<arbitrary>], iteration_bounds = array<i64: 1>, scalar_prefetch = 0 : i64, scratch_operands = 2 : i64, tpu.core_type = #tpu.core_type<tc>, window_params = [{pipeline_mode = #tpu.pipeline_mode<synchronous>, transform_indices = @transform_0, window_bounds = array<i64: 64, 64>}, {pipeline_mode = #tpu.pipeline_mode<synchronous>, transform_indices = @transform_1, window_bounds = array<i64: 64, 256>}, {pipeline_mode = #tpu.pipeline_mode<synchronous>, transform_indices = @transform_2, window_bounds = array<i64: 64, 256>}, {pipeline_mode = #tpu.pipeline_mode<synchronous>, transform_indices = @transform_3, window_bounds = array<i64: 1, 256>}, {pipeline_mode = #tpu.pipeline_mode<synchronous>, transform_indices = @transform_4, window_bounds = array<i64: 64, 6>}, {pipeline_mode = #tpu.pipeline_mode<synchronous>, transform_indices = @transform_5, window_bounds = array<i64: 1, 6>}, {pipeline_mode = #tpu.pipeline_mode<synchronous>, transform_indices = @transform_6, window_bounds = array<i64: 64, 6>}, {pipeline_mode = #tpu.pipeline_mode<synchronous>, transform_indices = @transform_7, window_bounds = array<i64: 2, 2, 32>}, {pipeline_mode = #tpu.pipeline_mode<synchronous>, transform_indices = @transform_8, window_bounds = array<i64: 2, 2, 32>}]} {
    %c0 = arith.constant 0 : index
    %c0_0 = arith.constant 0 : index
    %0 = vector.load %arg1[%c0, %c0_0] : memref<64x64xf32, #tpu.memory_space<vmem>>, vector<64x64xf32>
    %c0_1 = arith.constant 0 : index
    %c0_2 = arith.constant 0 : index
    %1 = vector.load %arg2[%c0_1, %c0_2] : memref<64x256xf32, #tpu.memory_space<vmem>>, vector<64x256xf32>
    %cst = arith.constant dense<0.000000e+00> : vector<64x256xf32>
    %2 = tpu.matmul %0, %1, %cst {dimension_numbers = #tpu.dot_dimension_numbers<[1], [0], [0], [1], [0, 0, 1, 1], [], []>} : vector<64x64xf32>, vector<64x256xf32>, vector<64x256xf32> -> vector<64x256xf32>
    %c0_3 = arith.constant 0 : index
    %c0_4 = arith.constant 0 : index
    %3 = vector.load %arg4[%c0_3, %c0_4] : memref<1x256xf32, #tpu.memory_space<vmem>>, vector<1x256xf32>
    %4 = vector.broadcast %3 : vector<1x256xf32> to vector<64x256xf32>
    %5 = arith.addf %2, %4 : vector<64x256xf32>
    %c0_5 = arith.constant 0 : index
    %c0_6 = arith.constant 0 : index
    %6 = vector.load %arg10[%c0_5, %c0_6] : memref<64x256xf32, #tpu.memory_space<vmem>>, vector<64x256xf32>
    tpu.vector_store %arg10[%c0_5, %c0_6], %5 {strides = array<i32>} : memref<64x256xf32, #tpu.memory_space<vmem>>, vector<64x256xf32>,
    %c0_7 = arith.constant 0 : index
    %c0_8 = arith.constant 0 : index
    %7 = vector.load %arg3[%c0_7, %c0_8] : memref<64x256xf32, #tpu.memory_space<vmem>>, vector<64x256xf32>
    %cst_9 = arith.constant 0.000000e+00 : f32
    %8 = vector.broadcast %cst_9 : f32 to vector<8x64xf32>
    %cst_10 = arith.constant 0.000000e+00 : f32
    %9 = vector.broadcast %cst_10 : f32 to vector<8x32xf32>
    %c0_i32 = arith.constant 0 : i32
    %c8_i32 = arith.constant 8 : i32
    %10 = arith.muli %c0_i32, %c8_i32 : i32
    %11 = tpu.assume_multiple %10, 8 : i32
    %c7_i32 = arith.constant 7 : i32
    %12 = arith.subi %c7_i32, %c0_i32 : i32
    %c8_i32_11 = arith.constant 8 : i32
    %13 = arith.muli %12, %c8_i32_11 : i32
    %14 = tpu.assume_multiple %13, 8 : i32
    %cst_12 = arith.constant dense<0.000000e+00> : vector<8x256xf32>
    %15 = tpu.matmul %8, %7, %cst_12 {dimension_numbers = #tpu.dot_dimension_numbers<[1], [0], [0], [1], [0, 0, 1, 1], [], []>} : vector<8x64xf32>, vector<64x256xf32>, vector<8x256xf32> -> vector<8x256xf32>
    %16 = arith.index_cast %11 : i32 to index
    %c0_13 = arith.constant 0 : index
    %17 = vector.load %arg10[%16, %c0_13] : memref<64x256xf32, #tpu.memory_space<vmem>>, vector<8x128xf32>
    %18 = vector.extract_strided_slice %15 {offsets = [0, 0], sizes = [8, 128], strides = [1, 1]} : vector<8x256xf32> to vector<8x128xf32>
    %19 = arith.addf %17, %18 : vector<8x128xf32>
    %20 = vector.extract_strided_slice %19 {offsets = [0, 0], sizes = [8, 96], strides = [1, 1]} : vector<8x128xf32> to vector<8x96xf32>
    %21 = arith.negf %20 : vector<8x96xf32>
    %22 = math.exp %21 : vector<8x96xf32>
    %cst_14 = arith.constant 1.000000e+00 : f32
    %23 = vector.broadcast %cst_14 : f32 to vector<8x96xf32>
    %24 = arith.addf %23, %22 : vector<8x96xf32>
    %25 = arith.divf %23, %24 : vector<8x96xf32>
    %26 = vector.extract_strided_slice %19 {offsets = [0, 96], sizes = [8, 32], strides = [1, 1]} : vector<8x128xf32> to vector<8x32xf32>
    %27 = math.tanh %26 : vector<8x32xf32>
    %28 = vector.extract_strided_slice %25 {offsets = [0, 32], sizes = [8, 32], strides = [1, 1]} : vector<8x96xf32> to vector<8x32xf32>
    %29 = arith.mulf %28, %9 : vector<8x32xf32>
    %30 = vector.extract_strided_slice %25 {offsets = [0, 0], sizes = [8, 32], strides = [1, 1]} : vector<8x96xf32> to vector<8x32xf32>
    %31 = arith.mulf %30, %27 : vector<8x32xf32>
    %32 = arith.addf %29, %31 : vector<8x32xf32>
    %33 = vector.extract_strided_slice %25 {offsets = [0, 64], sizes = [8, 32], strides = [1, 1]} : vector<8x96xf32> to vector<8x32xf32>
    %34 = math.tanh %32 : vector<8x32xf32>
    %35 = arith.mulf %33, %34 : vector<8x32xf32>
    %36 = arith.index_cast %14 : i32 to index
    %c128 = arith.constant 128 : index
    %37 = vector.load %arg10[%36, %c128] : memref<64x256xf32, #tpu.memory_space<vmem>>, vector<8x128xf32>
    %38 = vector.extract_strided_slice %15 {offsets = [0, 128], sizes = [8, 128], strides = [1, 1]} : vector<8x256xf32> to vector<8x128xf32>
    %39 = arith.addf %37, %38 : vector<8x128xf32>
    %40 = vector.extract_strided_slice %39 {offsets = [0, 0], sizes = [8, 96], strides = [1, 1]} : vector<8x128xf32> to vector<8x96xf32>
    %41 = arith.negf %40 : vector<8x96xf32>
    %42 = math.exp %41 : vector<8x96xf32>
    %cst_15 = arith.constant 1.000000e+00 : f32
    %43 = vector.broadcast %cst_15 : f32 to vector<8x96xf32>
    %44 = arith.addf %43, %42 : vector<8x96xf32>
    %45 = arith.divf %43, %44 : vector<8x96xf32>
    %46 = vector.extract_strided_slice %39 {offsets = [0, 96], sizes = [8, 32], strides = [1, 1]} : vector<8x128xf32> to vector<8x32xf32>
    %47 = math.tanh %46 : vector<8x32xf32>
    %48 = vector.extract_strided_slice %45 {offsets = [0, 32], sizes = [8, 32], strides = [1, 1]} : vector<8x96xf32> to vector<8x32xf32>
    %49 = arith.mulf %48, %9 : vector<8x32xf32>
    %50 = vector.extract_strided_slice %45 {offsets = [0, 0], sizes = [8, 32], strides = [1, 1]} : vector<8x96xf32> to vector<8x32xf32>
    %51 = arith.mulf %50, %47 : vector<8x32xf32>
    %52 = arith.addf %49, %51 : vector<8x32xf32>
    %53 = vector.extract_strided_slice %45 {offsets = [0, 64], sizes = [8, 32], strides = [1, 1]} : vector<8x96xf32> to vector<8x32xf32>
    %54 = math.tanh %52 : vector<8x32xf32>
    %55 = arith.mulf %53, %54 : vector<8x32xf32>
    %56 = arith.index_cast %11 : i32 to index
    %c0_16 = arith.constant 0 : index
    %57 = vector.load %arg11[%56, %c0_16] : memref<64x64xf32, #tpu.memory_space<vmem>>, vector<8x32xf32>
    tpu.vector_store %arg11[%56, %c0_16], %35 {strides = array<i32>} : memref<64x64xf32, #tpu.memory_space<vmem>>, vector<8x32xf32>,
    %58 = arith.index_cast %14 : i32 to index
    %c32 = arith.constant 32 : index
    %59 = vector.load %arg11[%58, %c32] : memref<64x64xf32, #tpu.memory_space<vmem>>, vector<8x32xf32>
    tpu.vector_store %arg11[%58, %c32], %55 {strides = array<i32>} : memref<64x64xf32, #tpu.memory_space<vmem>>, vector<8x32xf32>,
    %60 = tpu.concatenate %35, %55 in 1 : vector<8x32xf32>, vector<8x32xf32> -> vector<8x64xf32>
    %c1_i32 = arith.constant 1 : i32
    %c8_i32_17 = arith.constant 8 : i32
    %61 = arith.muli %c1_i32, %c8_i32_17 : i32
    %62 = tpu.assume_multiple %61, 8 : i32
    %c7_i32_18 = arith.constant 7 : i32
    %63 = arith.subi %c7_i32_18, %c1_i32 : i32
    %c8_i32_19 = arith.constant 8 : i32
    %64 = arith.muli %63, %c8_i32_19 : i32
    %65 = tpu.assume_multiple %64, 8 : i32
    %cst_20 = arith.constant dense<0.000000e+00> : vector<8x256xf32>
    %66 = tpu.matmul %60, %7, %cst_20 {dimension_numbers = #tpu.dot_dimension_numbers<[1], [0], [0], [1], [0, 0, 1, 1], [], []>} : vector<8x64xf32>, vector<64x256xf32>, vector<8x256xf32> -> vector<8x256xf32>
    %67 = arith.index_cast %62 : i32 to index
    %c0_21 = arith.constant 0 : index
    %68 = vector.load %arg10[%67, %c0_21] : memref<64x256xf32, #tpu.memory_space<vmem>>, vector<8x128xf32>
    %69 = vector.extract_strided_slice %66 {offsets = [0, 0], sizes = [8, 128], strides = [1, 1]} : vector<8x256xf32> to vector<8x128xf32>
    %70 = arith.addf %68, %69 : vector<8x128xf32>
    %71 = vector.extract_strided_slice %70 {offsets = [0, 0], sizes = [8, 96], strides = [1, 1]} : vector<8x128xf32> to vector<8x96xf32>
    %72 = arith.negf %71 : vector<8x96xf32>
    %73 = math.exp %72 : vector<8x96xf32>
    %cst_22 = arith.constant 1.000000e+00 : f32
    %74 = vector.broadcast %cst_22 : f32 to vector<8x96xf32>
    %75 = arith.addf %74, %73 : vector<8x96xf32>
    %76 = arith.divf %74, %75 : vector<8x96xf32>
    %77 = vector.extract_strided_slice %70 {offsets = [0, 96], sizes = [8, 32], strides = [1, 1]} : vector<8x128xf32> to vector<8x32xf32>
    %78 = math.tanh %77 : vector<8x32xf32>
    %79 = vector.extract_strided_slice %76 {offsets = [0, 32], sizes = [8, 32], strides = [1, 1]} : vector<8x96xf32> to vector<8x32xf32>
    %80 = arith.mulf %79, %32 : vector<8x32xf32>
    %81 = vector.extract_strided_slice %76 {offsets = [0, 0], sizes = [8, 32], strides = [1, 1]} : vector<8x96xf32> to vector<8x32xf32>
    %82 = arith.mulf %81, %78 : vector<8x32xf32>
    %83 = arith.addf %80, %82 : vector<8x32xf32>
    %84 = vector.extract_strided_slice %76 {offsets = [0, 64], sizes = [8, 32], strides = [1, 1]} : vector<8x96xf32> to vector<8x32xf32>
    %85 = math.tanh %83 : vector<8x32xf32>
    %86 = arith.mulf %84, %85 : vector<8x32xf32>
    %87 = arith.index_cast %65 : i32 to index
    %c128_23 = arith.constant 128 : index
    %88 = vector.load %arg10[%87, %c128_23] : memref<64x256xf32, #tpu.memory_space<vmem>>, vector<8x128xf32>
    %89 = vector.extract_strided_slice %66 {offsets = [0, 128], sizes = [8, 128], strides = [1, 1]} : vector<8x256xf32> to vector<8x128xf32>
    %90 = arith.addf %88, %89 : vector<8x128xf32>
    %91 = vector.extract_strided_slice %90 {offsets = [0, 0], sizes = [8, 96], strides = [1, 1]} : vector<8x128xf32> to vector<8x96xf32>
    %92 = arith.negf %91 : vector<8x96xf32>
    %93 = math.exp %92 : vector<8x96xf32>
    %cst_24 = arith.constant 1.000000e+00 : f32
    %94 = vector.broadcast %cst_24 : f32 to vector<8x96xf32>
    %95 = arith.addf %94, %93 : vector<8x96xf32>
    %96 = arith.divf %94, %95 : vector<8x96xf32>
    %97 = vector.extract_strided_slice %90 {offsets = [0, 96], sizes = [8, 32], strides = [1, 1]} : vector<8x128xf32> to vector<8x32xf32>
    %98 = math.tanh %97 : vector<8x32xf32>
    %99 = vector.extract_strided_slice %96 {offsets = [0, 32], sizes = [8, 32], strides = [1, 1]} : vector<8x96xf32> to vector<8x32xf32>
    %100 = arith.mulf %99, %52 : vector<8x32xf32>
    %101 = vector.extract_strided_slice %96 {offsets = [0, 0], sizes = [8, 32], strides = [1, 1]} : vector<8x96xf32> to vector<8x32xf32>
    %102 = arith.mulf %101, %98 : vector<8x32xf32>
    %103 = arith.addf %100, %102 : vector<8x32xf32>
    %104 = vector.extract_strided_slice %96 {offsets = [0, 64], sizes = [8, 32], strides = [1, 1]} : vector<8x96xf32> to vector<8x32xf32>
    %105 = math.tanh %103 : vector<8x32xf32>
    %106 = arith.mulf %104, %105 : vector<8x32xf32>
    %107 = arith.index_cast %62 : i32 to index
    %c0_25 = arith.constant 0 : index
    %108 = vector.load %arg11[%107, %c0_25] : memref<64x64xf32, #tpu.memory_space<vmem>>, vector<8x32xf32>
    tpu.vector_store %arg11[%107, %c0_25], %86 {strides = array<i32>} : memref<64x64xf32, #tpu.memory_space<vmem>>, vector<8x32xf32>,
    %109 = arith.index_cast %65 : i32 to index
    %c32_26 = arith.constant 32 : index
    %110 = vector.load %arg11[%109, %c32_26] : memref<64x64xf32, #tpu.memory_space<vmem>>, vector<8x32xf32>
    tpu.vector_store %arg11[%109, %c32_26], %106 {strides = array<i32>} : memref<64x64xf32, #tpu.memory_space<vmem>>, vector<8x32xf32>,
    %111 = tpu.concatenate %86, %106 in 1 : vector<8x32xf32>, vector<8x32xf32> -> vector<8x64xf32>
    %c2_i32 = arith.constant 2 : i32
    %c8_i32_27 = arith.constant 8 : i32
    %112 = arith.muli %c2_i32, %c8_i32_27 : i32
    %113 = tpu.assume_multiple %112, 8 : i32
    %c7_i32_28 = arith.constant 7 : i32
    %114 = arith.subi %c7_i32_28, %c2_i32 : i32
    %c8_i32_29 = arith.constant 8 : i32
    %115 = arith.muli %114, %c8_i32_29 : i32
    %116 = tpu.assume_multiple %115, 8 : i32
    %cst_30 = arith.constant dense<0.000000e+00> : vector<8x256xf32>
    %117 = tpu.matmul %111, %7, %cst_30 {dimension_numbers = #tpu.dot_dimension_numbers<[1], [0], [0], [1], [0, 0, 1, 1], [], []>} : vector<8x64xf32>, vector<64x256xf32>, vector<8x256xf32> -> vector<8x256xf32>
    %118 = arith.index_cast %113 : i32 to index
    %c0_31 = arith.constant 0 : index
    %119 = vector.load %arg10[%118, %c0_31] : memref<64x256xf32, #tpu.memory_space<vmem>>, vector<8x128xf32>
    %120 = vector.extract_strided_slice %117 {offsets = [0, 0], sizes = [8, 128], strides = [1, 1]} : vector<8x256xf32> to vector<8x128xf32>
    %121 = arith.addf %119, %120 : vector<8x128xf32>
    %122 = vector.extract_strided_slice %121 {offsets = [0, 0], sizes = [8, 96], strides = [1, 1]} : vector<8x128xf32> to vector<8x96xf32>
    %123 = arith.negf %122 : vector<8x96xf32>
    %124 = math.exp %123 : vector<8x96xf32>
    %cst_32 = arith.constant 1.000000e+00 : f32
    %125 = vector.broadcast %cst_32 : f32 to vector<8x96xf32>
    %126 = arith.addf %125, %124 : vector<8x96xf32>
    %127 = arith.divf %125, %126 : vector<8x96xf32>
    %128 = vector.extract_strided_slice %121 {offsets = [0, 96], sizes = [8, 32], strides = [1, 1]} : vector<8x128xf32> to vector<8x32xf32>
    %129 = math.tanh %128 : vector<8x32xf32>
    %130 = vector.extract_strided_slice %127 {offsets = [0, 32], sizes = [8, 32], strides = [1, 1]} : vector<8x96xf32> to vector<8x32xf32>
    %131 = arith.mulf %130, %83 : vector<8x32xf32>
    %132 = vector.extract_strided_slice %127 {offsets = [0, 0], sizes = [8, 32], strides = [1, 1]} : vector<8x96xf32> to vector<8x32xf32>
    %133 = arith.mulf %132, %129 : vector<8x32xf32>
    %134 = arith.addf %131, %133 : vector<8x32xf32>
    %135 = vector.extract_strided_slice %127 {offsets = [0, 64], sizes = [8, 32], strides = [1, 1]} : vector<8x96xf32> to vector<8x32xf32>
    %136 = math.tanh %134 : vector<8x32xf32>
    %137 = arith.mulf %135, %136 : vector<8x32xf32>
    %138 = arith.index_cast %116 : i32 to index
    %c128_33 = arith.constant 128 : index
    %139 = vector.load %arg10[%138, %c128_33] : memref<64x256xf32, #tpu.memory_space<vmem>>, vector<8x128xf32>
    %140 = vector.extract_strided_slice %117 {offsets = [0, 128], sizes = [8, 128], strides = [1, 1]} : vector<8x256xf32> to vector<8x128xf32>
    %141 = arith.addf %139, %140 : vector<8x128xf32>
    %142 = vector.extract_strided_slice %141 {offsets = [0, 0], sizes = [8, 96], strides = [1, 1]} : vector<8x128xf32> to vector<8x96xf32>
    %143 = arith.negf %142 : vector<8x96xf32>
    %144 = math.exp %143 : vector<8x96xf32>
    %cst_34 = arith.constant 1.000000e+00 : f32
    %145 = vector.broadcast %cst_34 : f32 to vector<8x96xf32>
    %146 = arith.addf %145, %144 : vector<8x96xf32>
    %147 = arith.divf %145, %146 : vector<8x96xf32>
    %148 = vector.extract_strided_slice %141 {offsets = [0, 96], sizes = [8, 32], strides = [1, 1]} : vector<8x128xf32> to vector<8x32xf32>
    %149 = math.tanh %148 : vector<8x32xf32>
    %150 = vector.extract_strided_slice %147 {offsets = [0, 32], sizes = [8, 32], strides = [1, 1]} : vector<8x96xf32> to vector<8x32xf32>
    %151 = arith.mulf %150, %103 : vector<8x32xf32>
    %152 = vector.extract_strided_slice %147 {offsets = [0, 0], sizes = [8, 32], strides = [1, 1]} : vector<8x96xf32> to vector<8x32xf32>
    %153 = arith.mulf %152, %149 : vector<8x32xf32>
    %154 = arith.addf %151, %153 : vector<8x32xf32>
    %155 = vector.extract_strided_slice %147 {offsets = [0, 64], sizes = [8, 32], strides = [1, 1]} : vector<8x96xf32> to vector<8x32xf32>
    %156 = math.tanh %154 : vector<8x32xf32>
    %157 = arith.mulf %155, %156 : vector<8x32xf32>
    %158 = arith.index_cast %113 : i32 to index
    %c0_35 = arith.constant 0 : index
    %159 = vector.load %arg11[%158, %c0_35] : memref<64x64xf32, #tpu.memory_space<vmem>>, vector<8x32xf32>
    tpu.vector_store %arg11[%158, %c0_35], %137 {strides = array<i32>} : memref<64x64xf32, #tpu.memory_space<vmem>>, vector<8x32xf32>,
    %160 = arith.index_cast %116 : i32 to index
    %c32_36 = arith.constant 32 : index
    %161 = vector.load %arg11[%160, %c32_36] : memref<64x64xf32, #tpu.memory_space<vmem>>, vector<8x32xf32>
    tpu.vector_store %arg11[%160, %c32_36], %157 {strides = array<i32>} : memref<64x64xf32, #tpu.memory_space<vmem>>, vector<8x32xf32>,
    %162 = tpu.concatenate %137, %157 in 1 : vector<8x32xf32>, vector<8x32xf32> -> vector<8x64xf32>
    %c3_i32 = arith.constant 3 : i32
    %c8_i32_37 = arith.constant 8 : i32
    %163 = arith.muli %c3_i32, %c8_i32_37 : i32
    %164 = tpu.assume_multiple %163, 8 : i32
    %c7_i32_38 = arith.constant 7 : i32
    %165 = arith.subi %c7_i32_38, %c3_i32 : i32
    %c8_i32_39 = arith.constant 8 : i32
    %166 = arith.muli %165, %c8_i32_39 : i32
    %167 = tpu.assume_multiple %166, 8 : i32
    %cst_40 = arith.constant dense<0.000000e+00> : vector<8x256xf32>
    %168 = tpu.matmul %162, %7, %cst_40 {dimension_numbers = #tpu.dot_dimension_numbers<[1], [0], [0], [1], [0, 0, 1, 1], [], []>} : vector<8x64xf32>, vector<64x256xf32>, vector<8x256xf32> -> vector<8x256xf32>
    %169 = arith.index_cast %164 : i32 to index
    %c0_41 = arith.constant 0 : index
    %170 = vector.load %arg10[%169, %c0_41] : memref<64x256xf32, #tpu.memory_space<vmem>>, vector<8x128xf32>
    %171 = vector.extract_strided_slice %168 {offsets = [0, 0], sizes = [8, 128], strides = [1, 1]} : vector<8x256xf32> to vector<8x128xf32>
    %172 = arith.addf %170, %171 : vector<8x128xf32>
    %173 = vector.extract_strided_slice %172 {offsets = [0, 0], sizes = [8, 96], strides = [1, 1]} : vector<8x128xf32> to vector<8x96xf32>
    %174 = arith.negf %173 : vector<8x96xf32>
    %175 = math.exp %174 : vector<8x96xf32>
    %cst_42 = arith.constant 1.000000e+00 : f32
    %176 = vector.broadcast %cst_42 : f32 to vector<8x96xf32>
    %177 = arith.addf %176, %175 : vector<8x96xf32>
    %178 = arith.divf %176, %177 : vector<8x96xf32>
    %179 = vector.extract_strided_slice %172 {offsets = [0, 96], sizes = [8, 32], strides = [1, 1]} : vector<8x128xf32> to vector<8x32xf32>
    %180 = math.tanh %179 : vector<8x32xf32>
    %181 = vector.extract_strided_slice %178 {offsets = [0, 32], sizes = [8, 32], strides = [1, 1]} : vector<8x96xf32> to vector<8x32xf32>
    %182 = arith.mulf %181, %134 : vector<8x32xf32>
    %183 = vector.extract_strided_slice %178 {offsets = [0, 0], sizes = [8, 32], strides = [1, 1]} : vector<8x96xf32> to vector<8x32xf32>
    %184 = arith.mulf %183, %180 : vector<8x32xf32>
    %185 = arith.addf %182, %184 : vector<8x32xf32>
    %186 = vector.extract_strided_slice %178 {offsets = [0, 64], sizes = [8, 32], strides = [1, 1]} : vector<8x96xf32> to vector<8x32xf32>
    %187 = math.tanh %185 : vector<8x32xf32>
    %188 = arith.mulf %186, %187 : vector<8x32xf32>
    %189 = arith.index_cast %167 : i32 to index
    %c128_43 = arith.constant 128 : index
    %190 = vector.load %arg10[%189, %c128_43] : memref<64x256xf32, #tpu.memory_space<vmem>>, vector<8x128xf32>
    %191 = vector.extract_strided_slice %168 {offsets = [0, 128], sizes = [8, 128], strides = [1, 1]} : vector<8x256xf32> to vector<8x128xf32>
    %192 = arith.addf %190, %191 : vector<8x128xf32>
    %193 = vector.extract_strided_slice %192 {offsets = [0, 0], sizes = [8, 96], strides = [1, 1]} : vector<8x128xf32> to vector<8x96xf32>
    %194 = arith.negf %193 : vector<8x96xf32>
    %195 = math.exp %194 : vector<8x96xf32>
    %cst_44 = arith.constant 1.000000e+00 : f32
    %196 = vector.broadcast %cst_44 : f32 to vector<8x96xf32>
    %197 = arith.addf %196, %195 : vector<8x96xf32>
    %198 = arith.divf %196, %197 : vector<8x96xf32>
    %199 = vector.extract_strided_slice %192 {offsets = [0, 96], sizes = [8, 32], strides = [1, 1]} : vector<8x128xf32> to vector<8x32xf32>
    %200 = math.tanh %199 : vector<8x32xf32>
    %201 = vector.extract_strided_slice %198 {offsets = [0, 32], sizes = [8, 32], strides = [1, 1]} : vector<8x96xf32> to vector<8x32xf32>
    %202 = arith.mulf %201, %154 : vector<8x32xf32>
    %203 = vector.extract_strided_slice %198 {offsets = [0, 0], sizes = [8, 32], strides = [1, 1]} : vector<8x96xf32> to vector<8x32xf32>
    %204 = arith.mulf %203, %200 : vector<8x32xf32>
    %205 = arith.addf %202, %204 : vector<8x32xf32>
    %206 = vector.extract_strided_slice %198 {offsets = [0, 64], sizes = [8, 32], strides = [1, 1]} : vector<8x96xf32> to vector<8x32xf32>
    %207 = math.tanh %205 : vector<8x32xf32>
    %208 = arith.mulf %206, %207 : vector<8x32xf32>
    %209 = arith.index_cast %164 : i32 to index
    %c0_45 = arith.constant 0 : index
    %210 = vector.load %arg11[%209, %c0_45] : memref<64x64xf32, #tpu.memory_space<vmem>>, vector<8x32xf32>
    tpu.vector_store %arg11[%209, %c0_45], %188 {strides = array<i32>} : memref<64x64xf32, #tpu.memory_space<vmem>>, vector<8x32xf32>,
    %211 = arith.index_cast %167 : i32 to index
    %c32_46 = arith.constant 32 : index
    %212 = vector.load %arg11[%211, %c32_46] : memref<64x64xf32, #tpu.memory_space<vmem>>, vector<8x32xf32>
    tpu.vector_store %arg11[%211, %c32_46], %208 {strides = array<i32>} : memref<64x64xf32, #tpu.memory_space<vmem>>, vector<8x32xf32>,
    %213 = tpu.concatenate %188, %208 in 1 : vector<8x32xf32>, vector<8x32xf32> -> vector<8x64xf32>
    %c4_i32 = arith.constant 4 : i32
    %c8_i32_47 = arith.constant 8 : i32
    %214 = arith.muli %c4_i32, %c8_i32_47 : i32
    %215 = tpu.assume_multiple %214, 8 : i32
    %c7_i32_48 = arith.constant 7 : i32
    %216 = arith.subi %c7_i32_48, %c4_i32 : i32
    %c8_i32_49 = arith.constant 8 : i32
    %217 = arith.muli %216, %c8_i32_49 : i32
    %218 = tpu.assume_multiple %217, 8 : i32
    %cst_50 = arith.constant dense<0.000000e+00> : vector<8x256xf32>
    %219 = tpu.matmul %213, %7, %cst_50 {dimension_numbers = #tpu.dot_dimension_numbers<[1], [0], [0], [1], [0, 0, 1, 1], [], []>} : vector<8x64xf32>, vector<64x256xf32>, vector<8x256xf32> -> vector<8x256xf32>
    %220 = arith.index_cast %215 : i32 to index
    %c0_51 = arith.constant 0 : index
    %221 = vector.load %arg10[%220, %c0_51] : memref<64x256xf32, #tpu.memory_space<vmem>>, vector<8x128xf32>
    %222 = vector.extract_strided_slice %219 {offsets = [0, 0], sizes = [8, 128], strides = [1, 1]} : vector<8x256xf32> to vector<8x128xf32>
    %223 = arith.addf %221, %222 : vector<8x128xf32>
    %224 = vector.extract_strided_slice %223 {offsets = [0, 0], sizes = [8, 96], strides = [1, 1]} : vector<8x128xf32> to vector<8x96xf32>
    %225 = arith.negf %224 : vector<8x96xf32>
    %226 = math.exp %225 : vector<8x96xf32>
    %cst_52 = arith.constant 1.000000e+00 : f32
    %227 = vector.broadcast %cst_52 : f32 to vector<8x96xf32>
    %228 = arith.addf %227, %226 : vector<8x96xf32>
    %229 = arith.divf %227, %228 : vector<8x96xf32>
    %230 = vector.extract_strided_slice %223 {offsets = [0, 96], sizes = [8, 32], strides = [1, 1]} : vector<8x128xf32> to vector<8x32xf32>
    %231 = math.tanh %230 : vector<8x32xf32>
    %232 = vector.extract_strided_slice %229 {offsets = [0, 32], sizes = [8, 32], strides = [1, 1]} : vector<8x96xf32> to vector<8x32xf32>
    %233 = arith.mulf %232, %185 : vector<8x32xf32>
    %234 = vector.extract_strided_slice %229 {offsets = [0, 0], sizes = [8, 32], strides = [1, 1]} : vector<8x96xf32> to vector<8x32xf32>
    %235 = arith.mulf %234, %231 : vector<8x32xf32>
    %236 = arith.addf %233, %235 : vector<8x32xf32>
    %237 = vector.extract_strided_slice %229 {offsets = [0, 64], sizes = [8, 32], strides = [1, 1]} : vector<8x96xf32> to vector<8x32xf32>
    %238 = math.tanh %236 : vector<8x32xf32>
    %239 = arith.mulf %237, %238 : vector<8x32xf32>
    %240 = arith.index_cast %218 : i32 to index
    %c128_53 = arith.constant 128 : index
    %241 = vector.load %arg10[%240, %c128_53] : memref<64x256xf32, #tpu.memory_space<vmem>>, vector<8x128xf32>
    %242 = vector.extract_strided_slice %219 {offsets = [0, 128], sizes = [8, 128], strides = [1, 1]} : vector<8x256xf32> to vector<8x128xf32>
    %243 = arith.addf %241, %242 : vector<8x128xf32>
    %244 = vector.extract_strided_slice %243 {offsets = [0, 0], sizes = [8, 96], strides = [1, 1]} : vector<8x128xf32> to vector<8x96xf32>
    %245 = arith.negf %244 : vector<8x96xf32>
    %246 = math.exp %245 : vector<8x96xf32>
    %cst_54 = arith.constant 1.000000e+00 : f32
    %247 = vector.broadcast %cst_54 : f32 to vector<8x96xf32>
    %248 = arith.addf %247, %246 : vector<8x96xf32>
    %249 = arith.divf %247, %248 : vector<8x96xf32>
    %250 = vector.extract_strided_slice %243 {offsets = [0, 96], sizes = [8, 32], strides = [1, 1]} : vector<8x128xf32> to vector<8x32xf32>
    %251 = math.tanh %250 : vector<8x32xf32>
    %252 = vector.extract_strided_slice %249 {offsets = [0, 32], sizes = [8, 32], strides = [1, 1]} : vector<8x96xf32> to vector<8x32xf32>
    %253 = arith.mulf %252, %205 : vector<8x32xf32>
    %254 = vector.extract_strided_slice %249 {offsets = [0, 0], sizes = [8, 32], strides = [1, 1]} : vector<8x96xf32> to vector<8x32xf32>
    %255 = arith.mulf %254, %251 : vector<8x32xf32>
    %256 = arith.addf %253, %255 : vector<8x32xf32>
    %257 = vector.extract_strided_slice %249 {offsets = [0, 64], sizes = [8, 32], strides = [1, 1]} : vector<8x96xf32> to vector<8x32xf32>
    %258 = math.tanh %256 : vector<8x32xf32>
    %259 = arith.mulf %257, %258 : vector<8x32xf32>
    %260 = arith.index_cast %215 : i32 to index
    %c0_55 = arith.constant 0 : index
    %261 = vector.load %arg11[%260, %c0_55] : memref<64x64xf32, #tpu.memory_space<vmem>>, vector<8x32xf32>
    tpu.vector_store %arg11[%260, %c0_55], %239 {strides = array<i32>} : memref<64x64xf32, #tpu.memory_space<vmem>>, vector<8x32xf32>,
    %262 = arith.index_cast %218 : i32 to index
    %c32_56 = arith.constant 32 : index
    %263 = vector.load %arg11[%262, %c32_56] : memref<64x64xf32, #tpu.memory_space<vmem>>, vector<8x32xf32>
    tpu.vector_store %arg11[%262, %c32_56], %259 {strides = array<i32>} : memref<64x64xf32, #tpu.memory_space<vmem>>, vector<8x32xf32>,
    %264 = tpu.concatenate %239, %259 in 1 : vector<8x32xf32>, vector<8x32xf32> -> vector<8x64xf32>
    %c5_i32 = arith.constant 5 : i32
    %c8_i32_57 = arith.constant 8 : i32
    %265 = arith.muli %c5_i32, %c8_i32_57 : i32
    %266 = tpu.assume_multiple %265, 8 : i32
    %c7_i32_58 = arith.constant 7 : i32
    %267 = arith.subi %c7_i32_58, %c5_i32 : i32
    %c8_i32_59 = arith.constant 8 : i32
    %268 = arith.muli %267, %c8_i32_59 : i32
    %269 = tpu.assume_multiple %268, 8 : i32
    %cst_60 = arith.constant dense<0.000000e+00> : vector<8x256xf32>
    %270 = tpu.matmul %264, %7, %cst_60 {dimension_numbers = #tpu.dot_dimension_numbers<[1], [0], [0], [1], [0, 0, 1, 1], [], []>} : vector<8x64xf32>, vector<64x256xf32>, vector<8x256xf32> -> vector<8x256xf32>
    %271 = arith.index_cast %266 : i32 to index
    %c0_61 = arith.constant 0 : index
    %272 = vector.load %arg10[%271, %c0_61] : memref<64x256xf32, #tpu.memory_space<vmem>>, vector<8x128xf32>
    %273 = vector.extract_strided_slice %270 {offsets = [0, 0], sizes = [8, 128], strides = [1, 1]} : vector<8x256xf32> to vector<8x128xf32>
    %274 = arith.addf %272, %273 : vector<8x128xf32>
    %275 = vector.extract_strided_slice %274 {offsets = [0, 0], sizes = [8, 96], strides = [1, 1]} : vector<8x128xf32> to vector<8x96xf32>
    %276 = arith.negf %275 : vector<8x96xf32>
    %277 = math.exp %276 : vector<8x96xf32>
    %cst_62 = arith.constant 1.000000e+00 : f32
    %278 = vector.broadcast %cst_62 : f32 to vector<8x96xf32>
    %279 = arith.addf %278, %277 : vector<8x96xf32>
    %280 = arith.divf %278, %279 : vector<8x96xf32>
    %281 = vector.extract_strided_slice %274 {offsets = [0, 96], sizes = [8, 32], strides = [1, 1]} : vector<8x128xf32> to vector<8x32xf32>
    %282 = math.tanh %281 : vector<8x32xf32>
    %283 = vector.extract_strided_slice %280 {offsets = [0, 32], sizes = [8, 32], strides = [1, 1]} : vector<8x96xf32> to vector<8x32xf32>
    %284 = arith.mulf %283, %236 : vector<8x32xf32>
    %285 = vector.extract_strided_slice %280 {offsets = [0, 0], sizes = [8, 32], strides = [1, 1]} : vector<8x96xf32> to vector<8x32xf32>
    %286 = arith.mulf %285, %282 : vector<8x32xf32>
    %287 = arith.addf %284, %286 : vector<8x32xf32>
    %288 = vector.extract_strided_slice %280 {offsets = [0, 64], sizes = [8, 32], strides = [1, 1]} : vector<8x96xf32> to vector<8x32xf32>
    %289 = math.tanh %287 : vector<8x32xf32>
    %290 = arith.mulf %288, %289 : vector<8x32xf32>
    %291 = arith.index_cast %269 : i32 to index
    %c128_63 = arith.constant 128 : index
    %292 = vector.load %arg10[%291, %c128_63] : memref<64x256xf32, #tpu.memory_space<vmem>>, vector<8x128xf32>
    %293 = vector.extract_strided_slice %270 {offsets = [0, 128], sizes = [8, 128], strides = [1, 1]} : vector<8x256xf32> to vector<8x128xf32>
    %294 = arith.addf %292, %293 : vector<8x128xf32>
    %295 = vector.extract_strided_slice %294 {offsets = [0, 0], sizes = [8, 96], strides = [1, 1]} : vector<8x128xf32> to vector<8x96xf32>
    %296 = arith.negf %295 : vector<8x96xf32>
    %297 = math.exp %296 : vector<8x96xf32>
    %cst_64 = arith.constant 1.000000e+00 : f32
    %298 = vector.broadcast %cst_64 : f32 to vector<8x96xf32>
    %299 = arith.addf %298, %297 : vector<8x96xf32>
    %300 = arith.divf %298, %299 : vector<8x96xf32>
    %301 = vector.extract_strided_slice %294 {offsets = [0, 96], sizes = [8, 32], strides = [1, 1]} : vector<8x128xf32> to vector<8x32xf32>
    %302 = math.tanh %301 : vector<8x32xf32>
    %303 = vector.extract_strided_slice %300 {offsets = [0, 32], sizes = [8, 32], strides = [1, 1]} : vector<8x96xf32> to vector<8x32xf32>
    %304 = arith.mulf %303, %256 : vector<8x32xf32>
    %305 = vector.extract_strided_slice %300 {offsets = [0, 0], sizes = [8, 32], strides = [1, 1]} : vector<8x96xf32> to vector<8x32xf32>
    %306 = arith.mulf %305, %302 : vector<8x32xf32>
    %307 = arith.addf %304, %306 : vector<8x32xf32>
    %308 = vector.extract_strided_slice %300 {offsets = [0, 64], sizes = [8, 32], strides = [1, 1]} : vector<8x96xf32> to vector<8x32xf32>
    %309 = math.tanh %307 : vector<8x32xf32>
    %310 = arith.mulf %308, %309 : vector<8x32xf32>
    %311 = arith.index_cast %266 : i32 to index
    %c0_65 = arith.constant 0 : index
    %312 = vector.load %arg11[%311, %c0_65] : memref<64x64xf32, #tpu.memory_space<vmem>>, vector<8x32xf32>
    tpu.vector_store %arg11[%311, %c0_65], %290 {strides = array<i32>} : memref<64x64xf32, #tpu.memory_space<vmem>>, vector<8x32xf32>,
    %313 = arith.index_cast %269 : i32 to index
    %c32_66 = arith.constant 32 : index
    %314 = vector.load %arg11[%313, %c32_66] : memref<64x64xf32, #tpu.memory_space<vmem>>, vector<8x32xf32>
    tpu.vector_store %arg11[%313, %c32_66], %310 {strides = array<i32>} : memref<64x64xf32, #tpu.memory_space<vmem>>, vector<8x32xf32>,
    %315 = tpu.concatenate %290, %310 in 1 : vector<8x32xf32>, vector<8x32xf32> -> vector<8x64xf32>
    %c6_i32 = arith.constant 6 : i32
    %c8_i32_67 = arith.constant 8 : i32
    %316 = arith.muli %c6_i32, %c8_i32_67 : i32
    %317 = tpu.assume_multiple %316, 8 : i32
    %c7_i32_68 = arith.constant 7 : i32
    %318 = arith.subi %c7_i32_68, %c6_i32 : i32
    %c8_i32_69 = arith.constant 8 : i32
    %319 = arith.muli %318, %c8_i32_69 : i32
    %320 = tpu.assume_multiple %319, 8 : i32
    %cst_70 = arith.constant dense<0.000000e+00> : vector<8x256xf32>
    %321 = tpu.matmul %315, %7, %cst_70 {dimension_numbers = #tpu.dot_dimension_numbers<[1], [0], [0], [1], [0, 0, 1, 1], [], []>} : vector<8x64xf32>, vector<64x256xf32>, vector<8x256xf32> -> vector<8x256xf32>
    %322 = arith.index_cast %317 : i32 to index
    %c0_71 = arith.constant 0 : index
    %323 = vector.load %arg10[%322, %c0_71] : memref<64x256xf32, #tpu.memory_space<vmem>>, vector<8x128xf32>
    %324 = vector.extract_strided_slice %321 {offsets = [0, 0], sizes = [8, 128], strides = [1, 1]} : vector<8x256xf32> to vector<8x128xf32>
    %325 = arith.addf %323, %324 : vector<8x128xf32>
    %326 = vector.extract_strided_slice %325 {offsets = [0, 0], sizes = [8, 96], strides = [1, 1]} : vector<8x128xf32> to vector<8x96xf32>
    %327 = arith.negf %326 : vector<8x96xf32>
    %328 = math.exp %327 : vector<8x96xf32>
    %cst_72 = arith.constant 1.000000e+00 : f32
    %329 = vector.broadcast %cst_72 : f32 to vector<8x96xf32>
    %330 = arith.addf %329, %328 : vector<8x96xf32>
    %331 = arith.divf %329, %330 : vector<8x96xf32>
    %332 = vector.extract_strided_slice %325 {offsets = [0, 96], sizes = [8, 32], strides = [1, 1]} : vector<8x128xf32> to vector<8x32xf32>
    %333 = math.tanh %332 : vector<8x32xf32>
    %334 = vector.extract_strided_slice %331 {offsets = [0, 32], sizes = [8, 32], strides = [1, 1]} : vector<8x96xf32> to vector<8x32xf32>
    %335 = arith.mulf %334, %287 : vector<8x32xf32>
    %336 = vector.extract_strided_slice %331 {offsets = [0, 0], sizes = [8, 32], strides = [1, 1]} : vector<8x96xf32> to vector<8x32xf32>
    %337 = arith.mulf %336, %333 : vector<8x32xf32>
    %338 = arith.addf %335, %337 : vector<8x32xf32>
    %339 = vector.extract_strided_slice %331 {offsets = [0, 64], sizes = [8, 32], strides = [1, 1]} : vector<8x96xf32> to vector<8x32xf32>
    %340 = math.tanh %338 : vector<8x32xf32>
    %341 = arith.mulf %339, %340 : vector<8x32xf32>
    %342 = arith.index_cast %320 : i32 to index
    %c128_73 = arith.constant 128 : index
    %343 = vector.load %arg10[%342, %c128_73] : memref<64x256xf32, #tpu.memory_space<vmem>>, vector<8x128xf32>
    %344 = vector.extract_strided_slice %321 {offsets = [0, 128], sizes = [8, 128], strides = [1, 1]} : vector<8x256xf32> to vector<8x128xf32>
    %345 = arith.addf %343, %344 : vector<8x128xf32>
    %346 = vector.extract_strided_slice %345 {offsets = [0, 0], sizes = [8, 96], strides = [1, 1]} : vector<8x128xf32> to vector<8x96xf32>
    %347 = arith.negf %346 : vector<8x96xf32>
    %348 = math.exp %347 : vector<8x96xf32>
    %cst_74 = arith.constant 1.000000e+00 : f32
    %349 = vector.broadcast %cst_74 : f32 to vector<8x96xf32>
    %350 = arith.addf %349, %348 : vector<8x96xf32>
    %351 = arith.divf %349, %350 : vector<8x96xf32>
    %352 = vector.extract_strided_slice %345 {offsets = [0, 96], sizes = [8, 32], strides = [1, 1]} : vector<8x128xf32> to vector<8x32xf32>
    %353 = math.tanh %352 : vector<8x32xf32>
    %354 = vector.extract_strided_slice %351 {offsets = [0, 32], sizes = [8, 32], strides = [1, 1]} : vector<8x96xf32> to vector<8x32xf32>
    %355 = arith.mulf %354, %307 : vector<8x32xf32>
    %356 = vector.extract_strided_slice %351 {offsets = [0, 0], sizes = [8, 32], strides = [1, 1]} : vector<8x96xf32> to vector<8x32xf32>
    %357 = arith.mulf %356, %353 : vector<8x32xf32>
    %358 = arith.addf %355, %357 : vector<8x32xf32>
    %359 = vector.extract_strided_slice %351 {offsets = [0, 64], sizes = [8, 32], strides = [1, 1]} : vector<8x96xf32> to vector<8x32xf32>
    %360 = math.tanh %358 : vector<8x32xf32>
    %361 = arith.mulf %359, %360 : vector<8x32xf32>
    %362 = arith.index_cast %317 : i32 to index
    %c0_75 = arith.constant 0 : index
    %363 = vector.load %arg11[%362, %c0_75] : memref<64x64xf32, #tpu.memory_space<vmem>>, vector<8x32xf32>
    tpu.vector_store %arg11[%362, %c0_75], %341 {strides = array<i32>} : memref<64x64xf32, #tpu.memory_space<vmem>>, vector<8x32xf32>,
    %364 = arith.index_cast %320 : i32 to index
    %c32_76 = arith.constant 32 : index
    %365 = vector.load %arg11[%364, %c32_76] : memref<64x64xf32, #tpu.memory_space<vmem>>, vector<8x32xf32>
    tpu.vector_store %arg11[%364, %c32_76], %361 {strides = array<i32>} : memref<64x64xf32, #tpu.memory_space<vmem>>, vector<8x32xf32>,
    %366 = tpu.concatenate %341, %361 in 1 : vector<8x32xf32>, vector<8x32xf32> -> vector<8x64xf32>
    %c7_i32_77 = arith.constant 7 : i32
    %c8_i32_78 = arith.constant 8 : i32
    %367 = arith.muli %c7_i32_77, %c8_i32_78 : i32
    %368 = tpu.assume_multiple %367, 8 : i32
    %c7_i32_79 = arith.constant 7 : i32
    %369 = arith.subi %c7_i32_79, %c7_i32_77 : i32
    %c8_i32_80 = arith.constant 8 : i32
    %370 = arith.muli %369, %c8_i32_80 : i32
    %371 = tpu.assume_multiple %370, 8 : i32
    %cst_81 = arith.constant dense<0.000000e+00> : vector<8x256xf32>
    %372 = tpu.matmul %366, %7, %cst_81 {dimension_numbers = #tpu.dot_dimension_numbers<[1], [0], [0], [1], [0, 0, 1, 1], [], []>} : vector<8x64xf32>, vector<64x256xf32>, vector<8x256xf32> -> vector<8x256xf32>
    %373 = arith.index_cast %368 : i32 to index
    %c0_82 = arith.constant 0 : index
    %374 = vector.load %arg10[%373, %c0_82] : memref<64x256xf32, #tpu.memory_space<vmem>>, vector<8x128xf32>
    %375 = vector.extract_strided_slice %372 {offsets = [0, 0], sizes = [8, 128], strides = [1, 1]} : vector<8x256xf32> to vector<8x128xf32>
    %376 = arith.addf %374, %375 : vector<8x128xf32>
    %377 = vector.extract_strided_slice %376 {offsets = [0, 0], sizes = [8, 96], strides = [1, 1]} : vector<8x128xf32> to vector<8x96xf32>
    %378 = arith.negf %377 : vector<8x96xf32>
    %379 = math.exp %378 : vector<8x96xf32>
    %cst_83 = arith.constant 1.000000e+00 : f32
    %380 = vector.broadcast %cst_83 : f32 to vector<8x96xf32>
    %381 = arith.addf %380, %379 : vector<8x96xf32>
    %382 = arith.divf %380, %381 : vector<8x96xf32>
    %383 = vector.extract_strided_slice %376 {offsets = [0, 96], sizes = [8, 32], strides = [1, 1]} : vector<8x128xf32> to vector<8x32xf32>
    %384 = math.tanh %383 : vector<8x32xf32>
    %385 = vector.extract_strided_slice %382 {offsets = [0, 32], sizes = [8, 32], strides = [1, 1]} : vector<8x96xf32> to vector<8x32xf32>
    %386 = arith.mulf %385, %338 : vector<8x32xf32>
    %387 = vector.extract_strided_slice %382 {offsets = [0, 0], sizes = [8, 32], strides = [1, 1]} : vector<8x96xf32> to vector<8x32xf32>
    %388 = arith.mulf %387, %384 : vector<8x32xf32>
    %389 = arith.addf %386, %388 : vector<8x32xf32>
    %390 = vector.extract_strided_slice %382 {offsets = [0, 64], sizes = [8, 32], strides = [1, 1]} : vector<8x96xf32> to vector<8x32xf32>
    %391 = math.tanh %389 : vector<8x32xf32>
    %392 = arith.mulf %390, %391 : vector<8x32xf32>
    %393 = arith.index_cast %371 : i32 to index
    %c128_84 = arith.constant 128 : index
    %394 = vector.load %arg10[%393, %c128_84] : memref<64x256xf32, #tpu.memory_space<vmem>>, vector<8x128xf32>
    %395 = vector.extract_strided_slice %372 {offsets = [0, 128], sizes = [8, 128], strides = [1, 1]} : vector<8x256xf32> to vector<8x128xf32>
    %396 = arith.addf %394, %395 : vector<8x128xf32>
    %397 = vector.extract_strided_slice %396 {offsets = [0, 0], sizes = [8, 96], strides = [1, 1]} : vector<8x128xf32> to vector<8x96xf32>
    %398 = arith.negf %397 : vector<8x96xf32>
    %399 = math.exp %398 : vector<8x96xf32>
    %cst_85 = arith.constant 1.000000e+00 : f32
    %400 = vector.broadcast %cst_85 : f32 to vector<8x96xf32>
    %401 = arith.addf %400, %399 : vector<8x96xf32>
    %402 = arith.divf %400, %401 : vector<8x96xf32>
    %403 = vector.extract_strided_slice %396 {offsets = [0, 96], sizes = [8, 32], strides = [1, 1]} : vector<8x128xf32> to vector<8x32xf32>
    %404 = math.tanh %403 : vector<8x32xf32>
    %405 = vector.extract_strided_slice %402 {offsets = [0, 32], sizes = [8, 32], strides = [1, 1]} : vector<8x96xf32> to vector<8x32xf32>
    %406 = arith.mulf %405, %358 : vector<8x32xf32>
    %407 = vector.extract_strided_slice %402 {offsets = [0, 0], sizes = [8, 32], strides = [1, 1]} : vector<8x96xf32> to vector<8x32xf32>
    %408 = arith.mulf %407, %404 : vector<8x32xf32>
    %409 = arith.addf %406, %408 : vector<8x32xf32>
    %410 = vector.extract_strided_slice %402 {offsets = [0, 64], sizes = [8, 32], strides = [1, 1]} : vector<8x96xf32> to vector<8x32xf32>
    %411 = math.tanh %409 : vector<8x32xf32>
    %412 = arith.mulf %410, %411 : vector<8x32xf32>
    %413 = arith.index_cast %368 : i32 to index
    %c0_86 = arith.constant 0 : index
    %414 = vector.load %arg11[%413, %c0_86] : memref<64x64xf32, #tpu.memory_space<vmem>>, vector<8x32xf32>
    tpu.vector_store %arg11[%413, %c0_86], %392 {strides = array<i32>} : memref<64x64xf32, #tpu.memory_space<vmem>>, vector<8x32xf32>,
    %415 = arith.index_cast %371 : i32 to index
    %c32_87 = arith.constant 32 : index
    %416 = vector.load %arg11[%415, %c32_87] : memref<64x64xf32, #tpu.memory_space<vmem>>, vector<8x32xf32>
    tpu.vector_store %arg11[%415, %c32_87], %412 {strides = array<i32>} : memref<64x64xf32, #tpu.memory_space<vmem>>, vector<8x32xf32>,
    %417 = tpu.concatenate %392, %412 in 1 : vector<8x32xf32>, vector<8x32xf32> -> vector<8x64xf32>
    %c8_i32_88 = arith.constant 8 : i32
    %418 = vector.extract_strided_slice %417 {offsets = [0, 0], sizes = [2, 32], strides = [1, 1]} : vector<8x64xf32> to vector<2x32xf32>
    %c0_89 = arith.constant 0 : index
    %c0_90 = arith.constant 0 : index
    %c0_91 = arith.constant 0 : index
    %419 = vector.load %arg8[%c0_89, %c0_90, %c0_91] : memref<2x2x32xf32, #tpu.memory_space<vmem>>, vector<1x2x32xf32>
    %420 = vector.shape_cast %419 : vector<1x2x32xf32> to vector<2x32xf32>
    %421 = vector.shape_cast %418 : vector<2x32xf32> to vector<1x2x32xf32>
    tpu.vector_store %arg8[%c0_89, %c0_90, %c0_91], %421 {strides = array<i32>} : memref<2x2x32xf32, #tpu.memory_space<vmem>>, vector<1x2x32xf32>,
    %422 = vector.extract_strided_slice %417 {offsets = [0, 32], sizes = [2, 32], strides = [1, 1]} : vector<8x64xf32> to vector<2x32xf32>
    %c1 = arith.constant 1 : index
    %c0_92 = arith.constant 0 : index
    %c0_93 = arith.constant 0 : index
    %423 = vector.load %arg8[%c1, %c0_92, %c0_93] : memref<2x2x32xf32, #tpu.memory_space<vmem>>, vector<1x2x32xf32>
    %424 = vector.shape_cast %423 : vector<1x2x32xf32> to vector<2x32xf32>
    %425 = vector.shape_cast %422 : vector<2x32xf32> to vector<1x2x32xf32>
    tpu.vector_store %arg8[%c1, %c0_92, %c0_93], %425 {strides = array<i32>} : memref<2x2x32xf32, #tpu.memory_space<vmem>>, vector<1x2x32xf32>,
    %426 = vector.extract_strided_slice %389 {offsets = [0, 0], sizes = [2, 32], strides = [1, 1]} : vector<8x32xf32> to vector<2x32xf32>
    %c0_94 = arith.constant 0 : index
    %c0_95 = arith.constant 0 : index
    %c0_96 = arith.constant 0 : index
    %427 = vector.load %arg9[%c0_94, %c0_95, %c0_96] : memref<2x2x32xf32, #tpu.memory_space<vmem>>, vector<1x2x32xf32>
    %428 = vector.shape_cast %427 : vector<1x2x32xf32> to vector<2x32xf32>
    %429 = vector.shape_cast %426 : vector<2x32xf32> to vector<1x2x32xf32>
    tpu.vector_store %arg9[%c0_94, %c0_95, %c0_96], %429 {strides = array<i32>} : memref<2x2x32xf32, #tpu.memory_space<vmem>>, vector<1x2x32xf32>,
    %430 = vector.extract_strided_slice %409 {offsets = [0, 0], sizes = [2, 32], strides = [1, 1]} : vector<8x32xf32> to vector<2x32xf32>
    %c1_97 = arith.constant 1 : index
    %c0_98 = arith.constant 0 : index
    %c0_99 = arith.constant 0 : index
    %431 = vector.load %arg9[%c1_97, %c0_98, %c0_99] : memref<2x2x32xf32, #tpu.memory_space<vmem>>, vector<1x2x32xf32>
    %432 = vector.shape_cast %431 : vector<1x2x32xf32> to vector<2x32xf32>
    %433 = vector.shape_cast %430 : vector<2x32xf32> to vector<1x2x32xf32>
    tpu.vector_store %arg9[%c1_97, %c0_98, %c0_99], %433 {strides = array<i32>} : memref<2x2x32xf32, #tpu.memory_space<vmem>>, vector<1x2x32xf32>,
    %c0_100 = arith.constant 0 : index
    %c0_101 = arith.constant 0 : index
    %434 = vector.load %arg11[%c0_100, %c0_101] : memref<64x64xf32, #tpu.memory_space<vmem>>, vector<64x64xf32>
    %c0_102 = arith.constant 0 : index
    %c0_103 = arith.constant 0 : index
    %435 = vector.load %arg5[%c0_102, %c0_103] : memref<64x6xf32, #tpu.memory_space<vmem>>, vector<64x6xf32>
    %cst_104 = arith.constant dense<0.000000e+00> : vector<64x6xf32>
    %436 = tpu.matmul %434, %435, %cst_104 {dimension_numbers = #tpu.dot_dimension_numbers<[1], [0], [0], [1], [0, 0, 1, 1], [], []>} : vector<64x64xf32>, vector<64x6xf32>, vector<64x6xf32> -> vector<64x6xf32>
    %c0_105 = arith.constant 0 : index
    %c0_106 = arith.constant 0 : index
    %437 = vector.load %arg6[%c0_105, %c0_106] : memref<1x6xf32, #tpu.memory_space<vmem>>, vector<1x6xf32>
    %438 = vector.broadcast %437 : vector<1x6xf32> to vector<64x6xf32>
    %439 = arith.addf %436, %438 : vector<64x6xf32>
    %c0_107 = arith.constant 0 : index
    %c0_108 = arith.constant 0 : index
    %440 = vector.load %arg7[%c0_107, %c0_108] : memref<64x6xf32, #tpu.memory_space<vmem>>, vector<64x6xf32>
    tpu.vector_store %arg7[%c0_107, %c0_108], %439 {strides = array<i32>} : memref<64x6xf32, #tpu.memory_space<vmem>>, vector<64x6xf32>,
    return
  }
  func.func @transform_0(%arg0: i32) -> (i32, i32) {
    %c0_i32 = arith.constant 0 : i32
    %c0_i32_0 = arith.constant 0 : i32
    %c0_i32_1 = arith.constant 0 : i32
    return %c0_i32, %c0_i32_0 : i32, i32
  }
  func.func @transform_1(%arg0: i32) -> (i32, i32) {
    %c0_i32 = arith.constant 0 : i32
    %c0_i32_0 = arith.constant 0 : i32
    %c0_i32_1 = arith.constant 0 : i32
    return %c0_i32, %c0_i32_0 : i32, i32
  }
  func.func @transform_2(%arg0: i32) -> (i32, i32) {
    %c0_i32 = arith.constant 0 : i32
    %c0_i32_0 = arith.constant 0 : i32
    %c0_i32_1 = arith.constant 0 : i32
    return %c0_i32, %c0_i32_0 : i32, i32
  }
  func.func @transform_3(%arg0: i32) -> (i32, i32) {
    %c0_i32 = arith.constant 0 : i32
    %c0_i32_0 = arith.constant 0 : i32
    %c0_i32_1 = arith.constant 0 : i32
    return %c0_i32, %c0_i32_0 : i32, i32
  }
  func.func @transform_4(%arg0: i32) -> (i32, i32) {
    %c0_i32 = arith.constant 0 : i32
    %c0_i32_0 = arith.constant 0 : i32
    %c0_i32_1 = arith.constant 0 : i32
    return %c0_i32, %c0_i32_0 : i32, i32
  }
  func.func @transform_5(%arg0: i32) -> (i32, i32) {
    %c0_i32 = arith.constant 0 : i32
    %c0_i32_0 = arith.constant 0 : i32
    %c0_i32_1 = arith.constant 0 : i32
    return %c0_i32, %c0_i32_0 : i32, i32
  }
  func.func @transform_6(%arg0: i32) -> (i32, i32) {
    %c0_i32 = arith.constant 0 : i32
    %c0_i32_0 = arith.constant 0 : i32
    %c0_i32_1 = arith.constant 0 : i32
    return %c0_i32, %c0_i32_0 : i32, i32
  }
  func.func @transform_7(%arg0: i32) -> (i32, i32, i32) {
    %c0_i32 = arith.constant 0 : i32
    %c0_i32_0 = arith.constant 0 : i32
    %c0_i32_1 = arith.constant 0 : i32
    %c0_i32_2 = arith.constant 0 : i32
    return %c0_i32, %c0_i32_0, %c0_i32_1 : i32, i32, i32
  }
  func.func @transform_8(%arg0: i32) -> (i32, i32, i32) {
    %c0_i32 = arith.constant 0 : i32
    %c0_i32_0 = arith.constant 0 : i32
    %c0_i32_1 = arith.constant 0 : i32
    %c0_i32_2 = arith.constant 0 : i32
    return %c0_i32, %c0_i32_0, %c0_i32_1 : i32, i32, i32
  }
}

</mosaic_0001>

<llo_original>
// kernel: rnn_forward.3
$region0: #{rnn_forward.3}
  #allocation0 [shape = 'u32[]', space=smem, size = 0x4, offset = 0x4, fixed_abs, tag = 'smem constant byte address 0x4 - core index']
  #allocation1 [shape = 'u32[144,128]{1,0:T(1,128)}', space=vmem, size = 0x12000, scoped, tag = 'internal scratch']
  #allocation2 [shape = 'f32[64,256]{1,0:T(8,128)}', space=vmem, size = 0x10000, scoped, tag = 'scratch operand']
  #allocation3 [shape = 'f32[64,64]{1,0:T(8,128)}', space=vmem, size = 0x8000, scoped, tag = 'scratch operand']
  %s0 = inlined_call_operand.vmem [shape: f32[64,64], index: 0, kind: input, shape index: {}]
  %s1 = inlined_call_operand.vmem [shape: f32[64,256], index: 1, kind: input, shape index: {}]
  %s2 = inlined_call_operand.vmem [shape: f32[64,256], index: 2, kind: input, shape index: {}]
  %s3 = inlined_call_operand.vmem [shape: f32[1,256], index: 3, kind: input, shape index: {}]
  %s4 = inlined_call_operand.vmem [shape: f32[64,6], index: 4, kind: input, shape index: {}]
  %s5 = inlined_call_operand.vmem [shape: f32[1,6], index: 5, kind: input, shape index: {}]
  %s6 = inlined_call_operand.vmem [shape: f32[64,6], index: 6, kind: output, shape index: {0}]
  %s7 = inlined_call_operand.vmem [shape: f32[2,2,32], index: 7, kind: output, shape index: {1}]
  %s8 = inlined_call_operand.vmem [shape: f32[2,2,32], index: 8, kind: output, shape index: {2}]
  %9 = xla_tuple %s6, %s7, %s8
  %s10 = sld [smem:[#allocation0]]
  $region50: #{rnn_forward.3} parent=0
    _
  %s12 = ssub.s32 1, %s10
  %s13 = scalar_select 0, %s12, %s10
  // Predicated region
  $region2: #{rnn_forward.3} parent=0 // pred_check
    _
  $region3: #{rnn_forward.3} parent=0 // pred_check_branch
    %15 = sbr.rel (0) target = $region5
  $region4: #{rnn_forward.3} parent=0 // pred_region
    _
  $region5: #{rnn_forward.3} parent=0 // pred_fallthru
    _
  // Predicated region
  $region6: #{rnn_forward.3} parent=0 // pred_check
    _
  $region7: #{rnn_forward.3} parent=0 // pred_check_branch
    %17 = sbr.rel (0) target = $region9
  $region8: #{rnn_forward.3} parent=0 // pred_region
    _
  $region9: #{rnn_forward.3} parent=0 // pred_fallthru
    _
  // Predicated region
  $region10: #{rnn_forward.3} parent=0 // pred_check
    _
  $region11: #{rnn_forward.3} parent=0 // pred_check_branch
    %19 = sbr.rel (0) target = $region13
  $region12: #{rnn_forward.3} parent=0 // pred_region
    _
  $region13: #{rnn_forward.3} parent=0 // pred_fallthru
    _
  // Predicated region
  $region14: #{rnn_forward.3} parent=0 // pred_check
    _
  $region15: #{rnn_forward.3} parent=0 // pred_check_branch
    %21 = sbr.rel (0) target = $region17
  $region16: #{rnn_forward.3} parent=0 // pred_region
    _
  $region17: #{rnn_forward.3} parent=0 // pred_fallthru
    _
  // Predicated region
  $region18: #{rnn_forward.3} parent=0 // pred_check
    _
  $region19: #{rnn_forward.3} parent=0 // pred_check_branch
    %23 = sbr.rel (0) target = $region21
  $region20: #{rnn_forward.3} parent=0 // pred_region
    _
  $region21: #{rnn_forward.3} parent=0 // pred_fallthru
    _
  // Predicated region
  $region22: #{rnn_forward.3} parent=0 // pred_check
    _
  $region23: #{rnn_forward.3} parent=0 // pred_check_branch
    %25 = sbr.rel (0) target = $region25
  $region24: #{rnn_forward.3} parent=0 // pred_region
    _
  $region25: #{rnn_forward.3} parent=0 // pred_fallthru
    _
  %v26 = vld [vmem:[%s0] sm:$0xff]
  %v27 = vld [vmem:[%s0 + $0x8] sm:$0xff]
  %v28 = vld [vmem:[%s0 + $0x10] sm:$0xff]
  %v29 = vld [vmem:[%s0 + $0x18] sm:$0xff]
  %v30 = vld [vmem:[%s0 + $0x20] sm:$0xff]
  %v31 = vld [vmem:[%s0 + $0x28] sm:$0xff]
  %v32 = vld [vmem:[%s0 + $0x30] sm:$0xff]
  %v33 = vld [vmem:[%s0 + $0x38] sm:$0xff]
  %v34 = vld [vmem:[%s1] sm:$0xff]
  %v35 = vld [vmem:[%s1 + $0x8] sm:$0xff]
  %v36 = vld [vmem:[%s1 + $0x10] sm:$0xff]
  %v37 = vld [vmem:[%s1 + $0x18] sm:$0xff]
  %v38 = vld [vmem:[%s1 + $0x20] sm:$0xff]
  %v39 = vld [vmem:[%s1 + $0x28] sm:$0xff]
  %v40 = vld [vmem:[%s1 + $0x30] sm:$0xff]
  %v41 = vld [vmem:[%s1 + $0x38] sm:$0xff]
  %v42 = vld [vmem:[%s1 + $0x40] sm:$0xff]
  %v43 = vld [vmem:[%s1 + $0x48] sm:$0xff]
  %v44 = vld [vmem:[%s1 + $0x50] sm:$0xff]
  %v45 = vld [vmem:[%s1 + $0x58] sm:$0xff]
  %v46 = vld [vmem:[%s1 + $0x60] sm:$0xff]
  %v47 = vld [vmem:[%s1 + $0x68] sm:$0xff]
  %v48 = vld [vmem:[%s1 + $0x70] sm:$0xff]
  %v49 = vld [vmem:[%s1 + $0x78] sm:$0xff]
  %v50 = vld [vmem:[%s3] sm:$0x3]
  %v52 = vlaneseq
  %v53 = vshrl.u32 %v52, 7
  %v54 = vsub.s32 0, %v53
  %v55 = vrot.slane %v50, %v54
  %v56 = vlaneseq
  %v57 = vshrl.u32 %v56, 7
  %v58 = vsub.s32 1, %v57
  %v59 = vrot.slane %v50, %v58
  %vm62 = vcmask 523264
  %v64 = vsel %vm62, %v26, 0
  %v67 = vsel %vm62, %v27, 0
  %v70 = vsel %vm62, %v28, 0
  %v73 = vsel %vm62, %v29, 0
  %v76 = vsel %vm62, %v30, 0
  %v79 = vsel %vm62, %v31, 0
  %v82 = vsel %vm62, %v32, 0
  %v85 = vsel %vm62, %v33, 0
  %87 = vmatprep.subr.mxu0 %v35
  %88 = vmatpush1.msra.mxu0 %v34
  %89 = vmatprep.subr.mxu0 %v37
  %90 = vmatpush1.msra.mxu0 %v36
  %91 = vmatprep.subr.mxu0 %v39
  %92 = vmatpush1.msra.mxu0 %v38
  %93 = vmatprep.subr.mxu0 %v41
  %94 = vmatpush1.msra.mxu0 %v40
  %95 = vmatprep.subr.mxu0 %v43
  %96 = vmatpush1.msra.mxu0 %v42
  %97 = vmatprep.subr.mxu0 %v45
  %98 = vmatpush1.msra.mxu0 %v44
  %99 = vmatprep.subr.mxu0 %v47
  %100 = vmatpush1.msra.mxu0 %v46
  %101 = vmatprep.subr.mxu0 %v49
  %102 = vmatpush1.msra.mxu0 %v48
  %103 = vmatprep.subr.mxu0 0.0
  %104 = vmatpush1.msra.mxu0 0.0
  %105 = vmatprep.subr.mxu0 0.0
  %106 = vmatpush1.msra.mxu0 0.0
  %107 = vmatprep.subr.mxu0 0.0
  %108 = vmatpush1.msra.mxu0 0.0
  %109 = vmatprep.subr.mxu0 0.0
  %110 = vmatpush1.msra.mxu0 0.0
  %111 = vmatprep.subr.mxu0 0.0
  %112 = vmatpush1.msra.mxu0 0.0
  %113 = vmatprep.subr.mxu0 0.0
  %114 = vmatpush1.msra.mxu0 0.0
  %115 = vmatprep.subr.mxu0 0.0
  %116 = vmatpush1.msra.mxu0 0.0
  %117 = vmatprep.subr.mxu0 0.0
  %118 = vmatpush1.msra.mxu0 0.0
  %119 = vmatprep.subr.mxu0 0.0
  %120 = vmatpush1.msra.mxu0 0.0
  %121 = vmatprep.subr.mxu0 0.0
  %122 = vmatpush1.msra.mxu0 0.0
  %123 = vmatprep.subr.mxu0 0.0
  %124 = vmatpush1.msra.mxu0 0.0
  %125 = vmatprep.subr.mxu0 0.0
  %126 = vmatpush1.msra.mxu0 0.0
  %127 = vmatprep.subr.mxu0 0.0
  %128 = vmatpush1.msra.mxu0 0.0
  %129 = vmatprep.subr.mxu0 0.0
  %130 = vmatpush1.msra.mxu0 0.0
  %131 = vmatprep.subr.mxu0 0.0
  %132 = vmatpush1.msra.mxu0 0.0
  %133 = vmatprep.subr.mxu0 0.0
  %134 = vmatpush1.msra.mxu0 0.0
  %135 = vmatprep.subr.mxu0 0.0
  %136 = vmatpush1.msra.mxu0 0.0
  %137 = vmatprep.subr.mxu0 0.0
  %138 = vmatpush1.msra.mxu0 0.0
  %139 = vmatprep.subr.mxu0 0.0
  %140 = vmatpush1.msra.mxu0 0.0
  %141 = vmatprep.subr.mxu0 0.0
  %142 = vmatpush1.msra.mxu0 0.0
  %143 = vmatprep.subr.mxu0 0.0
  %144 = vmatpush1.msra.mxu0 0.0
  %145 = vmatprep.subr.mxu0 0.0
  %146 = vmatpush1.msra.mxu0 0.0
  %147 = vmatprep.subr.mxu0 0.0
  %148 = vmatpush1.msra.mxu0 0.0
  %149 = vmatprep.subr.mxu0 0.0
  %150 = vmatpush1.msra.mxu0 0.0
  %151 = vmatprep.mubr.f32.mxu0 0.0
  %152 = vmatmul.mubr.f32.gmra.mrb[0].mxu0 %v64
  %v153 = vpop.f32.mrb[0].mxu0
  %v154 = vadd.f32 %v55, %v153
  %v155 = vpop.f32.mrb[0].mxu0
  %v156 = vadd.f32 %v59, %v155
  %157 = vmatprep.mubr.f32.mxu0 0.0
  %158 = vmatmul.mubr.f32.gmra.mrb[0].mxu0 %v67
  %v159 = vpop.f32.mrb[0].mxu0
  %v160 = vadd.f32 %v55, %v159
  %v161 = vpop.f32.mrb[0].mxu0
  %v162 = vadd.f32 %v59, %v161
  %163 = vmatprep.mubr.f32.mxu0 0.0
  %164 = vmatmul.mubr.f32.gmra.mrb[0].mxu0 %v70
  %v165 = vpop.f32.mrb[0].mxu0
  %v166 = vadd.f32 %v55, %v165
  %v167 = vpop.f32.mrb[0].mxu0
  %v168 = vadd.f32 %v59, %v167
  %169 = vmatprep.mubr.f32.mxu0 0.0
  %170 = vmatmul.mubr.f32.gmra.mrb[0].mxu0 %v73
  %v171 = vpop.f32.mrb[0].mxu0
  %v172 = vadd.f32 %v55, %v171
  %v173 = vpop.f32.mrb[0].mxu0
  %v174 = vadd.f32 %v59, %v173
  %175 = vmatprep.mubr.f32.mxu0 0.0
  %176 = vmatmul.mubr.f32.gmra.mrb[0].mxu0 %v76
  %v177 = vpop.f32.mrb[0].mxu0
  %v178 = vadd.f32 %v55, %v177
  %v179 = vpop.f32.mrb[0].mxu0
  %v180 = vadd.f32 %v59, %v179
  %181 = vmatprep.mubr.f32.mxu0 0.0
  %182 = vmatmul.mubr.f32.gmra.mrb[0].mxu0 %v79
  %v183 = vpop.f32.mrb[0].mxu0
  %v184 = vadd.f32 %v55, %v183
  %v185 = vpop.f32.mrb[0].mxu0
  %v186 = vadd.f32 %v59, %v185
  %187 = vmatprep.mubr.f32.mxu0 0.0
  %188 = vmatmul.mubr.f32.gmra.mrb[0].mxu0 %v82
  %v189 = vpop.f32.mrb[0].mxu0
  %v190 = vadd.f32 %v55, %v189
  %v191 = vpop.f32.mrb[0].mxu0
  %v192 = vadd.f32 %v59, %v191
  %193 = vmatprep.mubr.f32.mxu0 0.0
  %194 = vmatmul.mubr.f32.gmra.mrb[0].mxu0 %v85
  %v195 = vpop.f32.mrb[0].mxu0
  %v196 = vadd.f32 %v55, %v195
  %v197 = vpop.f32.mrb[0].mxu0
  %v198 = vadd.f32 %v59, %v197
  %199 = vdwg.mxu0
  %200 = vst [vmem:[#allocation2] sm:$0xff] %v154
  %201 = vst [vmem:[#allocation2 + $0x8] sm:$0xff] %v156
  %202 = vst [vmem:[#allocation2 + $0x10] sm:$0xff] %v160
  %203 = vst [vmem:[#allocation2 + $0x18] sm:$0xff] %v162
  %204 = vst [vmem:[#allocation2 + $0x20] sm:$0xff] %v166
  %205 = vst [vmem:[#allocation2 + $0x28] sm:$0xff] %v168
  %206 = vst [vmem:[#allocation2 + $0x30] sm:$0xff] %v172
  %207 = vst [vmem:[#allocation2 + $0x38] sm:$0xff] %v174
  %208 = vst [vmem:[#allocation2 + $0x40] sm:$0xff] %v178
  %209 = vst [vmem:[#allocation2 + $0x48] sm:$0xff] %v180
  %210 = vst [vmem:[#allocation2 + $0x50] sm:$0xff] %v184
  %211 = vst [vmem:[#allocation2 + $0x58] sm:$0xff] %v186
  %212 = vst [vmem:[#allocation2 + $0x60] sm:$0xff] %v190
  %213 = vst [vmem:[#allocation2 + $0x68] sm:$0xff] %v192
  %214 = vst [vmem:[#allocation2 + $0x70] sm:$0xff] %v196
  %215 = vst [vmem:[#allocation2 + $0x78] sm:$0xff] %v198
  %v216 = vld [vmem:[%s2] sm:$0xff]
  %v217 = vld [vmem:[%s2 + $0x8] sm:$0xff]
  %v218 = vld [vmem:[%s2 + $0x10] sm:$0xff]
  %v219 = vld [vmem:[%s2 + $0x18] sm:$0xff]
  %v220 = vld [vmem:[%s2 + $0x20] sm:$0xff]
  %v221 = vld [vmem:[%s2 + $0x28] sm:$0xff]
  %v222 = vld [vmem:[%s2 + $0x30] sm:$0xff]
  %v223 = vld [vmem:[%s2 + $0x38] sm:$0xff]
  %v224 = vld [vmem:[%s2 + $0x40] sm:$0xff]
  %v225 = vld [vmem:[%s2 + $0x48] sm:$0xff]
  %v226 = vld [vmem:[%s2 + $0x50] sm:$0xff]
  %v227 = vld [vmem:[%s2 + $0x58] sm:$0xff]
  %v228 = vld [vmem:[%s2 + $0x60] sm:$0xff]
  %v229 = vld [vmem:[%s2 + $0x68] sm:$0xff]
  %v230 = vld [vmem:[%s2 + $0x70] sm:$0xff]
  %v231 = vld [vmem:[%s2 + $0x78] sm:$0xff]
  %v233 = vsel %vm62, 0.0, 0
  %235 = vmatprep.subr.mxu0 %v217
  %236 = vmatpush1.msra.mxu0 %v216
  %237 = vmatprep.subr.mxu0 %v219
  %238 = vmatpush1.msra.mxu0 %v218
  %239 = vmatprep.subr.mxu0 %v221
  %240 = vmatpush1.msra.mxu0 %v220
  %241 = vmatprep.subr.mxu0 %v223
  %242 = vmatpush1.msra.mxu0 %v222
  %243 = vmatprep.subr.mxu0 %v225
  %244 = vmatpush1.msra.mxu0 %v224
  %245 = vmatprep.subr.mxu0 %v227
  %246 = vmatpush1.msra.mxu0 %v226
  %247 = vmatprep.subr.mxu0 %v229
  %248 = vmatpush1.msra.mxu0 %v228
  %249 = vmatprep.subr.mxu0 %v231
  %250 = vmatpush1.msra.mxu0 %v230
  %251 = vmatprep.subr.mxu0 0.0
  %252 = vmatpush1.msra.mxu0 0.0
  %253 = vmatprep.subr.mxu0 0.0
  %254 = vmatpush1.msra.mxu0 0.0
  %255 = vmatprep.subr.mxu0 0.0
  %256 = vmatpush1.msra.mxu0 0.0
  %257 = vmatprep.subr.mxu0 0.0
  %258 = vmatpush1.msra.mxu0 0.0
  %259 = vmatprep.subr.mxu0 0.0
  %260 = vmatpush1.msra.mxu0 0.0
  %261 = vmatprep.subr.mxu0 0.0
  %262 = vmatpush1.msra.mxu0 0.0
  %263 = vmatprep.subr.mxu0 0.0
  %264 = vmatpush1.msra.mxu0 0.0
  %265 = vmatprep.subr.mxu0 0.0
  %266 = vmatpush1.msra.mxu0 0.0
  %267 = vmatprep.subr.mxu0 0.0
  %268 = vmatpush1.msra.mxu0 0.0
  %269 = vmatprep.subr.mxu0 0.0
  %270 = vmatpush1.msra.mxu0 0.0
  %271 = vmatprep.subr.mxu0 0.0
  %272 = vmatpush1.msra.mxu0 0.0
  %273 = vmatprep.subr.mxu0 0.0
  %274 = vmatpush1.msra.mxu0 0.0
  %275 = vmatprep.subr.mxu0 0.0
  %276 = vmatpush1.msra.mxu0 0.0
  %277 = vmatprep.subr.mxu0 0.0
  %278 = vmatpush1.msra.mxu0 0.0
  %279 = vmatprep.subr.mxu0 0.0
  %280 = vmatpush1.msra.mxu0 0.0
  %281 = vmatprep.subr.mxu0 0.0
  %282 = vmatpush1.msra.mxu0 0.0
  %283 = vmatprep.subr.mxu0 0.0
  %284 = vmatpush1.msra.mxu0 0.0
  %285 = vmatprep.subr.mxu0 0.0
  %286 = vmatpush1.msra.mxu0 0.0
  %287 = vmatprep.subr.mxu0 0.0
  %288 = vmatpush1.msra.mxu0 0.0
  %289 = vmatprep.subr.mxu0 0.0
  %290 = vmatpush1.msra.mxu0 0.0
  %291 = vmatprep.subr.mxu0 0.0
  %292 = vmatpush1.msra.mxu0 0.0
  %293 = vmatprep.subr.mxu0 0.0
  %294 = vmatpush1.msra.mxu0 0.0
  %295 = vmatprep.subr.mxu0 0.0
  %296 = vmatpush1.msra.mxu0 0.0
  %297 = vmatprep.subr.mxu0 0.0
  %298 = vmatpush1.msra.mxu0 0.0
  %299 = vmatprep.mubr.f32.mxu0 0.0
  %300 = vmatmul.mubr.f32.gmra.mrb[0].mxu0 %v233
  %v301 = vpop.f32.mrb[0].mxu0
  %v302 = vadd.f32 0.0, %v301
  %v303 = vpop.f32.mrb[0].mxu0
  %v304 = vadd.f32 0.0, %v303
  %305 = vdwg.mxu0
  %s306 = smul.u32 0, 2
  %s307 = smul.addr %s306, 8
  %s308 = scalar_lea.vmem [#allocation2], %s307
  %v309 = vld [vmem:[%s308] sm:$0xff]
  %v310 = vadd.f32 %v309, %v302
  %v311 = vxor.u32 %v310, 2147483648
  %v312 = vmul.f32 %v311, 1.442695
  %v313 = vpow.pop %v312
  %v314 = vadd.f32 %v313, 1.0
  %v315 = vrcp.pop %v314
  %v316 = vmul.f32 1.0, %v315
  %v317 = vtanh.pop %v310
  %v318 = vmul.f32 %v316, 0.0
  %320 = vrot.lane.b32.xlu0 %v317, 32
  %v321 = vpop.permute.xlu0 %320
  %v323 = vmul.f32 %v316, %v321
  %325 = vrot.lane.b32.xlu0 %v323, 32
  %v326 = vpop.permute.xlu0 %325
  %v328 = vadd.f32 %v318, %v326
  %v329 = vtanh.pop %v328
  %331 = vrot.lane.b32.xlu0 %v329, 32
  %v332 = vpop.permute.xlu0 %331
  %v334 = vmul.f32 %v316, %v332
  %s335 = smul.u32 7, 2
  %s336 = smul.addr %s335, 8
  %s337 = scalar_lea.vmem [#allocation2], %s336
  %v338 = vld [vmem:[%s337 + $0x8] sm:$0xff]
  %v339 = vadd.f32 %v338, %v304
  %v340 = vxor.u32 %v339, 2147483648
  %v341 = vmul.f32 %v340, 1.442695
  %v342 = vpow.pop %v341
  %v343 = vadd.f32 %v342, 1.0
  %v344 = vrcp.pop %v343
  %v345 = vmul.f32 1.0, %v344
  %v346 = vtanh.pop %v339
  %v347 = vmul.f32 %v345, 0.0
  %349 = vrot.lane.b32.xlu0 %v346, 32
  %v350 = vpop.permute.xlu0 %349
  %v352 = vmul.f32 %v345, %v350
  %354 = vrot.lane.b32.xlu0 %v352, 32
  %v355 = vpop.permute.xlu0 %354
  %v357 = vadd.f32 %v347, %v355
  %v358 = vtanh.pop %v357
  %360 = vrot.lane.b32.xlu0 %v358, 32
  %v361 = vpop.permute.xlu0 %360
  %v363 = vmul.f32 %v345, %v361
  %365 = vrot.lane.b32.xlu0 %v334, 64
  %v366 = vpop.permute.xlu0 %365
  %vm368 = vcmask 261120
  %369 = vst.msk [vmem:[#allocation3] sm:$0xff] %vm368, %v366
  %371 = vrot.lane.b32.xlu0 %v363, 96
  %v372 = vpop.permute.xlu0 %371
  %s374 = scalar_lea.vmem [#allocation3], 56
  %vm375 = vcmask 523520
  %376 = vst.msk [vmem:[%s374] sm:$0xff] %vm375, %v372
  %v377 = vsel %vm368, %v366, %v372
  %v379 = vsel %vm62, %v377, 0
  %381 = vmatprep.subr.mxu0 %v217
  %382 = vmatpush1.msra.mxu0 %v216
  %383 = vmatprep.subr.mxu0 %v219
  %384 = vmatpush1.msra.mxu0 %v218
  %385 = vmatprep.subr.mxu0 %v221
  %386 = vmatpush1.msra.mxu0 %v220
  %387 = vmatprep.subr.mxu0 %v223
  %388 = vmatpush1.msra.mxu0 %v222
  %389 = vmatprep.subr.mxu0 %v225
  %390 = vmatpush1.msra.mxu0 %v224
  %391 = vmatprep.subr.mxu0 %v227
  %392 = vmatpush1.msra.mxu0 %v226
  %393 = vmatprep.subr.mxu0 %v229
  %394 = vmatpush1.msra.mxu0 %v228
  %395 = vmatprep.subr.mxu0 %v231
  %396 = vmatpush1.msra.mxu0 %v230
  %397 = vmatprep.subr.mxu0 0.0
  %398 = vmatpush1.msra.mxu0 0.0
  %399 = vmatprep.subr.mxu0 0.0
  %400 = vmatpush1.msra.mxu0 0.0
  %401 = vmatprep.subr.mxu0 0.0
  %402 = vmatpush1.msra.mxu0 0.0
  %403 = vmatprep.subr.mxu0 0.0
  %404 = vmatpush1.msra.mxu0 0.0
  %405 = vmatprep.subr.mxu0 0.0
  %406 = vmatpush1.msra.mxu0 0.0
  %407 = vmatprep.subr.mxu0 0.0
  %408 = vmatpush1.msra.mxu0 0.0
  %409 = vmatprep.subr.mxu0 0.0
  %410 = vmatpush1.msra.mxu0 0.0
  %411 = vmatprep.subr.mxu0 0.0
  %412 = vmatpush1.msra.mxu0 0.0
  %413 = vmatprep.subr.mxu0 0.0
  %414 = vmatpush1.msra.mxu0 0.0
  %415 = vmatprep.subr.mxu0 0.0
  %416 = vmatpush1.msra.mxu0 0.0
  %417 = vmatprep.subr.mxu0 0.0
  %418 = vmatpush1.msra.mxu0 0.0
  %419 = vmatprep.subr.mxu0 0.0
  %420 = vmatpush1.msra.mxu0 0.0
  %421 = vmatprep.subr.mxu0 0.0
  %422 = vmatpush1.msra.mxu0 0.0
  %423 = vmatprep.subr.mxu0 0.0
  %424 = vmatpush1.msra.mxu0 0.0
  %425 = vmatprep.subr.mxu0 0.0
  %426 = vmatpush1.msra.mxu0 0.0
  %427 = vmatprep.subr.mxu0 0.0
  %428 = vmatpush1.msra.mxu0 0.0
  %429 = vmatprep.subr.mxu0 0.0
  %430 = vmatpush1.msra.mxu0 0.0
  %431 = vmatprep.subr.mxu0 0.0
  %432 = vmatpush1.msra.mxu0 0.0
  %433 = vmatprep.subr.mxu0 0.0
  %434 = vmatpush1.msra.mxu0 0.0
  %435 = vmatprep.subr.mxu0 0.0
  %436 = vmatpush1.msra.mxu0 0.0
  %437 = vmatprep.subr.mxu0 0.0
  %438 = vmatpush1.msra.mxu0 0.0
  %439 = vmatprep.subr.mxu0 0.0
  %440 = vmatpush1.msra.mxu0 0.0
  %441 = vmatprep.subr.mxu0 0.0
  %442 = vmatpush1.msra.mxu0 0.0
  %443 = vmatprep.subr.mxu0 0.0
  %444 = vmatpush1.msra.mxu0 0.0
  %445 = vmatprep.mubr.f32.mxu0 0.0
  %446 = vmatmul.mubr.f32.gmra.mrb[0].mxu0 %v379
  %v447 = vpop.f32.mrb[0].mxu0
  %v448 = vadd.f32 0.0, %v447
  %v449 = vpop.f32.mrb[0].mxu0
  %v450 = vadd.f32 0.0, %v449
  %451 = vdwg.mxu0
  %s452 = smul.u32 1, 2
  %s453 = smul.addr %s452, 8
  %s454 = scalar_lea.vmem [#allocation2], %s453
  %v455 = vld [vmem:[%s454] sm:$0xff]
  %v456 = vadd.f32 %v455, %v448
  %v457 = vxor.u32 %v456, 2147483648
  %v458 = vmul.f32 %v457, 1.442695
  %v459 = vpow.pop %v458
  %v460 = vadd.f32 %v459, 1.0
  %v461 = vrcp.pop %v460
  %v462 = vmul.f32 1.0, %v461
  %v463 = vtanh.pop %v456
  %v464 = vmul.f32 %v462, %v328
  %466 = vrot.lane.b32.xlu0 %v463, 32
  %v467 = vpop.permute.xlu0 %466
  %v469 = vmul.f32 %v462, %v467
  %471 = vrot.lane.b32.xlu0 %v469, 32
  %v472 = vpop.permute.xlu0 %471
  %v474 = vadd.f32 %v464, %v472
  %v475 = vtanh.pop %v474
  %477 = vrot.lane.b32.xlu0 %v475, 32
  %v478 = vpop.permute.xlu0 %477
  %v480 = vmul.f32 %v462, %v478
  %s481 = smul.u32 6, 2
  %s482 = smul.addr %s481, 8
  %s483 = scalar_lea.vmem [#allocation2], %s482
  %v484 = vld [vmem:[%s483 + $0x8] sm:$0xff]
  %v485 = vadd.f32 %v484, %v450
  %v486 = vxor.u32 %v485, 2147483648
  %v487 = vmul.f32 %v486, 1.442695
  %v488 = vpow.pop %v487
  %v489 = vadd.f32 %v488, 1.0
  %v490 = vrcp.pop %v489
  %v491 = vmul.f32 1.0, %v490
  %v492 = vtanh.pop %v485
  %v493 = vmul.f32 %v491, %v357
  %495 = vrot.lane.b32.xlu0 %v492, 32
  %v496 = vpop.permute.xlu0 %495
  %v498 = vmul.f32 %v491, %v496
  %500 = vrot.lane.b32.xlu0 %v498, 32
  %v501 = vpop.permute.xlu0 %500
  %v503 = vadd.f32 %v493, %v501
  %v504 = vtanh.pop %v503
  %506 = vrot.lane.b32.xlu0 %v504, 32
  %v507 = vpop.permute.xlu0 %506
  %v509 = vmul.f32 %v491, %v507
  %511 = vrot.lane.b32.xlu0 %v480, 64
  %v512 = vpop.permute.xlu0 %511
  %s514 = scalar_lea.vmem [#allocation3], 8
  %515 = vst.msk [vmem:[%s514] sm:$0xff] %vm368, %v512
  %517 = vrot.lane.b32.xlu0 %v509, 96
  %v518 = vpop.permute.xlu0 %517
  %s520 = scalar_lea.vmem [#allocation3], 48
  %521 = vst.msk [vmem:[%s520] sm:$0xff] %vm375, %v518
  %v522 = vsel %vm368, %v512, %v518
  %v524 = vsel %vm62, %v522, 0
  %526 = vmatprep.subr.mxu0 %v217
  %527 = vmatpush1.msra.mxu0 %v216
  %528 = vmatprep.subr.mxu0 %v219
  %529 = vmatpush1.msra.mxu0 %v218
  %530 = vmatprep.subr.mxu0 %v221
  %531 = vmatpush1.msra.mxu0 %v220
  %532 = vmatprep.subr.mxu0 %v223
  %533 = vmatpush1.msra.mxu0 %v222
  %534 = vmatprep.subr.mxu0 %v225
  %535 = vmatpush1.msra.mxu0 %v224
  %536 = vmatprep.subr.mxu0 %v227
  %537 = vmatpush1.msra.mxu0 %v226
  %538 = vmatprep.subr.mxu0 %v229
  %539 = vmatpush1.msra.mxu0 %v228
  %540 = vmatprep.subr.mxu0 %v231
  %541 = vmatpush1.msra.mxu0 %v230
  %542 = vmatprep.subr.mxu0 0.0
  %543 = vmatpush1.msra.mxu0 0.0
  %544 = vmatprep.subr.mxu0 0.0
  %545 = vmatpush1.msra.mxu0 0.0
  %546 = vmatprep.subr.mxu0 0.0
  %547 = vmatpush1.msra.mxu0 0.0
  %548 = vmatprep.subr.mxu0 0.0
  %549 = vmatpush1.msra.mxu0 0.0
  %550 = vmatprep.subr.mxu0 0.0
  %551 = vmatpush1.msra.mxu0 0.0
  %552 = vmatprep.subr.mxu0 0.0
  %553 = vmatpush1.msra.mxu0 0.0
  %554 = vmatprep.subr.mxu0 0.0
  %555 = vmatpush1.msra.mxu0 0.0
  %556 = vmatprep.subr.mxu0 0.0
  %557 = vmatpush1.msra.mxu0 0.0
  %558 = vmatprep.subr.mxu0 0.0
  %559 = vmatpush1.msra.mxu0 0.0
  %560 = vmatprep.subr.mxu0 0.0
  %561 = vmatpush1.msra.mxu0 0.0
  %562 = vmatprep.subr.mxu0 0.0
  %563 = vmatpush1.msra.mxu0 0.0
  %564 = vmatprep.subr.mxu0 0.0
  %565 = vmatpush1.msra.mxu0 0.0
  %566 = vmatprep.subr.mxu0 0.0
  %567 = vmatpush1.msra.mxu0 0.0
  %568 = vmatprep.subr.mxu0 0.0
  %569 = vmatpush1.msra.mxu0 0.0
  %570 = vmatprep.subr.mxu0 0.0
  %571 = vmatpush1.msra.mxu0 0.0
  %572 = vmatprep.subr.mxu0 0.0
  %573 = vmatpush1.msra.mxu0 0.0
  %574 = vmatprep.subr.mxu0 0.0
  %575 = vmatpush1.msra.mxu0 0.0
  %576 = vmatprep.subr.mxu0 0.0
  %577 = vmatpush1.msra.mxu0 0.0
  %578 = vmatprep.subr.mxu0 0.0
  %579 = vmatpush1.msra.mxu0 0.0
  %580 = vmatprep.subr.mxu0 0.0
  %581 = vmatpush1.msra.mxu0 0.0
  %582 = vmatprep.subr.mxu0 0.0
  %583 = vmatpush1.msra.mxu0 0.0
  %584 = vmatprep.subr.mxu0 0.0
  %585 = vmatpush1.msra.mxu0 0.0
  %586 = vmatprep.subr.mxu0 0.0
  %587 = vmatpush1.msra.mxu0 0.0
  %588 = vmatprep.subr.mxu0 0.0
  %589 = vmatpush1.msra.mxu0 0.0
  %590 = vmatprep.mubr.f32.mxu0 0.0
  %591 = vmatmul.mubr.f32.gmra.mrb[0].mxu0 %v524
  %v592 = vpop.f32.mrb[0].mxu0
  %v593 = vadd.f32 0.0, %v592
  %v594 = vpop.f32.mrb[0].mxu0
  %v595 = vadd.f32 0.0, %v594
  %596 = vdwg.mxu0
  %s597 = smul.u32 2, 2
  %s598 = smul.addr %s597, 8
  %s599 = scalar_lea.vmem [#allocation2], %s598
  %v600 = vld [vmem:[%s599] sm:$0xff]
  %v601 = vadd.f32 %v600, %v593
  %v602 = vxor.u32 %v601, 2147483648
  %v603 = vmul.f32 %v602, 1.442695
  %v604 = vpow.pop %v603
  %v605 = vadd.f32 %v604, 1.0
  %v606 = vrcp.pop %v605
  %v607 = vmul.f32 1.0, %v606
  %v608 = vtanh.pop %v601
  %v609 = vmul.f32 %v607, %v474
  %611 = vrot.lane.b32.xlu0 %v608, 32
  %v612 = vpop.permute.xlu0 %611
  %v614 = vmul.f32 %v607, %v612
  %616 = vrot.lane.b32.xlu0 %v614, 32
  %v617 = vpop.permute.xlu0 %616
  %v619 = vadd.f32 %v609, %v617
  %v620 = vtanh.pop %v619
  %622 = vrot.lane.b32.xlu0 %v620, 32
  %v623 = vpop.permute.xlu0 %622
  %v625 = vmul.f32 %v607, %v623
  %s626 = smul.u32 5, 2
  %s627 = smul.addr %s626, 8
  %s628 = scalar_lea.vmem [#allocation2], %s627
  %v629 = vld [vmem:[%s628 + $0x8] sm:$0xff]
  %v630 = vadd.f32 %v629, %v595
  %v631 = vxor.u32 %v630, 2147483648
  %v632 = vmul.f32 %v631, 1.442695
  %v633 = vpow.pop %v632
  %v634 = vadd.f32 %v633, 1.0
  %v635 = vrcp.pop %v634
  %v636 = vmul.f32 1.0, %v635
  %v637 = vtanh.pop %v630
  %v638 = vmul.f32 %v636, %v503
  %640 = vrot.lane.b32.xlu0 %v637, 32
  %v641 = vpop.permute.xlu0 %640
  %v643 = vmul.f32 %v636, %v641
  %645 = vrot.lane.b32.xlu0 %v643, 32
  %v646 = vpop.permute.xlu0 %645
  %v648 = vadd.f32 %v638, %v646
  %v649 = vtanh.pop %v648
  %651 = vrot.lane.b32.xlu0 %v649, 32
  %v652 = vpop.permute.xlu0 %651
  %v654 = vmul.f32 %v636, %v652
  %656 = vrot.lane.b32.xlu0 %v625, 64
  %v657 = vpop.permute.xlu0 %656
  %s659 = scalar_lea.vmem [#allocation3], 16
  %660 = vst.msk [vmem:[%s659] sm:$0xff] %vm368, %v657
  %662 = vrot.lane.b32.xlu0 %v654, 96
  %v663 = vpop.permute.xlu0 %662
  %s665 = scalar_lea.vmem [#allocation3], 40
  %666 = vst.msk [vmem:[%s665] sm:$0xff] %vm375, %v663
  %v667 = vsel %vm368, %v657, %v663
  %v669 = vsel %vm62, %v667, 0
  %671 = vmatprep.subr.mxu0 %v217
  %672 = vmatpush1.msra.mxu0 %v216
  %673 = vmatprep.subr.mxu0 %v219
  %674 = vmatpush1.msra.mxu0 %v218
  %675 = vmatprep.subr.mxu0 %v221
  %676 = vmatpush1.msra.mxu0 %v220
  %677 = vmatprep.subr.mxu0 %v223
  %678 = vmatpush1.msra.mxu0 %v222
  %679 = vmatprep.subr.mxu0 %v225
  %680 = vmatpush1.msra.mxu0 %v224
  %681 = vmatprep.subr.mxu0 %v227
  %682 = vmatpush1.msra.mxu0 %v226
  %683 = vmatprep.subr.mxu0 %v229
  %684 = vmatpush1.msra.mxu0 %v228
  %685 = vmatprep.subr.mxu0 %v231
  %686 = vmatpush1.msra.mxu0 %v230
  %687 = vmatprep.subr.mxu0 0.0
  %688 = vmatpush1.msra.mxu0 0.0
  %689 = vmatprep.subr.mxu0 0.0
  %690 = vmatpush1.msra.mxu0 0.0
  %691 = vmatprep.subr.mxu0 0.0
  %692 = vmatpush1.msra.mxu0 0.0
  %693 = vmatprep.subr.mxu0 0.0
  %694 = vmatpush1.msra.mxu0 0.0
  %695 = vmatprep.subr.mxu0 0.0
  %696 = vmatpush1.msra.mxu0 0.0
  %697 = vmatprep.subr.mxu0 0.0
  %698 = vmatpush1.msra.mxu0 0.0
  %699 = vmatprep.subr.mxu0 0.0
  %700 = vmatpush1.msra.mxu0 0.0
  %701 = vmatprep.subr.mxu0 0.0
  %702 = vmatpush1.msra.mxu0 0.0
  %703 = vmatprep.subr.mxu0 0.0
  %704 = vmatpush1.msra.mxu0 0.0
  %705 = vmatprep.subr.mxu0 0.0
  %706 = vmatpush1.msra.mxu0 0.0
  %707 = vmatprep.subr.mxu0 0.0
  %708 = vmatpush1.msra.mxu0 0.0
  %709 = vmatprep.subr.mxu0 0.0
  %710 = vmatpush1.msra.mxu0 0.0
  %711 = vmatprep.subr.mxu0 0.0
  %712 = vmatpush1.msra.mxu0 0.0
  %713 = vmatprep.subr.mxu0 0.0
  %714 = vmatpush1.msra.mxu0 0.0
  %715 = vmatprep.subr.mxu0 0.0
  %716 = vmatpush1.msra.mxu0 0.0
  %717 = vmatprep.subr.mxu0 0.0
  %718 = vmatpush1.msra.mxu0 0.0
  %719 = vmatprep.subr.mxu0 0.0
  %720 = vmatpush1.msra.mxu0 0.0
  %721 = vmatprep.subr.mxu0 0.0
  %722 = vmatpush1.msra.mxu0 0.0
  %723 = vmatprep.subr.mxu0 0.0
  %724 = vmatpush1.msra.mxu0 0.0
  %725 = vmatprep.subr.mxu0 0.0
  %726 = vmatpush1.msra.mxu0 0.0
  %727 = vmatprep.subr.mxu0 0.0
  %728 = vmatpush1.msra.mxu0 0.0
  %729 = vmatprep.subr.mxu0 0.0
  %730 = vmatpush1.msra.mxu0 0.0
  %731 = vmatprep.subr.mxu0 0.0
  %732 = vmatpush1.msra.mxu0 0.0
  %733 = vmatprep.subr.mxu0 0.0
  %734 = vmatpush1.msra.mxu0 0.0
  %735 = vmatprep.mubr.f32.mxu0 0.0
  %736 = vmatmul.mubr.f32.gmra.mrb[0].mxu0 %v669
  %v737 = vpop.f32.mrb[0].mxu0
  %v738 = vadd.f32 0.0, %v737
  %v739 = vpop.f32.mrb[0].mxu0
  %v740 = vadd.f32 0.0, %v739
  %741 = vdwg.mxu0
  %s742 = smul.u32 3, 2
  %s743 = smul.addr %s742, 8
  %s744 = scalar_lea.vmem [#allocation2], %s743
  %v745 = vld [vmem:[%s744] sm:$0xff]
  %v746 = vadd.f32 %v745, %v738
  %v747 = vxor.u32 %v746, 2147483648
  %v748 = vmul.f32 %v747, 1.442695
  %v749 = vpow.pop %v748
  %v750 = vadd.f32 %v749, 1.0
  %v751 = vrcp.pop %v750
  %v752 = vmul.f32 1.0, %v751
  %v753 = vtanh.pop %v746
  %v754 = vmul.f32 %v752, %v619
  %756 = vrot.lane.b32.xlu0 %v753, 32
  %v757 = vpop.permute.xlu0 %756
  %v759 = vmul.f32 %v752, %v757
  %761 = vrot.lane.b32.xlu0 %v759, 32
  %v762 = vpop.permute.xlu0 %761
  %v764 = vadd.f32 %v754, %v762
  %v765 = vtanh.pop %v764
  %767 = vrot.lane.b32.xlu0 %v765, 32
  %v768 = vpop.permute.xlu0 %767
  %v770 = vmul.f32 %v752, %v768
  %s771 = smul.u32 4, 2
  %s772 = smul.addr %s771, 8
  %s773 = scalar_lea.vmem [#allocation2], %s772
  %v774 = vld [vmem:[%s773 + $0x8] sm:$0xff]
  %v775 = vadd.f32 %v774, %v740
  %v776 = vxor.u32 %v775, 2147483648
  %v777 = vmul.f32 %v776, 1.442695
  %v778 = vpow.pop %v777
  %v779 = vadd.f32 %v778, 1.0
  %v780 = vrcp.pop %v779
  %v781 = vmul.f32 1.0, %v780
  %v782 = vtanh.pop %v775
  %v783 = vmul.f32 %v781, %v648
  %785 = vrot.lane.b32.xlu0 %v782, 32
  %v786 = vpop.permute.xlu0 %785
  %v788 = vmul.f32 %v781, %v786
  %790 = vrot.lane.b32.xlu0 %v788, 32
  %v791 = vpop.permute.xlu0 %790
  %v793 = vadd.f32 %v783, %v791
  %v794 = vtanh.pop %v793
  %796 = vrot.lane.b32.xlu0 %v794, 32
  %v797 = vpop.permute.xlu0 %796
  %v799 = vmul.f32 %v781, %v797
  %801 = vrot.lane.b32.xlu0 %v770, 64
  %v802 = vpop.permute.xlu0 %801
  %s804 = scalar_lea.vmem [#allocation3], 24
  %805 = vst.msk [vmem:[%s804] sm:$0xff] %vm368, %v802
  %807 = vrot.lane.b32.xlu0 %v799, 96
  %v808 = vpop.permute.xlu0 %807
  %s810 = scalar_lea.vmem [#allocation3], 32
  %811 = vst.msk [vmem:[%s810] sm:$0xff] %vm375, %v808
  %v812 = vsel %vm368, %v802, %v808
  %v814 = vsel %vm62, %v812, 0
  %816 = vmatprep.subr.mxu0 %v217
  %817 = vmatpush1.msra.mxu0 %v216
  %818 = vmatprep.subr.mxu0 %v219
  %819 = vmatpush1.msra.mxu0 %v218
  %820 = vmatprep.subr.mxu0 %v221
  %821 = vmatpush1.msra.mxu0 %v220
  %822 = vmatprep.subr.mxu0 %v223
  %823 = vmatpush1.msra.mxu0 %v222
  %824 = vmatprep.subr.mxu0 %v225
  %825 = vmatpush1.msra.mxu0 %v224
  %826 = vmatprep.subr.mxu0 %v227
  %827 = vmatpush1.msra.mxu0 %v226
  %828 = vmatprep.subr.mxu0 %v229
  %829 = vmatpush1.msra.mxu0 %v228
  %830 = vmatprep.subr.mxu0 %v231
  %831 = vmatpush1.msra.mxu0 %v230
  %832 = vmatprep.subr.mxu0 0.0
  %833 = vmatpush1.msra.mxu0 0.0
  %834 = vmatprep.subr.mxu0 0.0
  %835 = vmatpush1.msra.mxu0 0.0
  %836 = vmatprep.subr.mxu0 0.0
  %837 = vmatpush1.msra.mxu0 0.0
  %838 = vmatprep.subr.mxu0 0.0
  %839 = vmatpush1.msra.mxu0 0.0
  %840 = vmatprep.subr.mxu0 0.0
  %841 = vmatpush1.msra.mxu0 0.0
  %842 = vmatprep.subr.mxu0 0.0
  %843 = vmatpush1.msra.mxu0 0.0
  %844 = vmatprep.subr.mxu0 0.0
  %845 = vmatpush1.msra.mxu0 0.0
  %846 = vmatprep.subr.mxu0 0.0
  %847 = vmatpush1.msra.mxu0 0.0
  %848 = vmatprep.subr.mxu0 0.0
  %849 = vmatpush1.msra.mxu0 0.0
  %850 = vmatprep.subr.mxu0 0.0
  %851 = vmatpush1.msra.mxu0 0.0
  %852 = vmatprep.subr.mxu0 0.0
  %853 = vmatpush1.msra.mxu0 0.0
  %854 = vmatprep.subr.mxu0 0.0
  %855 = vmatpush1.msra.mxu0 0.0
  %856 = vmatprep.subr.mxu0 0.0
  %857 = vmatpush1.msra.mxu0 0.0
  %858 = vmatprep.subr.mxu0 0.0
  %859 = vmatpush1.msra.mxu0 0.0
  %860 = vmatprep.subr.mxu0 0.0
  %861 = vmatpush1.msra.mxu0 0.0
  %862 = vmatprep.subr.mxu0 0.0
  %863 = vmatpush1.msra.mxu0 0.0
  %864 = vmatprep.subr.mxu0 0.0
  %865 = vmatpush1.msra.mxu0 0.0
  %866 = vmatprep.subr.mxu0 0.0
  %867 = vmatpush1.msra.mxu0 0.0
  %868 = vmatprep.subr.mxu0 0.0
  %869 = vmatpush1.msra.mxu0 0.0
  %870 = vmatprep.subr.mxu0 0.0
  %871 = vmatpush1.msra.mxu0 0.0
  %872 = vmatprep.subr.mxu0 0.0
  %873 = vmatpush1.msra.mxu0 0.0
  %874 = vmatprep.subr.mxu0 0.0
  %875 = vmatpush1.msra.mxu0 0.0
  %876 = vmatprep.subr.mxu0 0.0
  %877 = vmatpush1.msra.mxu0 0.0
  %878 = vmatprep.subr.mxu0 0.0
  %879 = vmatpush1.msra.mxu0 0.0
  %880 = vmatprep.mubr.f32.mxu0 0.0
  %881 = vmatmul.mubr.f32.gmra.mrb[0].mxu0 %v814
  %v882 = vpop.f32.mrb[0].mxu0
  %v883 = vadd.f32 0.0, %v882
  %v884 = vpop.f32.mrb[0].mxu0
  %v885 = vadd.f32 0.0, %v884
  %886 = vdwg.mxu0
  %v887 = vld [vmem:[%s773] sm:$0xff]
  %v888 = vadd.f32 %v887, %v883
  %v889 = vxor.u32 %v888, 2147483648
  %v890 = vmul.f32 %v889, 1.442695
  %v891 = vpow.pop %v890
  %v892 = vadd.f32 %v891, 1.0
  %v893 = vrcp.pop %v892
  %v894 = vmul.f32 1.0, %v893
  %v895 = vtanh.pop %v888
  %v896 = vmul.f32 %v894, %v764
  %898 = vrot.lane.b32.xlu0 %v895, 32
  %v899 = vpop.permute.xlu0 %898
  %v901 = vmul.f32 %v894, %v899
  %903 = vrot.lane.b32.xlu0 %v901, 32
  %v904 = vpop.permute.xlu0 %903
  %v906 = vadd.f32 %v896, %v904
  %v907 = vtanh.pop %v906
  %909 = vrot.lane.b32.xlu0 %v907, 32
  %v910 = vpop.permute.xlu0 %909
  %v912 = vmul.f32 %v894, %v910
  %v913 = vld [vmem:[%s744 + $0x8] sm:$0xff]
  %v914 = vadd.f32 %v913, %v885
  %v915 = vxor.u32 %v914, 2147483648
  %v916 = vmul.f32 %v915, 1.442695
  %v917 = vpow.pop %v916
  %v918 = vadd.f32 %v917, 1.0
  %v919 = vrcp.pop %v918
  %v920 = vmul.f32 1.0, %v919
  %v921 = vtanh.pop %v914
  %v922 = vmul.f32 %v920, %v793
  %924 = vrot.lane.b32.xlu0 %v921, 32
  %v925 = vpop.permute.xlu0 %924
  %v927 = vmul.f32 %v920, %v925
  %929 = vrot.lane.b32.xlu0 %v927, 32
  %v930 = vpop.permute.xlu0 %929
  %v932 = vadd.f32 %v922, %v930
  %v933 = vtanh.pop %v932
  %935 = vrot.lane.b32.xlu0 %v933, 32
  %v936 = vpop.permute.xlu0 %935
  %v938 = vmul.f32 %v920, %v936
  %940 = vrot.lane.b32.xlu0 %v912, 64
  %v941 = vpop.permute.xlu0 %940
  %943 = vst.msk [vmem:[%s810] sm:$0xff] %vm368, %v941
  %945 = vrot.lane.b32.xlu0 %v938, 96
  %v946 = vpop.permute.xlu0 %945
  %948 = vst.msk [vmem:[%s804] sm:$0xff] %vm375, %v946
  %v949 = vsel %vm368, %v941, %v946
  %v951 = vsel %vm62, %v949, 0
  %953 = vmatprep.subr.mxu0 %v217
  %954 = vmatpush1.msra.mxu0 %v216
  %955 = vmatprep.subr.mxu0 %v219
  %956 = vmatpush1.msra.mxu0 %v218
  %957 = vmatprep.subr.mxu0 %v221
  %958 = vmatpush1.msra.mxu0 %v220
  %959 = vmatprep.subr.mxu0 %v223
  %960 = vmatpush1.msra.mxu0 %v222
  %961 = vmatprep.subr.mxu0 %v225
  %962 = vmatpush1.msra.mxu0 %v224
  %963 = vmatprep.subr.mxu0 %v227
  %964 = vmatpush1.msra.mxu0 %v226
  %965 = vmatprep.subr.mxu0 %v229
  %966 = vmatpush1.msra.mxu0 %v228
  %967 = vmatprep.subr.mxu0 %v231
  %968 = vmatpush1.msra.mxu0 %v230
  %969 = vmatprep.subr.mxu0 0.0
  %970 = vmatpush1.msra.mxu0 0.0
  %971 = vmatprep.subr.mxu0 0.0
  %972 = vmatpush1.msra.mxu0 0.0
  %973 = vmatprep.subr.mxu0 0.0
  %974 = vmatpush1.msra.mxu0 0.0
  %975 = vmatprep.subr.mxu0 0.0
  %976 = vmatpush1.msra.mxu0 0.0
  %977 = vmatprep.subr.mxu0 0.0
  %978 = vmatpush1.msra.mxu0 0.0
  %979 = vmatprep.subr.mxu0 0.0
  %980 = vmatpush1.msra.mxu0 0.0
  %981 = vmatprep.subr.mxu0 0.0
  %982 = vmatpush1.msra.mxu0 0.0
  %983 = vmatprep.subr.mxu0 0.0
  %984 = vmatpush1.msra.mxu0 0.0
  %985 = vmatprep.subr.mxu0 0.0
  %986 = vmatpush1.msra.mxu0 0.0
  %987 = vmatprep.subr.mxu0 0.0
  %988 = vmatpush1.msra.mxu0 0.0
  %989 = vmatprep.subr.mxu0 0.0
  %990 = vmatpush1.msra.mxu0 0.0
  %991 = vmatprep.subr.mxu0 0.0
  %992 = vmatpush1.msra.mxu0 0.0
  %993 = vmatprep.subr.mxu0 0.0
  %994 = vmatpush1.msra.mxu0 0.0
  %995 = vmatprep.subr.mxu0 0.0
  %996 = vmatpush1.msra.mxu0 0.0
  %997 = vmatprep.subr.mxu0 0.0
  %998 = vmatpush1.msra.mxu0 0.0
  %999 = vmatprep.subr.mxu0 0.0
  %1000 = vmatpush1.msra.mxu0 0.0
  %1001 = vmatprep.subr.mxu0 0.0
  %1002 = vmatpush1.msra.mxu0 0.0
  %1003 = vmatprep.subr.mxu0 0.0
  %1004 = vmatpush1.msra.mxu0 0.0
  %1005 = vmatprep.subr.mxu0 0.0
  %1006 = vmatpush1.msra.mxu0 0.0
  %1007 = vmatprep.subr.mxu0 0.0
  %1008 = vmatpush1.msra.mxu0 0.0
  %1009 = vmatprep.subr.mxu0 0.0
  %1010 = vmatpush1.msra.mxu0 0.0
  %1011 = vmatprep.subr.mxu0 0.0
  %1012 = vmatpush1.msra.mxu0 0.0
  %1013 = vmatprep.subr.mxu0 0.0
  %1014 = vmatpush1.msra.mxu0 0.0
  %1015 = vmatprep.subr.mxu0 0.0
  %1016 = vmatpush1.msra.mxu0 0.0
  %1017 = vmatprep.mubr.f32.mxu0 0.0
  %1018 = vmatmul.mubr.f32.gmra.mrb[0].mxu0 %v951
  %v1019 = vpop.f32.mrb[0].mxu0
  %v1020 = vadd.f32 0.0, %v1019
  %v1021 = vpop.f32.mrb[0].mxu0
  %v1022 = vadd.f32 0.0, %v1021
  %1023 = vdwg.mxu0
  %v1024 = vld [vmem:[%s628] sm:$0xff]
  %v1025 = vadd.f32 %v1024, %v1020
  %v1026 = vxor.u32 %v1025, 2147483648
  %v1027 = vmul.f32 %v1026, 1.442695
  %v1028 = vpow.pop %v1027
  %v1029 = vadd.f32 %v1028, 1.0
  %v1030 = vrcp.pop %v1029
  %v1031 = vmul.f32 1.0, %v1030
  %v1032 = vtanh.pop %v1025
  %v1033 = vmul.f32 %v1031, %v906
  %1035 = vrot.lane.b32.xlu0 %v1032, 32
  %v1036 = vpop.permute.xlu0 %1035
  %v1038 = vmul.f32 %v1031, %v1036
  %1040 = vrot.lane.b32.xlu0 %v1038, 32
  %v1041 = vpop.permute.xlu0 %1040
  %v1043 = vadd.f32 %v1033, %v1041
  %v1044 = vtanh.pop %v1043
  %1046 = vrot.lane.b32.xlu0 %v1044, 32
  %v1047 = vpop.permute.xlu0 %1046
  %v1049 = vmul.f32 %v1031, %v1047
  %v1050 = vld [vmem:[%s599 + $0x8] sm:$0xff]
  %v1051 = vadd.f32 %v1050, %v1022
  %v1052 = vxor.u32 %v1051, 2147483648
  %v1053 = vmul.f32 %v1052, 1.442695
  %v1054 = vpow.pop %v1053
  %v1055 = vadd.f32 %v1054, 1.0
  %v1056 = vrcp.pop %v1055
  %v1057 = vmul.f32 1.0, %v1056
  %v1058 = vtanh.pop %v1051
  %v1059 = vmul.f32 %v1057, %v932
  %1061 = vrot.lane.b32.xlu0 %v1058, 32
  %v1062 = vpop.permute.xlu0 %1061
  %v1064 = vmul.f32 %v1057, %v1062
  %1066 = vrot.lane.b32.xlu0 %v1064, 32
  %v1067 = vpop.permute.xlu0 %1066
  %v1069 = vadd.f32 %v1059, %v1067
  %v1070 = vtanh.pop %v1069
  %1072 = vrot.lane.b32.xlu0 %v1070, 32
  %v1073 = vpop.permute.xlu0 %1072
  %v1075 = vmul.f32 %v1057, %v1073
  %1077 = vrot.lane.b32.xlu0 %v1049, 64
  %v1078 = vpop.permute.xlu0 %1077
  %1080 = vst.msk [vmem:[%s665] sm:$0xff] %vm368, %v1078
  %1082 = vrot.lane.b32.xlu0 %v1075, 96
  %v1083 = vpop.permute.xlu0 %1082
  %1085 = vst.msk [vmem:[%s659] sm:$0xff] %vm375, %v1083
  %v1086 = vsel %vm368, %v1078, %v1083
  %v1088 = vsel %vm62, %v1086, 0
  %1090 = vmatprep.subr.mxu0 %v217
  %1091 = vmatpush1.msra.mxu0 %v216
  %1092 = vmatprep.subr.mxu0 %v219
  %1093 = vmatpush1.msra.mxu0 %v218
  %1094 = vmatprep.subr.mxu0 %v221
  %1095 = vmatpush1.msra.mxu0 %v220
  %1096 = vmatprep.subr.mxu0 %v223
  %1097 = vmatpush1.msra.mxu0 %v222
  %1098 = vmatprep.subr.mxu0 %v225
  %1099 = vmatpush1.msra.mxu0 %v224
  %1100 = vmatprep.subr.mxu0 %v227
  %1101 = vmatpush1.msra.mxu0 %v226
  %1102 = vmatprep.subr.mxu0 %v229
  %1103 = vmatpush1.msra.mxu0 %v228
  %1104 = vmatprep.subr.mxu0 %v231
  %1105 = vmatpush1.msra.mxu0 %v230
  %1106 = vmatprep.subr.mxu0 0.0
  %1107 = vmatpush1.msra.mxu0 0.0
  %1108 = vmatprep.subr.mxu0 0.0
  %1109 = vmatpush1.msra.mxu0 0.0
  %1110 = vmatprep.subr.mxu0 0.0
  %1111 = vmatpush1.msra.mxu0 0.0
  %1112 = vmatprep.subr.mxu0 0.0
  %1113 = vmatpush1.msra.mxu0 0.0
  %1114 = vmatprep.subr.mxu0 0.0
  %1115 = vmatpush1.msra.mxu0 0.0
  %1116 = vmatprep.subr.mxu0 0.0
  %1117 = vmatpush1.msra.mxu0 0.0
  %1118 = vmatprep.subr.mxu0 0.0
  %1119 = vmatpush1.msra.mxu0 0.0
  %1120 = vmatprep.subr.mxu0 0.0
  %1121 = vmatpush1.msra.mxu0 0.0
  %1122 = vmatprep.subr.mxu0 0.0
  %1123 = vmatpush1.msra.mxu0 0.0
  %1124 = vmatprep.subr.mxu0 0.0
  %1125 = vmatpush1.msra.mxu0 0.0
  %1126 = vmatprep.subr.mxu0 0.0
  %1127 = vmatpush1.msra.mxu0 0.0
  %1128 = vmatprep.subr.mxu0 0.0
  %1129 = vmatpush1.msra.mxu0 0.0
  %1130 = vmatprep.subr.mxu0 0.0
  %1131 = vmatpush1.msra.mxu0 0.0
  %1132 = vmatprep.subr.mxu0 0.0
  %1133 = vmatpush1.msra.mxu0 0.0
  %1134 = vmatprep.subr.mxu0 0.0
  %1135 = vmatpush1.msra.mxu0 0.0
  %1136 = vmatprep.subr.mxu0 0.0
  %1137 = vmatpush1.msra.mxu0 0.0
  %1138 = vmatprep.subr.mxu0 0.0
  %1139 = vmatpush1.msra.mxu0 0.0
  %1140 = vmatprep.subr.mxu0 0.0
  %1141 = vmatpush1.msra.mxu0 0.0
  %1142 = vmatprep.subr.mxu0 0.0
  %1143 = vmatpush1.msra.mxu0 0.0
  %1144 = vmatprep.subr.mxu0 0.0
  %1145 = vmatpush1.msra.mxu0 0.0
  %1146 = vmatprep.subr.mxu0 0.0
  %1147 = vmatpush1.msra.mxu0 0.0
  %1148 = vmatprep.subr.mxu0 0.0
  %1149 = vmatpush1.msra.mxu0 0.0
  %1150 = vmatprep.subr.mxu0 0.0
  %1151 = vmatpush1.msra.mxu0 0.0
  %1152 = vmatprep.subr.mxu0 0.0
  %1153 = vmatpush1.msra.mxu0 0.0
  %1154 = vmatprep.mubr.f32.mxu0 0.0
  %1155 = vmatmul.mubr.f32.gmra.mrb[0].mxu0 %v1088
  %v1156 = vpop.f32.mrb[0].mxu0
  %v1157 = vadd.f32 0.0, %v1156
  %v1158 = vpop.f32.mrb[0].mxu0
  %v1159 = vadd.f32 0.0, %v1158
  %1160 = vdwg.mxu0
  %v1161 = vld [vmem:[%s483] sm:$0xff]
  %v1162 = vadd.f32 %v1161, %v1157
  %v1163 = vxor.u32 %v1162, 2147483648
  %v1164 = vmul.f32 %v1163, 1.442695
  %v1165 = vpow.pop %v1164
  %v1166 = vadd.f32 %v1165, 1.0
  %v1167 = vrcp.pop %v1166
  %v1168 = vmul.f32 1.0, %v1167
  %v1169 = vtanh.pop %v1162
  %v1170 = vmul.f32 %v1168, %v1043
  %1172 = vrot.lane.b32.xlu0 %v1169, 32
  %v1173 = vpop.permute.xlu0 %1172
  %v1175 = vmul.f32 %v1168, %v1173
  %1177 = vrot.lane.b32.xlu0 %v1175, 32
  %v1178 = vpop.permute.xlu0 %1177
  %v1180 = vadd.f32 %v1170, %v1178
  %v1181 = vtanh.pop %v1180
  %1183 = vrot.lane.b32.xlu0 %v1181, 32
  %v1184 = vpop.permute.xlu0 %1183
  %v1186 = vmul.f32 %v1168, %v1184
  %v1187 = vld [vmem:[%s454 + $0x8] sm:$0xff]
  %v1188 = vadd.f32 %v1187, %v1159
  %v1189 = vxor.u32 %v1188, 2147483648
  %v1190 = vmul.f32 %v1189, 1.442695
  %v1191 = vpow.pop %v1190
  %v1192 = vadd.f32 %v1191, 1.0
  %v1193 = vrcp.pop %v1192
  %v1194 = vmul.f32 1.0, %v1193
  %v1195 = vtanh.pop %v1188
  %v1196 = vmul.f32 %v1194, %v1069
  %1198 = vrot.lane.b32.xlu0 %v1195, 32
  %v1199 = vpop.permute.xlu0 %1198
  %v1201 = vmul.f32 %v1194, %v1199
  %1203 = vrot.lane.b32.xlu0 %v1201, 32
  %v1204 = vpop.permute.xlu0 %1203
  %v1206 = vadd.f32 %v1196, %v1204
  %v1207 = vtanh.pop %v1206
  %1209 = vrot.lane.b32.xlu0 %v1207, 32
  %v1210 = vpop.permute.xlu0 %1209
  %v1212 = vmul.f32 %v1194, %v1210
  %1214 = vrot.lane.b32.xlu0 %v1186, 64
  %v1215 = vpop.permute.xlu0 %1214
  %1217 = vst.msk [vmem:[%s520] sm:$0xff] %vm368, %v1215
  %1219 = vrot.lane.b32.xlu0 %v1212, 96
  %v1220 = vpop.permute.xlu0 %1219
  %1222 = vst.msk [vmem:[%s514] sm:$0xff] %vm375, %v1220
  %v1223 = vsel %vm368, %v1215, %v1220
  %v1225 = vsel %vm62, %v1223, 0
  %1227 = vmatprep.subr.mxu0 %v217
  %1228 = vmatpush1.msra.mxu0 %v216
  %1229 = vmatprep.subr.mxu0 %v219
  %1230 = vmatpush1.msra.mxu0 %v218
  %1231 = vmatprep.subr.mxu0 %v221
  %1232 = vmatpush1.msra.mxu0 %v220
  %1233 = vmatprep.subr.mxu0 %v223
  %1234 = vmatpush1.msra.mxu0 %v222
  %1235 = vmatprep.subr.mxu0 %v225
  %1236 = vmatpush1.msra.mxu0 %v224
  %1237 = vmatprep.subr.mxu0 %v227
  %1238 = vmatpush1.msra.mxu0 %v226
  %1239 = vmatprep.subr.mxu0 %v229
  %1240 = vmatpush1.msra.mxu0 %v228
  %1241 = vmatprep.subr.mxu0 %v231
  %1242 = vmatpush1.msra.mxu0 %v230
  %1243 = vmatprep.subr.mxu0 0.0
  %1244 = vmatpush1.msra.mxu0 0.0
  %1245 = vmatprep.subr.mxu0 0.0
  %1246 = vmatpush1.msra.mxu0 0.0
  %1247 = vmatprep.subr.mxu0 0.0
  %1248 = vmatpush1.msra.mxu0 0.0
  %1249 = vmatprep.subr.mxu0 0.0
  %1250 = vmatpush1.msra.mxu0 0.0
  %1251 = vmatprep.subr.mxu0 0.0
  %1252 = vmatpush1.msra.mxu0 0.0
  %1253 = vmatprep.subr.mxu0 0.0
  %1254 = vmatpush1.msra.mxu0 0.0
  %1255 = vmatprep.subr.mxu0 0.0
  %1256 = vmatpush1.msra.mxu0 0.0
  %1257 = vmatprep.subr.mxu0 0.0
  %1258 = vmatpush1.msra.mxu0 0.0
  %1259 = vmatprep.subr.mxu0 0.0
  %1260 = vmatpush1.msra.mxu0 0.0
  %1261 = vmatprep.subr.mxu0 0.0
  %1262 = vmatpush1.msra.mxu0 0.0
  %1263 = vmatprep.subr.mxu0 0.0
  %1264 = vmatpush1.msra.mxu0 0.0
  %1265 = vmatprep.subr.mxu0 0.0
  %1266 = vmatpush1.msra.mxu0 0.0
  %1267 = vmatprep.subr.mxu0 0.0
  %1268 = vmatpush1.msra.mxu0 0.0
  %1269 = vmatprep.subr.mxu0 0.0
  %1270 = vmatpush1.msra.mxu0 0.0
  %1271 = vmatprep.subr.mxu0 0.0
  %1272 = vmatpush1.msra.mxu0 0.0
  %1273 = vmatprep.subr.mxu0 0.0
  %1274 = vmatpush1.msra.mxu0 0.0
  %1275 = vmatprep.subr.mxu0 0.0
  %1276 = vmatpush1.msra.mxu0 0.0
  %1277 = vmatprep.subr.mxu0 0.0
  %1278 = vmatpush1.msra.mxu0 0.0
  %1279 = vmatprep.subr.mxu0 0.0
  %1280 = vmatpush1.msra.mxu0 0.0
  %1281 = vmatprep.subr.mxu0 0.0
  %1282 = vmatpush1.msra.mxu0 0.0
  %1283 = vmatprep.subr.mxu0 0.0
  %1284 = vmatpush1.msra.mxu0 0.0
  %1285 = vmatprep.subr.mxu0 0.0
  %1286 = vmatpush1.msra.mxu0 0.0
  %1287 = vmatprep.subr.mxu0 0.0
  %1288 = vmatpush1.msra.mxu0 0.0
  %1289 = vmatprep.subr.mxu0 0.0
  %1290 = vmatpush1.msra.mxu0 0.0
  %1291 = vmatprep.mubr.f32.mxu0 0.0
  %1292 = vmatmul.mubr.f32.gmra.mrb[0].mxu0 %v1225
  %v1293 = vpop.f32.mrb[0].mxu0
  %v1294 = vadd.f32 0.0, %v1293
  %v1295 = vpop.f32.mrb[0].mxu0
  %v1296 = vadd.f32 0.0, %v1295
  %1297 = vdwg.mxu0
  %v1298 = vld [vmem:[%s337] sm:$0xff]
  %v1299 = vadd.f32 %v1298, %v1294
  %v1300 = vxor.u32 %v1299, 2147483648
  %v1301 = vmul.f32 %v1300, 1.442695
  %v1302 = vpow.pop %v1301
  %v1303 = vadd.f32 %v1302, 1.0
  %v1304 = vrcp.pop %v1303
  %v1305 = vmul.f32 1.0, %v1304
  %v1306 = vtanh.pop %v1299
  %v1307 = vmul.f32 %v1305, %v1180
  %1309 = vrot.lane.b32.xlu0 %v1306, 32
  %v1310 = vpop.permute.xlu0 %1309
  %v1312 = vmul.f32 %v1305, %v1310
  %1314 = vrot.lane.b32.xlu0 %v1312, 32
  %v1315 = vpop.permute.xlu0 %1314
  %v1317 = vadd.f32 %v1307, %v1315
  %v1318 = vtanh.pop %v1317
  %1320 = vrot.lane.b32.xlu0 %v1318, 32
  %v1321 = vpop.permute.xlu0 %1320
  %v1323 = vmul.f32 %v1305, %v1321
  %v1324 = vld [vmem:[%s308 + $0x8] sm:$0xff]
  %v1325 = vadd.f32 %v1324, %v1296
  %v1326 = vxor.u32 %v1325, 2147483648
  %v1327 = vmul.f32 %v1326, 1.442695
  %v1328 = vpow.pop %v1327
  %v1329 = vadd.f32 %v1328, 1.0
  %v1330 = vrcp.pop %v1329
  %v1331 = vmul.f32 1.0, %v1330
  %v1332 = vtanh.pop %v1325
  %v1333 = vmul.f32 %v1331, %v1206
  %1335 = vrot.lane.b32.xlu0 %v1332, 32
  %v1336 = vpop.permute.xlu0 %1335
  %v1338 = vmul.f32 %v1331, %v1336
  %1340 = vrot.lane.b32.xlu0 %v1338, 32
  %v1341 = vpop.permute.xlu0 %1340
  %v1343 = vadd.f32 %v1333, %v1341
  %v1344 = vtanh.pop %v1343
  %1346 = vrot.lane.b32.xlu0 %v1344, 32
  %v1347 = vpop.permute.xlu0 %1346
  %v1349 = vmul.f32 %v1331, %v1347
  %1351 = vrot.lane.b32.xlu0 %v1323, 64
  %v1352 = vpop.permute.xlu0 %1351
  %1354 = vst.msk [vmem:[%s374] sm:$0xff] %vm368, %v1352
  %1356 = vrot.lane.b32.xlu0 %v1349, 96
  %v1357 = vpop.permute.xlu0 %1356
  %1359 = vst.msk [vmem:[#allocation3] sm:$0xff] %vm375, %v1357
  %v1360 = vsel %vm368, %v1352, %v1357
  %vm1361 = vcmask 254976
  %1362 = vst.msk [vmem:[%s7] sm:$0x3] %vm1361, %v1360
  %1364 = vrot.lane.b32.xlu0 %v1360, 96
  %v1365 = vpop.permute.xlu0 %1364
  %s1367 = scalar_lea.vmem %s7, 2
  %1368 = vst.msk [vmem:[%s1367] sm:$0x3] %vm1361, %v1365
  %1370 = vrot.lane.b32.xlu0 %v1317, 96
  %v1371 = vpop.permute.xlu0 %1370
  %1373 = vst.msk [vmem:[%s8] sm:$0x3] %vm1361, %v1371
  %1375 = vrot.lane.b32.xlu0 %v1343, 96
  %v1376 = vpop.permute.xlu0 %1375
  %s1378 = scalar_lea.vmem %s8, 2
  %1379 = vst.msk [vmem:[%s1378] sm:$0x3] %vm1361, %v1376
  %v1380 = vld [vmem:[#allocation3] sm:$0xff]
  %v1381 = vld [vmem:[#allocation3 + $0x8] sm:$0xff]
  %v1382 = vld [vmem:[#allocation3 + $0x10] sm:$0xff]
  %v1383 = vld [vmem:[#allocation3 + $0x18] sm:$0xff]
  %v1384 = vld [vmem:[#allocation3 + $0x20] sm:$0xff]
  %v1385 = vld [vmem:[#allocation3 + $0x28] sm:$0xff]
  %v1386 = vld [vmem:[#allocation3 + $0x30] sm:$0xff]
  %v1387 = vld [vmem:[#allocation3 + $0x38] sm:$0xff]
  %v1388 = vld [vmem:[%s4] sm:$0xff]
  %v1389 = vld [vmem:[%s4 + $0x8] sm:$0xff]
  %v1390 = vld [vmem:[%s4 + $0x10] sm:$0xff]
  %v1391 = vld [vmem:[%s4 + $0x18] sm:$0xff]
  %v1392 = vld [vmem:[%s4 + $0x20] sm:$0xff]
  %v1393 = vld [vmem:[%s4 + $0x28] sm:$0xff]
  %v1394 = vld [vmem:[%s4 + $0x30] sm:$0xff]
  %v1395 = vld [vmem:[%s4 + $0x38] sm:$0xff]
  %v1396 = vld [vmem:[%s5] sm:$0x1]
  %v1398 = vlaneseq
  %v1399 = vshrl.u32 %v1398, 7
  %v1400 = vsub.s32 0, %v1399
  %v1401 = vrot.slane %v1396, %v1400
  %v1404 = vsel %vm62, %v1380, 0
  %v1407 = vsel %vm62, %v1381, 0
  %v1410 = vsel %vm62, %v1382, 0
  %v1413 = vsel %vm62, %v1383, 0
  %v1416 = vsel %vm62, %v1384, 0
  %v1419 = vsel %vm62, %v1385, 0
  %v1422 = vsel %vm62, %v1386, 0
  %v1425 = vsel %vm62, %v1387, 0
  %1427 = vmatprep.subr.mxu0 0.0
  %1428 = vmatpush1.msra.mxu0 %v1388
  %1429 = vmatprep.subr.mxu0 0.0
  %1430 = vmatpush1.msra.mxu0 %v1389
  %1431 = vmatprep.subr.mxu0 0.0
  %1432 = vmatpush1.msra.mxu0 %v1390
  %1433 = vmatprep.subr.mxu0 0.0
  %1434 = vmatpush1.msra.mxu0 %v1391
  %1435 = vmatprep.subr.mxu0 0.0
  %1436 = vmatpush1.msra.mxu0 %v1392
  %1437 = vmatprep.subr.mxu0 0.0
  %1438 = vmatpush1.msra.mxu0 %v1393
  %1439 = vmatprep.subr.mxu0 0.0
  %1440 = vmatpush1.msra.mxu0 %v1394
  %1441 = vmatprep.subr.mxu0 0.0
  %1442 = vmatpush1.msra.mxu0 %v1395
  %1443 = vmatprep.subr.mxu0 0.0
  %1444 = vmatpush1.msra.mxu0 0.0
  %1445 = vmatprep.subr.mxu0 0.0
  %1446 = vmatpush1.msra.mxu0 0.0
  %1447 = vmatprep.subr.mxu0 0.0
  %1448 = vmatpush1.msra.mxu0 0.0
  %1449 = vmatprep.subr.mxu0 0.0
  %1450 = vmatpush1.msra.mxu0 0.0
  %1451 = vmatprep.subr.mxu0 0.0
  %1452 = vmatpush1.msra.mxu0 0.0
  %1453 = vmatprep.subr.mxu0 0.0
  %1454 = vmatpush1.msra.mxu0 0.0
  %1455 = vmatprep.subr.mxu0 0.0
  %1456 = vmatpush1.msra.mxu0 0.0
  %1457 = vmatprep.subr.mxu0 0.0
  %1458 = vmatpush1.msra.mxu0 0.0
  %1459 = vmatprep.subr.mxu0 0.0
  %1460 = vmatpush1.msra.mxu0 0.0
  %1461 = vmatprep.subr.mxu0 0.0
  %1462 = vmatpush1.msra.mxu0 0.0
  %1463 = vmatprep.subr.mxu0 0.0
  %1464 = vmatpush1.msra.mxu0 0.0
  %1465 = vmatprep.subr.mxu0 0.0
  %1466 = vmatpush1.msra.mxu0 0.0
  %1467 = vmatprep.subr.mxu0 0.0
  %1468 = vmatpush1.msra.mxu0 0.0
  %1469 = vmatprep.subr.mxu0 0.0
  %1470 = vmatpush1.msra.mxu0 0.0
  %1471 = vmatprep.subr.mxu0 0.0
  %1472 = vmatpush1.msra.mxu0 0.0
  %1473 = vmatprep.subr.mxu0 0.0
  %1474 = vmatpush1.msra.mxu0 0.0
  %1475 = vmatprep.subr.mxu0 0.0
  %1476 = vmatpush1.msra.mxu0 0.0
  %1477 = vmatprep.subr.mxu0 0.0
  %1478 = vmatpush1.msra.mxu0 0.0
  %1479 = vmatprep.subr.mxu0 0.0
  %1480 = vmatpush1.msra.mxu0 0.0
  %1481 = vmatprep.subr.mxu0 0.0
  %1482 = vmatpush1.msra.mxu0 0.0
  %1483 = vmatprep.subr.mxu0 0.0
  %1484 = vmatpush1.msra.mxu0 0.0
  %1485 = vmatprep.subr.mxu0 0.0
  %1486 = vmatpush1.msra.mxu0 0.0
  %1487 = vmatprep.subr.mxu0 0.0
  %1488 = vmatpush1.msra.mxu0 0.0
  %1489 = vmatprep.subr.mxu0 0.0
  %1490 = vmatpush1.msra.mxu0 0.0
  %1491 = vmatprep.mubr.f32.mxu0 0.0
  %1492 = vmatmul.mubr.f32.gmra.mrb[0].mxu0 %v1404
  %v1493 = vpop.f32.mrb[0].mxu0
  %v1494 = vadd.f32 %v1401, %v1493
  %v1495 = vpop.f32.mrb[0].mxu0
  %1496 = vmatprep.mubr.f32.mxu0 0.0
  %1497 = vmatmul.mubr.f32.gmra.mrb[0].mxu0 %v1407
  %v1498 = vpop.f32.mrb[0].mxu0
  %v1499 = vadd.f32 %v1401, %v1498
  %v1500 = vpop.f32.mrb[0].mxu0
  %1501 = vmatprep.mubr.f32.mxu0 0.0
  %1502 = vmatmul.mubr.f32.gmra.mrb[0].mxu0 %v1410
  %v1503 = vpop.f32.mrb[0].mxu0
  %v1504 = vadd.f32 %v1401, %v1503
  %v1505 = vpop.f32.mrb[0].mxu0
  %1506 = vmatprep.mubr.f32.mxu0 0.0
  %1507 = vmatmul.mubr.f32.gmra.mrb[0].mxu0 %v1413
  %v1508 = vpop.f32.mrb[0].mxu0
  %v1509 = vadd.f32 %v1401, %v1508
  %v1510 = vpop.f32.mrb[0].mxu0
  %1511 = vmatprep.mubr.f32.mxu0 0.0
  %1512 = vmatmul.mubr.f32.gmra.mrb[0].mxu0 %v1416
  %v1513 = vpop.f32.mrb[0].mxu0
  %v1514 = vadd.f32 %v1401, %v1513
  %v1515 = vpop.f32.mrb[0].mxu0
  %1516 = vmatprep.mubr.f32.mxu0 0.0
  %1517 = vmatmul.mubr.f32.gmra.mrb[0].mxu0 %v1419
  %v1518 = vpop.f32.mrb[0].mxu0
  %v1519 = vadd.f32 %v1401, %v1518
  %v1520 = vpop.f32.mrb[0].mxu0
  %1521 = vmatprep.mubr.f32.mxu0 0.0
  %1522 = vmatmul.mubr.f32.gmra.mrb[0].mxu0 %v1422
  %v1523 = vpop.f32.mrb[0].mxu0
  %v1524 = vadd.f32 %v1401, %v1523
  %v1525 = vpop.f32.mrb[0].mxu0
  %1526 = vmatprep.mubr.f32.mxu0 0.0
  %1527 = vmatmul.mubr.f32.gmra.mrb[0].mxu0 %v1425
  %v1528 = vpop.f32.mrb[0].mxu0
  %v1529 = vadd.f32 %v1401, %v1528
  %v1530 = vpop.f32.mrb[0].mxu0
  %1531 = vdwg.mxu0
  %vm1532 = vcmask 48128
  %1533 = vst.msk [vmem:[%s6] sm:$0xff] %vm1532, %v1494
  %1534 = vst.msk [vmem:[%s6 + $0x8] sm:$0xff] %vm1532, %v1499
  %1535 = vst.msk [vmem:[%s6 + $0x10] sm:$0xff] %vm1532, %v1504
  %1536 = vst.msk [vmem:[%s6 + $0x18] sm:$0xff] %vm1532, %v1509
  %1537 = vst.msk [vmem:[%s6 + $0x20] sm:$0xff] %vm1532, %v1514
  %1538 = vst.msk [vmem:[%s6 + $0x28] sm:$0xff] %vm1532, %v1519
  %1539 = vst.msk [vmem:[%s6 + $0x30] sm:$0xff] %vm1532, %v1524
  %1540 = vst.msk [vmem:[%s6 + $0x38] sm:$0xff] %vm1532, %v1529
  // Predicated region
  $region26: #{rnn_forward.3} parent=0 // pred_check
    _
  $region27: #{rnn_forward.3} parent=0 // pred_check_branch
    %1542 = sbr.rel (0) target = $region29
  $region28: #{rnn_forward.3} parent=0 // pred_region
    _
  $region29: #{rnn_forward.3} parent=0 // pred_fallthru
    _
  // Predicated region
  $region30: #{rnn_forward.3} parent=0 // pred_check
    _
  $region31: #{rnn_forward.3} parent=0 // pred_check_branch
    %1544 = sbr.rel (0) target = $region33
  $region32: #{rnn_forward.3} parent=0 // pred_region
    _
  $region33: #{rnn_forward.3} parent=0 // pred_fallthru
    _
  // Predicated region
  $region34: #{rnn_forward.3} parent=0 // pred_check
    _
  $region35: #{rnn_forward.3} parent=0 // pred_check_branch
    %1546 = sbr.rel (0) target = $region37
  $region36: #{rnn_forward.3} parent=0 // pred_region
    _
  $region37: #{rnn_forward.3} parent=0 // pred_fallthru
    _
  // Predicated region
  $region38: #{rnn_forward.3} parent=0 // pred_check
    _
  $region39: #{rnn_forward.3} parent=0 // pred_check_branch
    %1548 = sbr.rel (0) target = $region41
  $region40: #{rnn_forward.3} parent=0 // pred_region
    _
  $region41: #{rnn_forward.3} parent=0 // pred_fallthru
    _
  // Predicated region
  $region42: #{rnn_forward.3} parent=0 // pred_check
    _
  $region43: #{rnn_forward.3} parent=0 // pred_check_branch
    %1550 = sbr.rel (0) target = $region45
  $region44: #{rnn_forward.3} parent=0 // pred_region
    _
  $region45: #{rnn_forward.3} parent=0 // pred_fallthru
    _
  // Predicated region
  $region46: #{rnn_forward.3} parent=0 // pred_check
    _
  $region47: #{rnn_forward.3} parent=0 // pred_check_branch
    %1552 = sbr.rel (0) target = $region49
  $region48: #{rnn_forward.3} parent=0 // pred_region
    _
  $region49: #{rnn_forward.3} parent=0 // pred_fallthru
    _

// kernel: rnn_forward.2
$region0: #{rnn_forward.2}
  #allocation0 [shape = 'u32[]', space=smem, size = 0x4, offset = 0x4, fixed_abs, tag = 'smem constant byte address 0x4 - core index']
  #allocation1 [shape = 'u32[144,128]{1,0:T(1,128)}', space=vmem, size = 0x12000, scoped, tag = 'internal scratch']
  #allocation2 [shape = 'f32[64,256]{1,0:T(8,128)}', space=vmem, size = 0x10000, scoped, tag = 'scratch operand']
  %s0 = inlined_call_operand.vmem [shape: f32[64,12], index: 0, kind: input, shape index: {}]
  %s1 = inlined_call_operand.vmem [shape: f32[12,32], index: 1, kind: input, shape index: {}]
  %s2 = inlined_call_operand.vmem [shape: f32[1,32], index: 2, kind: input, shape index: {}]
  %s3 = inlined_call_operand.vmem [shape: f32[32,256], index: 3, kind: input, shape index: {}]
  %s4 = inlined_call_operand.hbm [shape: f32[64,256], index: 4, kind: input, shape index: {}]
  %s5 = inlined_call_operand.vmem [shape: f32[1,256], index: 5, kind: input, shape index: {}]
  %s6 = inlined_call_operand.vmem [shape: f32[64,64], index: 6, kind: output, shape index: {0}]
  %s7 = inlined_call_operand.vmem [shape: f32[2,2,32], index: 7, kind: output, shape index: {1}]
  %s8 = inlined_call_operand.vmem [shape: f32[2,2,32], index: 8, kind: output, shape index: {2}]
  %9 = xla_tuple %s6, %s7, %s8
  %s10 = sld [smem:[#allocation0]]
  $region54: #{rnn_forward.2} parent=0
    _
  %s12 = ssub.s32 1, %s10
  %s13 = scalar_select 0, %s12, %s10
  $region1: #{rnn_forward.2} parent=0
    #allocation3 [shape = 'u8[65536]{0}', space=vmem, size = 0x10000, scoped, tag = 'input window, operand 4, single buffered']
    #allocation4 [shape = 's32[1]{0}', space=sflag, size = 0x4, scoped, tag = 'scoped memory for rnn_forward.2']
    %14 = vsyncpa [#allocation4], 0
    // Predicated region
    $region2: #{rnn_forward.2} parent=1 // pred_check
      _
    $region3: #{rnn_forward.2} parent=1 // pred_check_branch
      %16 = sbr.rel (0) target = $region5
    $region4: #{rnn_forward.2} parent=1 // pred_region
      _
    $region5: #{rnn_forward.2} parent=1 // pred_fallthru
      _
    // Predicated region
    $region6: #{rnn_forward.2} parent=1 // pred_check
      _
    $region7: #{rnn_forward.2} parent=1 // pred_check_branch
      %18 = sbr.rel (0) target = $region9
    $region8: #{rnn_forward.2} parent=1 // pred_region
      _
    $region9: #{rnn_forward.2} parent=1 // pred_fallthru
      _
    // Predicated region
    $region10: #{rnn_forward.2} parent=1 // pred_check
      _
    $region11: #{rnn_forward.2} parent=1 // pred_check_branch
      %20 = sbr.rel (0) target = $region13
    $region12: #{rnn_forward.2} parent=1 // pred_region
      _
    $region13: #{rnn_forward.2} parent=1 // pred_fallthru
      _
    // Predicated region
    $region14: #{rnn_forward.2} parent=1 // pred_check
      _
    $region15: #{rnn_forward.2} parent=1 // pred_check_branch
      %22 = sbr.rel (0) target = $region17
    $region16: #{rnn_forward.2} parent=1 // pred_region
      _
    $region17: #{rnn_forward.2} parent=1 // pred_fallthru
      _
    // Predicated region
    $region18: #{rnn_forward.2} parent=1 // pred_check
      _
    $region19: #{rnn_forward.2} parent=1 // pred_check_branch
      %24 = sbr.rel (0) target = $region21
    $region20: #{rnn_forward.2} parent=1 // pred_region
      %s26 = ssub.s32 2048, 2048
      %27 = vsyncadd [#allocation4], %s26
      %s28 = sshll.u32 [#allocation3], 4
      %s29 = int_to_ptr.vmem [resolvable:$true] %s28
      %34 = dma.hbm_to_vmem [thread:$0]  %s4, 2048, %s29, [#allocation4], 256, 256, 16
    $region21: #{rnn_forward.2} parent=1 // pred_fallthru
      _
    // Predicated region
    $region22: #{rnn_forward.2} parent=1 // pred_check
      _
    $region23: #{rnn_forward.2} parent=1 // pred_check_branch
      %36 = sbr.rel (0) target = $region25
    $region24: #{rnn_forward.2} parent=1 // pred_region
      _
    $region25: #{rnn_forward.2} parent=1 // pred_fallthru
      _
    // Predicated region
    $region26: #{rnn_forward.2} parent=1 // pred_check
      _
    $region27: #{rnn_forward.2} parent=1 // pred_check_branch
      %38 = sbr.rel (0) target = $region29
    $region28: #{rnn_forward.2} parent=1 // pred_region
      %39 = dma.done [#allocation4], 2048
    $region29: #{rnn_forward.2} parent=1 // pred_fallthru
      _
    %v40 = vld [vmem:[%s0] sm:$0xff]
    %v41 = vld [vmem:[%s0 + $0x8] sm:$0xff]
    %v42 = vld [vmem:[%s0 + $0x10] sm:$0xff]
    %v43 = vld [vmem:[%s0 + $0x18] sm:$0xff]
    %v44 = vld [vmem:[%s0 + $0x20] sm:$0xff]
    %v45 = vld [vmem:[%s0 + $0x28] sm:$0xff]
    %v46 = vld [vmem:[%s0 + $0x30] sm:$0xff]
    %v47 = vld [vmem:[%s0 + $0x38] sm:$0xff]
    %v48 = vld [vmem:[%s1] sm:$0xff]
    %v49 = vld [vmem:[%s1 + $0x8] sm:$0xf]
    %v50 = vld [vmem:[%s2] sm:$0x1]
    %v52 = vlaneseq
    %v53 = vshrl.u32 %v52, 7
    %v54 = vsub.s32 0, %v53
    %v55 = vrot.slane %v50, %v54
    %vm57 = vcmask 97280
    %v59 = vsel %vm57, %v40, 0
    %v62 = vsel %vm57, %v41, 0
    %v65 = vsel %vm57, %v42, 0
    %v68 = vsel %vm57, %v43, 0
    %v71 = vsel %vm57, %v44, 0
    %v74 = vsel %vm57, %v45, 0
    %v77 = vsel %vm57, %v46, 0
    %v80 = vsel %vm57, %v47, 0
    %vm82 = vcmask 1043456
    %v84 = vsel %vm82, %v49, 0
    %86 = vmatprep.subr.mxu0 0.0
    %87 = vmatpush1.msra.mxu0 %v48
    %88 = vmatprep.subr.mxu0 0.0
    %89 = vmatpush1.msra.mxu0 %v84
    %90 = vmatprep.subr.mxu0 0.0
    %91 = vmatpush1.msra.mxu0 0.0
    %92 = vmatprep.subr.mxu0 0.0
    %93 = vmatpush1.msra.mxu0 0.0
    %94 = vmatprep.subr.mxu0 0.0
    %95 = vmatpush1.msra.mxu0 0.0
    %96 = vmatprep.subr.mxu0 0.0
    %97 = vmatpush1.msra.mxu0 0.0
    %98 = vmatprep.subr.mxu0 0.0
    %99 = vmatpush1.msra.mxu0 0.0
    %100 = vmatprep.subr.mxu0 0.0
    %101 = vmatpush1.msra.mxu0 0.0
    %102 = vmatprep.subr.mxu0 0.0
    %103 = vmatpush1.msra.mxu0 0.0
    %104 = vmatprep.subr.mxu0 0.0
    %105 = vmatpush1.msra.mxu0 0.0
    %106 = vmatprep.subr.mxu0 0.0
    %107 = vmatpush1.msra.mxu0 0.0
    %108 = vmatprep.subr.mxu0 0.0
    %109 = vmatpush1.msra.mxu0 0.0
    %110 = vmatprep.subr.mxu0 0.0
    %111 = vmatpush1.msra.mxu0 0.0
    %112 = vmatprep.subr.mxu0 0.0
    %113 = vmatpush1.msra.mxu0 0.0
    %114 = vmatprep.subr.mxu0 0.0
    %115 = vmatpush1.msra.mxu0 0.0
    %116 = vmatprep.subr.mxu0 0.0
    %117 = vmatpush1.msra.mxu0 0.0
    %118 = vmatprep.subr.mxu0 0.0
    %119 = vmatpush1.msra.mxu0 0.0
    %120 = vmatprep.subr.mxu0 0.0
    %121 = vmatpush1.msra.mxu0 0.0
    %122 = vmatprep.subr.mxu0 0.0
    %123 = vmatpush1.msra.mxu0 0.0
    %124 = vmatprep.subr.mxu0 0.0
    %125 = vmatpush1.msra.mxu0 0.0
    %126 = vmatprep.subr.mxu0 0.0
    %127 = vmatpush1.msra.mxu0 0.0
    %128 = vmatprep.subr.mxu0 0.0
    %129 = vmatpush1.msra.mxu0 0.0
    %130 = vmatprep.subr.mxu0 0.0
    %131 = vmatpush1.msra.mxu0 0.0
    %132 = vmatprep.subr.mxu0 0.0
    %133 = vmatpush1.msra.mxu0 0.0
    %134 = vmatprep.subr.mxu0 0.0
    %135 = vmatpush1.msra.mxu0 0.0
    %136 = vmatprep.subr.mxu0 0.0
    %137 = vmatpush1.msra.mxu0 0.0
    %138 = vmatprep.subr.mxu0 0.0
    %139 = vmatpush1.msra.mxu0 0.0
    %140 = vmatprep.subr.mxu0 0.0
    %141 = vmatpush1.msra.mxu0 0.0
    %142 = vmatprep.subr.mxu0 0.0
    %143 = vmatpush1.msra.mxu0 0.0
    %144 = vmatprep.subr.mxu0 0.0
    %145 = vmatpush1.msra.mxu0 0.0
    %146 = vmatprep.subr.mxu0 0.0
    %147 = vmatpush1.msra.mxu0 0.0
    %148 = vmatprep.subr.mxu0 0.0
    %149 = vmatpush1.msra.mxu0 0.0
    %150 = vmatprep.mubr.f32.mxu0 0.0
    %151 = vmatmul.mubr.f32.gmra.mrb[0].mxu0 %v59
    %v152 = vpop.f32.mrb[0].mxu0
    %v153 = vadd.f32 %v55, %v152
    %v154 = vpop.f32.mrb[0].mxu0
    %155 = vmatprep.mubr.f32.mxu0 0.0
    %156 = vmatmul.mubr.f32.gmra.mrb[0].mxu0 %v62
    %v157 = vpop.f32.mrb[0].mxu0
    %v158 = vadd.f32 %v55, %v157
    %v159 = vpop.f32.mrb[0].mxu0
    %160 = vmatprep.mubr.f32.mxu0 0.0
    %161 = vmatmul.mubr.f32.gmra.mrb[0].mxu0 %v65
    %v162 = vpop.f32.mrb[0].mxu0
    %v163 = vadd.f32 %v55, %v162
    %v164 = vpop.f32.mrb[0].mxu0
    %165 = vmatprep.mubr.f32.mxu0 0.0
    %166 = vmatmul.mubr.f32.gmra.mrb[0].mxu0 %v68
    %v167 = vpop.f32.mrb[0].mxu0
    %v168 = vadd.f32 %v55, %v167
    %v169 = vpop.f32.mrb[0].mxu0
    %170 = vmatprep.mubr.f32.mxu0 0.0
    %171 = vmatmul.mubr.f32.gmra.mrb[0].mxu0 %v71
    %v172 = vpop.f32.mrb[0].mxu0
    %v173 = vadd.f32 %v55, %v172
    %v174 = vpop.f32.mrb[0].mxu0
    %175 = vmatprep.mubr.f32.mxu0 0.0
    %176 = vmatmul.mubr.f32.gmra.mrb[0].mxu0 %v74
    %v177 = vpop.f32.mrb[0].mxu0
    %v178 = vadd.f32 %v55, %v177
    %v179 = vpop.f32.mrb[0].mxu0
    %180 = vmatprep.mubr.f32.mxu0 0.0
    %181 = vmatmul.mubr.f32.gmra.mrb[0].mxu0 %v77
    %v182 = vpop.f32.mrb[0].mxu0
    %v183 = vadd.f32 %v55, %v182
    %v184 = vpop.f32.mrb[0].mxu0
    %185 = vmatprep.mubr.f32.mxu0 0.0
    %186 = vmatmul.mubr.f32.gmra.mrb[0].mxu0 %v80
    %v187 = vpop.f32.mrb[0].mxu0
    %v188 = vadd.f32 %v55, %v187
    %v189 = vpop.f32.mrb[0].mxu0
    %190 = vdwg.mxu0
    %v191 = vmax.f32 %v153, 0.0
    %v192 = vmax.f32 %v158, 0.0
    %v193 = vmax.f32 %v163, 0.0
    %v194 = vmax.f32 %v168, 0.0
    %v195 = vmax.f32 %v173, 0.0
    %v196 = vmax.f32 %v178, 0.0
    %v197 = vmax.f32 %v183, 0.0
    %v198 = vmax.f32 %v188, 0.0
    %v199 = vld [vmem:[%s3] sm:$0xff]
    %v200 = vld [vmem:[%s3 + $0x8] sm:$0xff]
    %v201 = vld [vmem:[%s3 + $0x10] sm:$0xff]
    %v202 = vld [vmem:[%s3 + $0x18] sm:$0xff]
    %v203 = vld [vmem:[%s3 + $0x20] sm:$0xff]
    %v204 = vld [vmem:[%s3 + $0x28] sm:$0xff]
    %v205 = vld [vmem:[%s3 + $0x30] sm:$0xff]
    %v206 = vld [vmem:[%s3 + $0x38] sm:$0xff]
    %v207 = vld [vmem:[%s5] sm:$0x3]
    %v209 = vlaneseq
    %v210 = vshrl.u32 %v209, 7
    %v211 = vsub.s32 0, %v210
    %v212 = vrot.slane %v207, %v211
    %v213 = vlaneseq
    %v214 = vshrl.u32 %v213, 7
    %v215 = vsub.s32 1, %v214
    %v216 = vrot.slane %v207, %v215
    %vm219 = vcmask 261120
    %v221 = vsel %vm219, %v191, 0
    %v224 = vsel %vm219, %v192, 0
    %v227 = vsel %vm219, %v193, 0
    %v230 = vsel %vm219, %v194, 0
    %v233 = vsel %vm219, %v195, 0
    %v236 = vsel %vm219, %v196, 0
    %v239 = vsel %vm219, %v197, 0
    %v242 = vsel %vm219, %v198, 0
    %244 = vmatprep.subr.mxu0 %v200
    %245 = vmatpush1.msra.mxu0 %v199
    %246 = vmatprep.subr.mxu0 %v202
    %247 = vmatpush1.msra.mxu0 %v201
    %248 = vmatprep.subr.mxu0 %v204
    %249 = vmatpush1.msra.mxu0 %v203
    %250 = vmatprep.subr.mxu0 %v206
    %251 = vmatpush1.msra.mxu0 %v205
    %252 = vmatprep.subr.mxu0 0.0
    %253 = vmatpush1.msra.mxu0 0.0
    %254 = vmatprep.subr.mxu0 0.0
    %255 = vmatpush1.msra.mxu0 0.0
    %256 = vmatprep.subr.mxu0 0.0
    %257 = vmatpush1.msra.mxu0 0.0
    %258 = vmatprep.subr.mxu0 0.0
    %259 = vmatpush1.msra.mxu0 0.0
    %260 = vmatprep.subr.mxu0 0.0
    %261 = vmatpush1.msra.mxu0 0.0
    %262 = vmatprep.subr.mxu0 0.0
    %263 = vmatpush1.msra.mxu0 0.0
    %264 = vmatprep.subr.mxu0 0.0
    %265 = vmatpush1.msra.mxu0 0.0
    %266 = vmatprep.subr.mxu0 0.0
    %267 = vmatpush1.msra.mxu0 0.0
    %268 = vmatprep.subr.mxu0 0.0
    %269 = vmatpush1.msra.mxu0 0.0
    %270 = vmatprep.subr.mxu0 0.0
    %271 = vmatpush1.msra.mxu0 0.0
    %272 = vmatprep.subr.mxu0 0.0
    %273 = vmatpush1.msra.mxu0 0.0
    %274 = vmatprep.subr.mxu0 0.0
    %275 = vmatpush1.msra.mxu0 0.0
    %276 = vmatprep.subr.mxu0 0.0
    %277 = vmatpush1.msra.mxu0 0.0
    %278 = vmatprep.subr.mxu0 0.0
    %279 = vmatpush1.msra.mxu0 0.0
    %280 = vmatprep.subr.mxu0 0.0
    %281 = vmatpush1.msra.mxu0 0.0
    %282 = vmatprep.subr.mxu0 0.0
    %283 = vmatpush1.msra.mxu0 0.0
    %284 = vmatprep.subr.mxu0 0.0
    %285 = vmatpush1.msra.mxu0 0.0
    %286 = vmatprep.subr.mxu0 0.0
    %287 = vmatpush1.msra.mxu0 0.0
    %288 = vmatprep.subr.mxu0 0.0
    %289 = vmatpush1.msra.mxu0 0.0
    %290 = vmatprep.subr.mxu0 0.0
    %291 = vmatpush1.msra.mxu0 0.0
    %292 = vmatprep.subr.mxu0 0.0
    %293 = vmatpush1.msra.mxu0 0.0
    %294 = vmatprep.subr.mxu0 0.0
    %295 = vmatpush1.msra.mxu0 0.0
    %296 = vmatprep.subr.mxu0 0.0
    %297 = vmatpush1.msra.mxu0 0.0
    %298 = vmatprep.subr.mxu0 0.0
    %299 = vmatpush1.msra.mxu0 0.0
    %300 = vmatprep.subr.mxu0 0.0
    %301 = vmatpush1.msra.mxu0 0.0
    %302 = vmatprep.subr.mxu0 0.0
    %303 = vmatpush1.msra.mxu0 0.0
    %304 = vmatprep.subr.mxu0 0.0
    %305 = vmatpush1.msra.mxu0 0.0
    %306 = vmatprep.subr.mxu0 0.0
    %307 = vmatpush1.msra.mxu0 0.0
    %308 = vmatprep.mubr.f32.mxu0 0.0
    %309 = vmatmul.mubr.f32.gmra.mrb[0].mxu0 %v221
    %v310 = vpop.f32.mrb[0].mxu0
    %v311 = vadd.f32 %v212, %v310
    %v312 = vpop.f32.mrb[0].mxu0
    %v313 = vadd.f32 %v216, %v312
    %314 = vmatprep.mubr.f32.mxu0 0.0
    %315 = vmatmul.mubr.f32.gmra.mrb[0].mxu0 %v224
    %v316 = vpop.f32.mrb[0].mxu0
    %v317 = vadd.f32 %v212, %v316
    %v318 = vpop.f32.mrb[0].mxu0
    %v319 = vadd.f32 %v216, %v318
    %320 = vmatprep.mubr.f32.mxu0 0.0
    %321 = vmatmul.mubr.f32.gmra.mrb[0].mxu0 %v227
    %v322 = vpop.f32.mrb[0].mxu0
    %v323 = vadd.f32 %v212, %v322
    %v324 = vpop.f32.mrb[0].mxu0
    %v325 = vadd.f32 %v216, %v324
    %326 = vmatprep.mubr.f32.mxu0 0.0
    %327 = vmatmul.mubr.f32.gmra.mrb[0].mxu0 %v230
    %v328 = vpop.f32.mrb[0].mxu0
    %v329 = vadd.f32 %v212, %v328
    %v330 = vpop.f32.mrb[0].mxu0
    %v331 = vadd.f32 %v216, %v330
    %332 = vmatprep.mubr.f32.mxu0 0.0
    %333 = vmatmul.mubr.f32.gmra.mrb[0].mxu0 %v233
    %v334 = vpop.f32.mrb[0].mxu0
    %v335 = vadd.f32 %v212, %v334
    %v336 = vpop.f32.mrb[0].mxu0
    %v337 = vadd.f32 %v216, %v336
    %338 = vmatprep.mubr.f32.mxu0 0.0
    %339 = vmatmul.mubr.f32.gmra.mrb[0].mxu0 %v236
    %v340 = vpop.f32.mrb[0].mxu0
    %v341 = vadd.f32 %v212, %v340
    %v342 = vpop.f32.mrb[0].mxu0
    %v343 = vadd.f32 %v216, %v342
    %344 = vmatprep.mubr.f32.mxu0 0.0
    %345 = vmatmul.mubr.f32.gmra.mrb[0].mxu0 %v239
    %v346 = vpop.f32.mrb[0].mxu0
    %v347 = vadd.f32 %v212, %v346
    %v348 = vpop.f32.mrb[0].mxu0
    %v349 = vadd.f32 %v216, %v348
    %350 = vmatprep.mubr.f32.mxu0 0.0
    %351 = vmatmul.mubr.f32.gmra.mrb[0].mxu0 %v242
    %v352 = vpop.f32.mrb[0].mxu0
    %v353 = vadd.f32 %v212, %v352
    %v354 = vpop.f32.mrb[0].mxu0
    %v355 = vadd.f32 %v216, %v354
    %356 = vdwg.mxu0
    %357 = vst [vmem:[#allocation2] sm:$0xff] %v311
    %358 = vst [vmem:[#allocation2 + $0x8] sm:$0xff] %v313
    %359 = vst [vmem:[#allocation2 + $0x10] sm:$0xff] %v317
    %360 = vst [vmem:[#allocation2 + $0x18] sm:$0xff] %v319
    %361 = vst [vmem:[#allocation2 + $0x20] sm:$0xff] %v323
    %362 = vst [vmem:[#allocation2 + $0x28] sm:$0xff] %v325
    %363 = vst [vmem:[#allocation2 + $0x30] sm:$0xff] %v329
    %364 = vst [vmem:[#allocation2 + $0x38] sm:$0xff] %v331
    %365 = vst [vmem:[#allocation2 + $0x40] sm:$0xff] %v335
    %366 = vst [vmem:[#allocation2 + $0x48] sm:$0xff] %v337
    %367 = vst [vmem:[#allocation2 + $0x50] sm:$0xff] %v341
    %368 = vst [vmem:[#allocation2 + $0x58] sm:$0xff] %v343
    %369 = vst [vmem:[#allocation2 + $0x60] sm:$0xff] %v347
    %370 = vst [vmem:[#allocation2 + $0x68] sm:$0xff] %v349
    %371 = vst [vmem:[#allocation2 + $0x70] sm:$0xff] %v353
    %372 = vst [vmem:[#allocation2 + $0x78] sm:$0xff] %v355
    %v373 = vld [vmem:[#allocation3] sm:$0xff]
    %v374 = vld [vmem:[#allocation3 + $0x8] sm:$0xff]
    %v375 = vld [vmem:[#allocation3 + $0x10] sm:$0xff]
    %v376 = vld [vmem:[#allocation3 + $0x18] sm:$0xff]
    %v377 = vld [vmem:[#allocation3 + $0x20] sm:$0xff]
    %v378 = vld [vmem:[#allocation3 + $0x28] sm:$0xff]
    %v379 = vld [vmem:[#allocation3 + $0x30] sm:$0xff]
    %v380 = vld [vmem:[#allocation3 + $0x38] sm:$0xff]
    %v381 = vld [vmem:[#allocation3 + $0x40] sm:$0xff]
    %v382 = vld [vmem:[#allocation3 + $0x48] sm:$0xff]
    %v383 = vld [vmem:[#allocation3 + $0x50] sm:$0xff]
    %v384 = vld [vmem:[#allocation3 + $0x58] sm:$0xff]
    %v385 = vld [vmem:[#allocation3 + $0x60] sm:$0xff]
    %v386 = vld [vmem:[#allocation3 + $0x68] sm:$0xff]
    %v387 = vld [vmem:[#allocation3 + $0x70] sm:$0xff]
    %v388 = vld [vmem:[#allocation3 + $0x78] sm:$0xff]
    %vm389 = vcmask 523264
    %v391 = vsel %vm389, 0.0, 0
    %393 = vmatprep.subr.mxu0 %v374
    %394 = vmatpush1.msra.mxu0 %v373
    %395 = vmatprep.subr.mxu0 %v376
    %396 = vmatpush1.msra.mxu0 %v375
    %397 = vmatprep.subr.mxu0 %v378
    %398 = vmatpush1.msra.mxu0 %v377
    %399 = vmatprep.subr.mxu0 %v380
    %400 = vmatpush1.msra.mxu0 %v379
    %401 = vmatprep.subr.mxu0 %v382
    %402 = vmatpush1.msra.mxu0 %v381
    %403 = vmatprep.subr.mxu0 %v384
    %404 = vmatpush1.msra.mxu0 %v383
    %405 = vmatprep.subr.mxu0 %v386
    %406 = vmatpush1.msra.mxu0 %v385
    %407 = vmatprep.subr.mxu0 %v388
    %408 = vmatpush1.msra.mxu0 %v387
    %409 = vmatprep.subr.mxu0 0.0
    %410 = vmatpush1.msra.mxu0 0.0
    %411 = vmatprep.subr.mxu0 0.0
    %412 = vmatpush1.msra.mxu0 0.0
    %413 = vmatprep.subr.mxu0 0.0
    %414 = vmatpush1.msra.mxu0 0.0
    %415 = vmatprep.subr.mxu0 0.0
    %416 = vmatpush1.msra.mxu0 0.0
    %417 = vmatprep.subr.mxu0 0.0
    %418 = vmatpush1.msra.mxu0 0.0
    %419 = vmatprep.subr.mxu0 0.0
    %420 = vmatpush1.msra.mxu0 0.0
    %421 = vmatprep.subr.mxu0 0.0
    %422 = vmatpush1.msra.mxu0 0.0
    %423 = vmatprep.subr.mxu0 0.0
    %424 = vmatpush1.msra.mxu0 0.0
    %425 = vmatprep.subr.mxu0 0.0
    %426 = vmatpush1.msra.mxu0 0.0
    %427 = vmatprep.subr.mxu0 0.0
    %428 = vmatpush1.msra.mxu0 0.0
    %429 = vmatprep.subr.mxu0 0.0
    %430 = vmatpush1.msra.mxu0 0.0
    %431 = vmatprep.subr.mxu0 0.0
    %432 = vmatpush1.msra.mxu0 0.0
    %433 = vmatprep.subr.mxu0 0.0
    %434 = vmatpush1.msra.mxu0 0.0
    %435 = vmatprep.subr.mxu0 0.0
    %436 = vmatpush1.msra.mxu0 0.0
    %437 = vmatprep.subr.mxu0 0.0
    %438 = vmatpush1.msra.mxu0 0.0
    %439 = vmatprep.subr.mxu0 0.0
    %440 = vmatpush1.msra.mxu0 0.0
    %441 = vmatprep.subr.mxu0 0.0
    %442 = vmatpush1.msra.mxu0 0.0
    %443 = vmatprep.subr.mxu0 0.0
    %444 = vmatpush1.msra.mxu0 0.0
    %445 = vmatprep.subr.mxu0 0.0
    %446 = vmatpush1.msra.mxu0 0.0
    %447 = vmatprep.subr.mxu0 0.0
    %448 = vmatpush1.msra.mxu0 0.0
    %449 = vmatprep.subr.mxu0 0.0
    %450 = vmatpush1.msra.mxu0 0.0
    %451 = vmatprep.subr.mxu0 0.0
    %452 = vmatpush1.msra.mxu0 0.0
    %453 = vmatprep.subr.mxu0 0.0
    %454 = vmatpush1.msra.mxu0 0.0
    %455 = vmatprep.subr.mxu0 0.0
    %456 = vmatpush1.msra.mxu0 0.0
    %457 = vmatprep.mubr.f32.mxu0 0.0
    %458 = vmatmul.mubr.f32.gmra.mrb[0].mxu0 %v391
    %v459 = vpop.f32.mrb[0].mxu0
    %v460 = vadd.f32 0.0, %v459
    %v461 = vpop.f32.mrb[0].mxu0
    %v462 = vadd.f32 0.0, %v461
    %463 = vdwg.mxu0
    %s464 = smul.u32 0, 2
    %s465 = smul.addr %s464, 8
    %s466 = scalar_lea.vmem [#allocation2], %s465
    %v467 = vld [vmem:[%s466] sm:$0xff]
    %v468 = vadd.f32 %v467, %v460
    %v469 = vxor.u32 %v468, 2147483648
    %v470 = vmul.f32 %v469, 1.442695
    %v471 = vpow.pop %v470
    %v472 = vadd.f32 %v471, 1.0
    %v473 = vrcp.pop %v472
    %v474 = vmul.f32 1.0, %v473
    %v475 = vtanh.pop %v468
    %v476 = vmul.f32 %v474, 0.0
    %478 = vrot.lane.b32.xlu0 %v475, 32
    %v479 = vpop.permute.xlu0 %478
    %v481 = vmul.f32 %v474, %v479
    %483 = vrot.lane.b32.xlu0 %v481, 32
    %v484 = vpop.permute.xlu0 %483
    %v486 = vadd.f32 %v476, %v484
    %v487 = vtanh.pop %v486
    %489 = vrot.lane.b32.xlu0 %v487, 32
    %v490 = vpop.permute.xlu0 %489
    %v492 = vmul.f32 %v474, %v490
    %s493 = smul.u32 7, 2
    %s494 = smul.addr %s493, 8
    %s495 = scalar_lea.vmem [#allocation2], %s494
    %v496 = vld [vmem:[%s495 + $0x8] sm:$0xff]
    %v497 = vadd.f32 %v496, %v462
    %v498 = vxor.u32 %v497, 2147483648
    %v499 = vmul.f32 %v498, 1.442695
    %v500 = vpow.pop %v499
    %v501 = vadd.f32 %v500, 1.0
    %v502 = vrcp.pop %v501
    %v503 = vmul.f32 1.0, %v502
    %v504 = vtanh.pop %v497
    %v505 = vmul.f32 %v503, 0.0
    %507 = vrot.lane.b32.xlu0 %v504, 32
    %v508 = vpop.permute.xlu0 %507
    %v510 = vmul.f32 %v503, %v508
    %512 = vrot.lane.b32.xlu0 %v510, 32
    %v513 = vpop.permute.xlu0 %512
    %v515 = vadd.f32 %v505, %v513
    %v516 = vtanh.pop %v515
    %518 = vrot.lane.b32.xlu0 %v516, 32
    %v519 = vpop.permute.xlu0 %518
    %v521 = vmul.f32 %v503, %v519
    %523 = vrot.lane.b32.xlu0 %v492, 64
    %v524 = vpop.permute.xlu0 %523
    %526 = vst.msk [vmem:[%s6] sm:$0xff] %vm219, %v524
    %528 = vrot.lane.b32.xlu0 %v521, 96
    %v529 = vpop.permute.xlu0 %528
    %s531 = scalar_lea.vmem %s6, 56
    %vm532 = vcmask 523520
    %533 = vst.msk [vmem:[%s531] sm:$0xff] %vm532, %v529
    %v534 = vsel %vm219, %v524, %v529
    %v536 = vsel %vm389, %v534, 0
    %538 = vmatprep.subr.mxu0 %v374
    %539 = vmatpush1.msra.mxu0 %v373
    %540 = vmatprep.subr.mxu0 %v376
    %541 = vmatpush1.msra.mxu0 %v375
    %542 = vmatprep.subr.mxu0 %v378
    %543 = vmatpush1.msra.mxu0 %v377
    %544 = vmatprep.subr.mxu0 %v380
    %545 = vmatpush1.msra.mxu0 %v379
    %546 = vmatprep.subr.mxu0 %v382
    %547 = vmatpush1.msra.mxu0 %v381
    %548 = vmatprep.subr.mxu0 %v384
    %549 = vmatpush1.msra.mxu0 %v383
    %550 = vmatprep.subr.mxu0 %v386
    %551 = vmatpush1.msra.mxu0 %v385
    %552 = vmatprep.subr.mxu0 %v388
    %553 = vmatpush1.msra.mxu0 %v387
    %554 = vmatprep.subr.mxu0 0.0
    %555 = vmatpush1.msra.mxu0 0.0
    %556 = vmatprep.subr.mxu0 0.0
    %557 = vmatpush1.msra.mxu0 0.0
    %558 = vmatprep.subr.mxu0 0.0
    %559 = vmatpush1.msra.mxu0 0.0
    %560 = vmatprep.subr.mxu0 0.0
    %561 = vmatpush1.msra.mxu0 0.0
    %562 = vmatprep.subr.mxu0 0.0
    %563 = vmatpush1.msra.mxu0 0.0
    %564 = vmatprep.subr.mxu0 0.0
    %565 = vmatpush1.msra.mxu0 0.0
    %566 = vmatprep.subr.mxu0 0.0
    %567 = vmatpush1.msra.mxu0 0.0
    %568 = vmatprep.subr.mxu0 0.0
    %569 = vmatpush1.msra.mxu0 0.0
    %570 = vmatprep.subr.mxu0 0.0
    %571 = vmatpush1.msra.mxu0 0.0
    %572 = vmatprep.subr.mxu0 0.0
    %573 = vmatpush1.msra.mxu0 0.0
    %574 = vmatprep.subr.mxu0 0.0
    %575 = vmatpush1.msra.mxu0 0.0
    %576 = vmatprep.subr.mxu0 0.0
    %577 = vmatpush1.msra.mxu0 0.0
    %578 = vmatprep.subr.mxu0 0.0
    %579 = vmatpush1.msra.mxu0 0.0
    %580 = vmatprep.subr.mxu0 0.0
    %581 = vmatpush1.msra.mxu0 0.0
    %582 = vmatprep.subr.mxu0 0.0
    %583 = vmatpush1.msra.mxu0 0.0
    %584 = vmatprep.subr.mxu0 0.0
    %585 = vmatpush1.msra.mxu0 0.0
    %586 = vmatprep.subr.mxu0 0.0
    %587 = vmatpush1.msra.mxu0 0.0
    %588 = vmatprep.subr.mxu0 0.0
    %589 = vmatpush1.msra.mxu0 0.0
    %590 = vmatprep.subr.mxu0 0.0
    %591 = vmatpush1.msra.mxu0 0.0
    %592 = vmatprep.subr.mxu0 0.0
    %593 = vmatpush1.msra.mxu0 0.0
    %594 = vmatprep.subr.mxu0 0.0
    %595 = vmatpush1.msra.mxu0 0.0
    %596 = vmatprep.subr.mxu0 0.0
    %597 = vmatpush1.msra.mxu0 0.0
    %598 = vmatprep.subr.mxu0 0.0
    %599 = vmatpush1.msra.mxu0 0.0
    %600 = vmatprep.subr.mxu0 0.0
    %601 = vmatpush1.msra.mxu0 0.0
    %602 = vmatprep.mubr.f32.mxu0 0.0
    %603 = vmatmul.mubr.f32.gmra.mrb[0].mxu0 %v536
    %v604 = vpop.f32.mrb[0].mxu0
    %v605 = vadd.f32 0.0, %v604
    %v606 = vpop.f32.mrb[0].mxu0
    %v607 = vadd.f32 0.0, %v606
    %608 = vdwg.mxu0
    %s609 = smul.u32 1, 2
    %s610 = smul.addr %s609, 8
    %s611 = scalar_lea.vmem [#allocation2], %s610
    %v612 = vld [vmem:[%s611] sm:$0xff]
    %v613 = vadd.f32 %v612, %v605
    %v614 = vxor.u32 %v613, 2147483648
    %v615 = vmul.f32 %v614, 1.442695
    %v616 = vpow.pop %v615
    %v617 = vadd.f32 %v616, 1.0
    %v618 = vrcp.pop %v617
    %v619 = vmul.f32 1.0, %v618
    %v620 = vtanh.pop %v613
    %v621 = vmul.f32 %v619, %v486
    %623 = vrot.lane.b32.xlu0 %v620, 32
    %v624 = vpop.permute.xlu0 %623
    %v626 = vmul.f32 %v619, %v624
    %628 = vrot.lane.b32.xlu0 %v626, 32
    %v629 = vpop.permute.xlu0 %628
    %v631 = vadd.f32 %v621, %v629
    %v632 = vtanh.pop %v631
    %634 = vrot.lane.b32.xlu0 %v632, 32
    %v635 = vpop.permute.xlu0 %634
    %v637 = vmul.f32 %v619, %v635
    %s638 = smul.u32 6, 2
    %s639 = smul.addr %s638, 8
    %s640 = scalar_lea.vmem [#allocation2], %s639
    %v641 = vld [vmem:[%s640 + $0x8] sm:$0xff]
    %v642 = vadd.f32 %v641, %v607
    %v643 = vxor.u32 %v642, 2147483648
    %v644 = vmul.f32 %v643, 1.442695
    %v645 = vpow.pop %v644
    %v646 = vadd.f32 %v645, 1.0
    %v647 = vrcp.pop %v646
    %v648 = vmul.f32 1.0, %v647
    %v649 = vtanh.pop %v642
    %v650 = vmul.f32 %v648, %v515
    %652 = vrot.lane.b32.xlu0 %v649, 32
    %v653 = vpop.permute.xlu0 %652
    %v655 = vmul.f32 %v648, %v653
    %657 = vrot.lane.b32.xlu0 %v655, 32
    %v658 = vpop.permute.xlu0 %657
    %v660 = vadd.f32 %v650, %v658
    %v661 = vtanh.pop %v660
    %663 = vrot.lane.b32.xlu0 %v661, 32
    %v664 = vpop.permute.xlu0 %663
    %v666 = vmul.f32 %v648, %v664
    %668 = vrot.lane.b32.xlu0 %v637, 64
    %v669 = vpop.permute.xlu0 %668
    %s671 = scalar_lea.vmem %s6, 8
    %672 = vst.msk [vmem:[%s671] sm:$0xff] %vm219, %v669
    %674 = vrot.lane.b32.xlu0 %v666, 96
    %v675 = vpop.permute.xlu0 %674
    %s677 = scalar_lea.vmem %s6, 48
    %678 = vst.msk [vmem:[%s677] sm:$0xff] %vm532, %v675
    %v679 = vsel %vm219, %v669, %v675
    %v681 = vsel %vm389, %v679, 0
    %683 = vmatprep.subr.mxu0 %v374
    %684 = vmatpush1.msra.mxu0 %v373
    %685 = vmatprep.subr.mxu0 %v376
    %686 = vmatpush1.msra.mxu0 %v375
    %687 = vmatprep.subr.mxu0 %v378
    %688 = vmatpush1.msra.mxu0 %v377
    %689 = vmatprep.subr.mxu0 %v380
    %690 = vmatpush1.msra.mxu0 %v379
    %691 = vmatprep.subr.mxu0 %v382
    %692 = vmatpush1.msra.mxu0 %v381
    %693 = vmatprep.subr.mxu0 %v384
    %694 = vmatpush1.msra.mxu0 %v383
    %695 = vmatprep.subr.mxu0 %v386
    %696 = vmatpush1.msra.mxu0 %v385
    %697 = vmatprep.subr.mxu0 %v388
    %698 = vmatpush1.msra.mxu0 %v387
    %699 = vmatprep.subr.mxu0 0.0
    %700 = vmatpush1.msra.mxu0 0.0
    %701 = vmatprep.subr.mxu0 0.0
    %702 = vmatpush1.msra.mxu0 0.0
    %703 = vmatprep.subr.mxu0 0.0
    %704 = vmatpush1.msra.mxu0 0.0
    %705 = vmatprep.subr.mxu0 0.0
    %706 = vmatpush1.msra.mxu0 0.0
    %707 = vmatprep.subr.mxu0 0.0
    %708 = vmatpush1.msra.mxu0 0.0
    %709 = vmatprep.subr.mxu0 0.0
    %710 = vmatpush1.msra.mxu0 0.0
    %711 = vmatprep.subr.mxu0 0.0
    %712 = vmatpush1.msra.mxu0 0.0
    %713 = vmatprep.subr.mxu0 0.0
    %714 = vmatpush1.msra.mxu0 0.0
    %715 = vmatprep.subr.mxu0 0.0
    %716 = vmatpush1.msra.mxu0 0.0
    %717 = vmatprep.subr.mxu0 0.0
    %718 = vmatpush1.msra.mxu0 0.0
    %719 = vmatprep.subr.mxu0 0.0
    %720 = vmatpush1.msra.mxu0 0.0
    %721 = vmatprep.subr.mxu0 0.0
    %722 = vmatpush1.msra.mxu0 0.0
    %723 = vmatprep.subr.mxu0 0.0
    %724 = vmatpush1.msra.mxu0 0.0
    %725 = vmatprep.subr.mxu0 0.0
    %726 = vmatpush1.msra.mxu0 0.0
    %727 = vmatprep.subr.mxu0 0.0
    %728 = vmatpush1.msra.mxu0 0.0
    %729 = vmatprep.subr.mxu0 0.0
    %730 = vmatpush1.msra.mxu0 0.0
    %731 = vmatprep.subr.mxu0 0.0
    %732 = vmatpush1.msra.mxu0 0.0
    %733 = vmatprep.subr.mxu0 0.0
    %734 = vmatpush1.msra.mxu0 0.0
    %735 = vmatprep.subr.mxu0 0.0
    %736 = vmatpush1.msra.mxu0 0.0
    %737 = vmatprep.subr.mxu0 0.0
    %738 = vmatpush1.msra.mxu0 0.0
    %739 = vmatprep.subr.mxu0 0.0
    %740 = vmatpush1.msra.mxu0 0.0
    %741 = vmatprep.subr.mxu0 0.0
    %742 = vmatpush1.msra.mxu0 0.0
    %743 = vmatprep.subr.mxu0 0.0
    %744 = vmatpush1.msra.mxu0 0.0
    %745 = vmatprep.subr.mxu0 0.0
    %746 = vmatpush1.msra.mxu0 0.0
    %747 = vmatprep.mubr.f32.mxu0 0.0
    %748 = vmatmul.mubr.f32.gmra.mrb[0].mxu0 %v681
    %v749 = vpop.f32.mrb[0].mxu0
    %v750 = vadd.f32 0.0, %v749
    %v751 = vpop.f32.mrb[0].mxu0
    %v752 = vadd.f32 0.0, %v751
    %753 = vdwg.mxu0
    %s754 = smul.u32 2, 2
    %s755 = smul.addr %s754, 8
    %s756 = scalar_lea.vmem [#allocation2], %s755
    %v757 = vld [vmem:[%s756] sm:$0xff]
    %v758 = vadd.f32 %v757, %v750
    %v759 = vxor.u32 %v758, 2147483648
    %v760 = vmul.f32 %v759, 1.442695
    %v761 = vpow.pop %v760
    %v762 = vadd.f32 %v761, 1.0
    %v763 = vrcp.pop %v762
    %v764 = vmul.f32 1.0, %v763
    %v765 = vtanh.pop %v758
    %v766 = vmul.f32 %v764, %v631
    %768 = vrot.lane.b32.xlu0 %v765, 32
    %v769 = vpop.permute.xlu0 %768
    %v771 = vmul.f32 %v764, %v769
    %773 = vrot.lane.b32.xlu0 %v771, 32
    %v774 = vpop.permute.xlu0 %773
    %v776 = vadd.f32 %v766, %v774
    %v777 = vtanh.pop %v776
    %779 = vrot.lane.b32.xlu0 %v777, 32
    %v780 = vpop.permute.xlu0 %779
    %v782 = vmul.f32 %v764, %v780
    %s783 = smul.u32 5, 2
    %s784 = smul.addr %s783, 8
    %s785 = scalar_lea.vmem [#allocation2], %s784
    %v786 = vld [vmem:[%s785 + $0x8] sm:$0xff]
    %v787 = vadd.f32 %v786, %v752
    %v788 = vxor.u32 %v787, 2147483648
    %v789 = vmul.f32 %v788, 1.442695
    %v790 = vpow.pop %v789
    %v791 = vadd.f32 %v790, 1.0
    %v792 = vrcp.pop %v791
    %v793 = vmul.f32 1.0, %v792
    %v794 = vtanh.pop %v787
    %v795 = vmul.f32 %v793, %v660
    %797 = vrot.lane.b32.xlu0 %v794, 32
    %v798 = vpop.permute.xlu0 %797
    %v800 = vmul.f32 %v793, %v798
    %802 = vrot.lane.b32.xlu0 %v800, 32
    %v803 = vpop.permute.xlu0 %802
    %v805 = vadd.f32 %v795, %v803
    %v806 = vtanh.pop %v805
    %808 = vrot.lane.b32.xlu0 %v806, 32
    %v809 = vpop.permute.xlu0 %808
    %v811 = vmul.f32 %v793, %v809
    %813 = vrot.lane.b32.xlu0 %v782, 64
    %v814 = vpop.permute.xlu0 %813
    %s816 = scalar_lea.vmem %s6, 16
    %817 = vst.msk [vmem:[%s816] sm:$0xff] %vm219, %v814
    %819 = vrot.lane.b32.xlu0 %v811, 96
    %v820 = vpop.permute.xlu0 %819
    %s822 = scalar_lea.vmem %s6, 40
    %823 = vst.msk [vmem:[%s822] sm:$0xff] %vm532, %v820
    %v824 = vsel %vm219, %v814, %v820
    %v826 = vsel %vm389, %v824, 0
    %828 = vmatprep.subr.mxu0 %v374
    %829 = vmatpush1.msra.mxu0 %v373
    %830 = vmatprep.subr.mxu0 %v376
    %831 = vmatpush1.msra.mxu0 %v375
    %832 = vmatprep.subr.mxu0 %v378
    %833 = vmatpush1.msra.mxu0 %v377
    %834 = vmatprep.subr.mxu0 %v380
    %835 = vmatpush1.msra.mxu0 %v379
    %836 = vmatprep.subr.mxu0 %v382
    %837 = vmatpush1.msra.mxu0 %v381
    %838 = vmatprep.subr.mxu0 %v384
    %839 = vmatpush1.msra.mxu0 %v383
    %840 = vmatprep.subr.mxu0 %v386
    %841 = vmatpush1.msra.mxu0 %v385
    %842 = vmatprep.subr.mxu0 %v388
    %843 = vmatpush1.msra.mxu0 %v387
    %844 = vmatprep.subr.mxu0 0.0
    %845 = vmatpush1.msra.mxu0 0.0
    %846 = vmatprep.subr.mxu0 0.0
    %847 = vmatpush1.msra.mxu0 0.0
    %848 = vmatprep.subr.mxu0 0.0
    %849 = vmatpush1.msra.mxu0 0.0
    %850 = vmatprep.subr.mxu0 0.0
    %851 = vmatpush1.msra.mxu0 0.0
    %852 = vmatprep.subr.mxu0 0.0
    %853 = vmatpush1.msra.mxu0 0.0
    %854 = vmatprep.subr.mxu0 0.0
    %855 = vmatpush1.msra.mxu0 0.0
    %856 = vmatprep.subr.mxu0 0.0
    %857 = vmatpush1.msra.mxu0 0.0
    %858 = vmatprep.subr.mxu0 0.0
    %859 = vmatpush1.msra.mxu0 0.0
    %860 = vmatprep.subr.mxu0 0.0
    %861 = vmatpush1.msra.mxu0 0.0
    %862 = vmatprep.subr.mxu0 0.0
    %863 = vmatpush1.msra.mxu0 0.0
    %864 = vmatprep.subr.mxu0 0.0
    %865 = vmatpush1.msra.mxu0 0.0
    %866 = vmatprep.subr.mxu0 0.0
    %867 = vmatpush1.msra.mxu0 0.0
    %868 = vmatprep.subr.mxu0 0.0
    %869 = vmatpush1.msra.mxu0 0.0
    %870 = vmatprep.subr.mxu0 0.0
    %871 = vmatpush1.msra.mxu0 0.0
    %872 = vmatprep.subr.mxu0 0.0
    %873 = vmatpush1.msra.mxu0 0.0
    %874 = vmatprep.subr.mxu0 0.0
    %875 = vmatpush1.msra.mxu0 0.0
    %876 = vmatprep.subr.mxu0 0.0
    %877 = vmatpush1.msra.mxu0 0.0
    %878 = vmatprep.subr.mxu0 0.0
    %879 = vmatpush1.msra.mxu0 0.0
    %880 = vmatprep.subr.mxu0 0.0
    %881 = vmatpush1.msra.mxu0 0.0
    %882 = vmatprep.subr.mxu0 0.0
    %883 = vmatpush1.msra.mxu0 0.0
    %884 = vmatprep.subr.mxu0 0.0
    %885 = vmatpush1.msra.mxu0 0.0
    %886 = vmatprep.subr.mxu0 0.0
    %887 = vmatpush1.msra.mxu0 0.0
    %888 = vmatprep.subr.mxu0 0.0
    %889 = vmatpush1.msra.mxu0 0.0
    %890 = vmatprep.subr.mxu0 0.0
    %891 = vmatpush1.msra.mxu0 0.0
    %892 = vmatprep.mubr.f32.mxu0 0.0
    %893 = vmatmul.mubr.f32.gmra.mrb[0].mxu0 %v826
    %v894 = vpop.f32.mrb[0].mxu0
    %v895 = vadd.f32 0.0, %v894
    %v896 = vpop.f32.mrb[0].mxu0
    %v897 = vadd.f32 0.0, %v896
    %898 = vdwg.mxu0
    %s899 = smul.u32 3, 2
    %s900 = smul.addr %s899, 8
    %s901 = scalar_lea.vmem [#allocation2], %s900
    %v902 = vld [vmem:[%s901] sm:$0xff]
    %v903 = vadd.f32 %v902, %v895
    %v904 = vxor.u32 %v903, 2147483648
    %v905 = vmul.f32 %v904, 1.442695
    %v906 = vpow.pop %v905
    %v907 = vadd.f32 %v906, 1.0
    %v908 = vrcp.pop %v907
    %v909 = vmul.f32 1.0, %v908
    %v910 = vtanh.pop %v903
    %v911 = vmul.f32 %v909, %v776
    %913 = vrot.lane.b32.xlu0 %v910, 32
    %v914 = vpop.permute.xlu0 %913
    %v916 = vmul.f32 %v909, %v914
    %918 = vrot.lane.b32.xlu0 %v916, 32
    %v919 = vpop.permute.xlu0 %918
    %v921 = vadd.f32 %v911, %v919
    %v922 = vtanh.pop %v921
    %924 = vrot.lane.b32.xlu0 %v922, 32
    %v925 = vpop.permute.xlu0 %924
    %v927 = vmul.f32 %v909, %v925
    %s928 = smul.u32 4, 2
    %s929 = smul.addr %s928, 8
    %s930 = scalar_lea.vmem [#allocation2], %s929
    %v931 = vld [vmem:[%s930 + $0x8] sm:$0xff]
    %v932 = vadd.f32 %v931, %v897
    %v933 = vxor.u32 %v932, 2147483648
    %v934 = vmul.f32 %v933, 1.442695
    %v935 = vpow.pop %v934
    %v936 = vadd.f32 %v935, 1.0
    %v937 = vrcp.pop %v936
    %v938 = vmul.f32 1.0, %v937
    %v939 = vtanh.pop %v932
    %v940 = vmul.f32 %v938, %v805
    %942 = vrot.lane.b32.xlu0 %v939, 32
    %v943 = vpop.permute.xlu0 %942
    %v945 = vmul.f32 %v938, %v943
    %947 = vrot.lane.b32.xlu0 %v945, 32
    %v948 = vpop.permute.xlu0 %947
    %v950 = vadd.f32 %v940, %v948
    %v951 = vtanh.pop %v950
    %953 = vrot.lane.b32.xlu0 %v951, 32
    %v954 = vpop.permute.xlu0 %953
    %v956 = vmul.f32 %v938, %v954
    %958 = vrot.lane.b32.xlu0 %v927, 64
    %v959 = vpop.permute.xlu0 %958
    %s961 = scalar_lea.vmem %s6, 24
    %962 = vst.msk [vmem:[%s961] sm:$0xff] %vm219, %v959
    %964 = vrot.lane.b32.xlu0 %v956, 96
    %v965 = vpop.permute.xlu0 %964
    %s967 = scalar_lea.vmem %s6, 32
    %968 = vst.msk [vmem:[%s967] sm:$0xff] %vm532, %v965
    %v969 = vsel %vm219, %v959, %v965
    %v971 = vsel %vm389, %v969, 0
    %973 = vmatprep.subr.mxu0 %v374
    %974 = vmatpush1.msra.mxu0 %v373
    %975 = vmatprep.subr.mxu0 %v376
    %976 = vmatpush1.msra.mxu0 %v375
    %977 = vmatprep.subr.mxu0 %v378
    %978 = vmatpush1.msra.mxu0 %v377
    %979 = vmatprep.subr.mxu0 %v380
    %980 = vmatpush1.msra.mxu0 %v379
    %981 = vmatprep.subr.mxu0 %v382
    %982 = vmatpush1.msra.mxu0 %v381
    %983 = vmatprep.subr.mxu0 %v384
    %984 = vmatpush1.msra.mxu0 %v383
    %985 = vmatprep.subr.mxu0 %v386
    %986 = vmatpush1.msra.mxu0 %v385
    %987 = vmatprep.subr.mxu0 %v388
    %988 = vmatpush1.msra.mxu0 %v387
    %989 = vmatprep.subr.mxu0 0.0
    %990 = vmatpush1.msra.mxu0 0.0
    %991 = vmatprep.subr.mxu0 0.0
    %992 = vmatpush1.msra.mxu0 0.0
    %993 = vmatprep.subr.mxu0 0.0
    %994 = vmatpush1.msra.mxu0 0.0
    %995 = vmatprep.subr.mxu0 0.0
    %996 = vmatpush1.msra.mxu0 0.0
    %997 = vmatprep.subr.mxu0 0.0
    %998 = vmatpush1.msra.mxu0 0.0
    %999 = vmatprep.subr.mxu0 0.0
    %1000 = vmatpush1.msra.mxu0 0.0
    %1001 = vmatprep.subr.mxu0 0.0
    %1002 = vmatpush1.msra.mxu0 0.0
    %1003 = vmatprep.subr.mxu0 0.0
    %1004 = vmatpush1.msra.mxu0 0.0
    %1005 = vmatprep.subr.mxu0 0.0
    %1006 = vmatpush1.msra.mxu0 0.0
    %1007 = vmatprep.subr.mxu0 0.0
    %1008 = vmatpush1.msra.mxu0 0.0
    %1009 = vmatprep.subr.mxu0 0.0
    %1010 = vmatpush1.msra.mxu0 0.0
    %1011 = vmatprep.subr.mxu0 0.0
    %1012 = vmatpush1.msra.mxu0 0.0
    %1013 = vmatprep.subr.mxu0 0.0
    %1014 = vmatpush1.msra.mxu0 0.0
    %1015 = vmatprep.subr.mxu0 0.0
    %1016 = vmatpush1.msra.mxu0 0.0
    %1017 = vmatprep.subr.mxu0 0.0
    %1018 = vmatpush1.msra.mxu0 0.0
    %1019 = vmatprep.subr.mxu0 0.0
    %1020 = vmatpush1.msra.mxu0 0.0
    %1021 = vmatprep.subr.mxu0 0.0
    %1022 = vmatpush1.msra.mxu0 0.0
    %1023 = vmatprep.subr.mxu0 0.0
    %1024 = vmatpush1.msra.mxu0 0.0
    %1025 = vmatprep.subr.mxu0 0.0
    %1026 = vmatpush1.msra.mxu0 0.0
    %1027 = vmatprep.subr.mxu0 0.0
    %1028 = vmatpush1.msra.mxu0 0.0
    %1029 = vmatprep.subr.mxu0 0.0
    %1030 = vmatpush1.msra.mxu0 0.0
    %1031 = vmatprep.subr.mxu0 0.0
    %1032 = vmatpush1.msra.mxu0 0.0
    %1033 = vmatprep.subr.mxu0 0.0
    %1034 = vmatpush1.msra.mxu0 0.0
    %1035 = vmatprep.subr.mxu0 0.0
    %1036 = vmatpush1.msra.mxu0 0.0
    %1037 = vmatprep.mubr.f32.mxu0 0.0
    %1038 = vmatmul.mubr.f32.gmra.mrb[0].mxu0 %v971
    %v1039 = vpop.f32.mrb[0].mxu0
    %v1040 = vadd.f32 0.0, %v1039
    %v1041 = vpop.f32.mrb[0].mxu0
    %v1042 = vadd.f32 0.0, %v1041
    %1043 = vdwg.mxu0
    %v1044 = vld [vmem:[%s930] sm:$0xff]
    %v1045 = vadd.f32 %v1044, %v1040
    %v1046 = vxor.u32 %v1045, 2147483648
    %v1047 = vmul.f32 %v1046, 1.442695
    %v1048 = vpow.pop %v1047
    %v1049 = vadd.f32 %v1048, 1.0
    %v1050 = vrcp.pop %v1049
    %v1051 = vmul.f32 1.0, %v1050
    %v1052 = vtanh.pop %v1045
    %v1053 = vmul.f32 %v1051, %v921
    %1055 = vrot.lane.b32.xlu0 %v1052, 32
    %v1056 = vpop.permute.xlu0 %1055
    %v1058 = vmul.f32 %v1051, %v1056
    %1060 = vrot.lane.b32.xlu0 %v1058, 32
    %v1061 = vpop.permute.xlu0 %1060
    %v1063 = vadd.f32 %v1053, %v1061
    %v1064 = vtanh.pop %v1063
    %1066 = vrot.lane.b32.xlu0 %v1064, 32
    %v1067 = vpop.permute.xlu0 %1066
    %v1069 = vmul.f32 %v1051, %v1067
    %v1070 = vld [vmem:[%s901 + $0x8] sm:$0xff]
    %v1071 = vadd.f32 %v1070, %v1042
    %v1072 = vxor.u32 %v1071, 2147483648
    %v1073 = vmul.f32 %v1072, 1.442695
    %v1074 = vpow.pop %v1073
    %v1075 = vadd.f32 %v1074, 1.0
    %v1076 = vrcp.pop %v1075
    %v1077 = vmul.f32 1.0, %v1076
    %v1078 = vtanh.pop %v1071
    %v1079 = vmul.f32 %v1077, %v950
    %1081 = vrot.lane.b32.xlu0 %v1078, 32
    %v1082 = vpop.permute.xlu0 %1081
    %v1084 = vmul.f32 %v1077, %v1082
    %1086 = vrot.lane.b32.xlu0 %v1084, 32
    %v1087 = vpop.permute.xlu0 %1086
    %v1089 = vadd.f32 %v1079, %v1087
    %v1090 = vtanh.pop %v1089
    %1092 = vrot.lane.b32.xlu0 %v1090, 32
    %v1093 = vpop.permute.xlu0 %1092
    %v1095 = vmul.f32 %v1077, %v1093
    %1097 = vrot.lane.b32.xlu0 %v1069, 64
    %v1098 = vpop.permute.xlu0 %1097
    %1100 = vst.msk [vmem:[%s967] sm:$0xff] %vm219, %v1098
    %1102 = vrot.lane.b32.xlu0 %v1095, 96
    %v1103 = vpop.permute.xlu0 %1102
    %1105 = vst.msk [vmem:[%s961] sm:$0xff] %vm532, %v1103
    %v1106 = vsel %vm219, %v1098, %v1103
    %v1108 = vsel %vm389, %v1106, 0
    %1110 = vmatprep.subr.mxu0 %v374
    %1111 = vmatpush1.msra.mxu0 %v373
    %1112 = vmatprep.subr.mxu0 %v376
    %1113 = vmatpush1.msra.mxu0 %v375
    %1114 = vmatprep.subr.mxu0 %v378
    %1115 = vmatpush1.msra.mxu0 %v377
    %1116 = vmatprep.subr.mxu0 %v380
    %1117 = vmatpush1.msra.mxu0 %v379
    %1118 = vmatprep.subr.mxu0 %v382
    %1119 = vmatpush1.msra.mxu0 %v381
    %1120 = vmatprep.subr.mxu0 %v384
    %1121 = vmatpush1.msra.mxu0 %v383
    %1122 = vmatprep.subr.mxu0 %v386
    %1123 = vmatpush1.msra.mxu0 %v385
    %1124 = vmatprep.subr.mxu0 %v388
    %1125 = vmatpush1.msra.mxu0 %v387
    %1126 = vmatprep.subr.mxu0 0.0
    %1127 = vmatpush1.msra.mxu0 0.0
    %1128 = vmatprep.subr.mxu0 0.0
    %1129 = vmatpush1.msra.mxu0 0.0
    %1130 = vmatprep.subr.mxu0 0.0
    %1131 = vmatpush1.msra.mxu0 0.0
    %1132 = vmatprep.subr.mxu0 0.0
    %1133 = vmatpush1.msra.mxu0 0.0
    %1134 = vmatprep.subr.mxu0 0.0
    %1135 = vmatpush1.msra.mxu0 0.0
    %1136 = vmatprep.subr.mxu0 0.0
    %1137 = vmatpush1.msra.mxu0 0.0
    %1138 = vmatprep.subr.mxu0 0.0
    %1139 = vmatpush1.msra.mxu0 0.0
    %1140 = vmatprep.subr.mxu0 0.0
    %1141 = vmatpush1.msra.mxu0 0.0
    %1142 = vmatprep.subr.mxu0 0.0
    %1143 = vmatpush1.msra.mxu0 0.0
    %1144 = vmatprep.subr.mxu0 0.0
    %1145 = vmatpush1.msra.mxu0 0.0
    %1146 = vmatprep.subr.mxu0 0.0
    %1147 = vmatpush1.msra.mxu0 0.0
    %1148 = vmatprep.subr.mxu0 0.0
    %1149 = vmatpush1.msra.mxu0 0.0
    %1150 = vmatprep.subr.mxu0 0.0
    %1151 = vmatpush1.msra.mxu0 0.0
    %1152 = vmatprep.subr.mxu0 0.0
    %1153 = vmatpush1.msra.mxu0 0.0
    %1154 = vmatprep.subr.mxu0 0.0
    %1155 = vmatpush1.msra.mxu0 0.0
    %1156 = vmatprep.subr.mxu0 0.0
    %1157 = vmatpush1.msra.mxu0 0.0
    %1158 = vmatprep.subr.mxu0 0.0
    %1159 = vmatpush1.msra.mxu0 0.0
    %1160 = vmatprep.subr.mxu0 0.0
    %1161 = vmatpush1.msra.mxu0 0.0
    %1162 = vmatprep.subr.mxu0 0.0
    %1163 = vmatpush1.msra.mxu0 0.0
    %1164 = vmatprep.subr.mxu0 0.0
    %1165 = vmatpush1.msra.mxu0 0.0
    %1166 = vmatprep.subr.mxu0 0.0
    %1167 = vmatpush1.msra.mxu0 0.0
    %1168 = vmatprep.subr.mxu0 0.0
    %1169 = vmatpush1.msra.mxu0 0.0
    %1170 = vmatprep.subr.mxu0 0.0
    %1171 = vmatpush1.msra.mxu0 0.0
    %1172 = vmatprep.subr.mxu0 0.0
    %1173 = vmatpush1.msra.mxu0 0.0
    %1174 = vmatprep.mubr.f32.mxu0 0.0
    %1175 = vmatmul.mubr.f32.gmra.mrb[0].mxu0 %v1108
    %v1176 = vpop.f32.mrb[0].mxu0
    %v1177 = vadd.f32 0.0, %v1176
    %v1178 = vpop.f32.mrb[0].mxu0
    %v1179 = vadd.f32 0.0, %v1178
    %1180 = vdwg.mxu0
    %v1181 = vld [vmem:[%s785] sm:$0xff]
    %v1182 = vadd.f32 %v1181, %v1177
    %v1183 = vxor.u32 %v1182, 2147483648
    %v1184 = vmul.f32 %v1183, 1.442695
    %v1185 = vpow.pop %v1184
    %v1186 = vadd.f32 %v1185, 1.0
    %v1187 = vrcp.pop %v1186
    %v1188 = vmul.f32 1.0, %v1187
    %v1189 = vtanh.pop %v1182
    %v1190 = vmul.f32 %v1188, %v1063
    %1192 = vrot.lane.b32.xlu0 %v1189, 32
    %v1193 = vpop.permute.xlu0 %1192
    %v1195 = vmul.f32 %v1188, %v1193
    %1197 = vrot.lane.b32.xlu0 %v1195, 32
    %v1198 = vpop.permute.xlu0 %1197
    %v1200 = vadd.f32 %v1190, %v1198
    %v1201 = vtanh.pop %v1200
    %1203 = vrot.lane.b32.xlu0 %v1201, 32
    %v1204 = vpop.permute.xlu0 %1203
    %v1206 = vmul.f32 %v1188, %v1204
    %v1207 = vld [vmem:[%s756 + $0x8] sm:$0xff]
    %v1208 = vadd.f32 %v1207, %v1179
    %v1209 = vxor.u32 %v1208, 2147483648
    %v1210 = vmul.f32 %v1209, 1.442695
    %v1211 = vpow.pop %v1210
    %v1212 = vadd.f32 %v1211, 1.0
    %v1213 = vrcp.pop %v1212
    %v1214 = vmul.f32 1.0, %v1213
    %v1215 = vtanh.pop %v1208
    %v1216 = vmul.f32 %v1214, %v1089
    %1218 = vrot.lane.b32.xlu0 %v1215, 32
    %v1219 = vpop.permute.xlu0 %1218
    %v1221 = vmul.f32 %v1214, %v1219
    %1223 = vrot.lane.b32.xlu0 %v1221, 32
    %v1224 = vpop.permute.xlu0 %1223
    %v1226 = vadd.f32 %v1216, %v1224
    %v1227 = vtanh.pop %v1226
    %1229 = vrot.lane.b32.xlu0 %v1227, 32
    %v1230 = vpop.permute.xlu0 %1229
    %v1232 = vmul.f32 %v1214, %v1230
    %1234 = vrot.lane.b32.xlu0 %v1206, 64
    %v1235 = vpop.permute.xlu0 %1234
    %1237 = vst.msk [vmem:[%s822] sm:$0xff] %vm219, %v1235
    %1239 = vrot.lane.b32.xlu0 %v1232, 96
    %v1240 = vpop.permute.xlu0 %1239
    %1242 = vst.msk [vmem:[%s816] sm:$0xff] %vm532, %v1240
    %v1243 = vsel %vm219, %v1235, %v1240
    %v1245 = vsel %vm389, %v1243, 0
    %1247 = vmatprep.subr.mxu0 %v374
    %1248 = vmatpush1.msra.mxu0 %v373
    %1249 = vmatprep.subr.mxu0 %v376
    %1250 = vmatpush1.msra.mxu0 %v375
    %1251 = vmatprep.subr.mxu0 %v378
    %1252 = vmatpush1.msra.mxu0 %v377
    %1253 = vmatprep.subr.mxu0 %v380
    %1254 = vmatpush1.msra.mxu0 %v379
    %1255 = vmatprep.subr.mxu0 %v382
    %1256 = vmatpush1.msra.mxu0 %v381
    %1257 = vmatprep.subr.mxu0 %v384
    %1258 = vmatpush1.msra.mxu0 %v383
    %1259 = vmatprep.subr.mxu0 %v386
    %1260 = vmatpush1.msra.mxu0 %v385
    %1261 = vmatprep.subr.mxu0 %v388
    %1262 = vmatpush1.msra.mxu0 %v387
    %1263 = vmatprep.subr.mxu0 0.0
    %1264 = vmatpush1.msra.mxu0 0.0
    %1265 = vmatprep.subr.mxu0 0.0
    %1266 = vmatpush1.msra.mxu0 0.0
    %1267 = vmatprep.subr.mxu0 0.0
    %1268 = vmatpush1.msra.mxu0 0.0
    %1269 = vmatprep.subr.mxu0 0.0
    %1270 = vmatpush1.msra.mxu0 0.0
    %1271 = vmatprep.subr.mxu0 0.0
    %1272 = vmatpush1.msra.mxu0 0.0
    %1273 = vmatprep.subr.mxu0 0.0
    %1274 = vmatpush1.msra.mxu0 0.0
    %1275 = vmatprep.subr.mxu0 0.0
    %1276 = vmatpush1.msra.mxu0 0.0
    %1277 = vmatprep.subr.mxu0 0.0
    %1278 = vmatpush1.msra.mxu0 0.0
    %1279 = vmatprep.subr.mxu0 0.0
    %1280 = vmatpush1.msra.mxu0 0.0
    %1281 = vmatprep.subr.mxu0 0.0
    %1282 = vmatpush1.msra.mxu0 0.0
    %1283 = vmatprep.subr.mxu0 0.0
    %1284 = vmatpush1.msra.mxu0 0.0
    %1285 = vmatprep.subr.mxu0 0.0
    %1286 = vmatpush1.msra.mxu0 0.0
    %1287 = vmatprep.subr.mxu0 0.0
    %1288 = vmatpush1.msra.mxu0 0.0
    %1289 = vmatprep.subr.mxu0 0.0
    %1290 = vmatpush1.msra.mxu0 0.0
    %1291 = vmatprep.subr.mxu0 0.0
    %1292 = vmatpush1.msra.mxu0 0.0
    %1293 = vmatprep.subr.mxu0 0.0
    %1294 = vmatpush1.msra.mxu0 0.0
    %1295 = vmatprep.subr.mxu0 0.0
    %1296 = vmatpush1.msra.mxu0 0.0
    %1297 = vmatprep.subr.mxu0 0.0
    %1298 = vmatpush1.msra.mxu0 0.0
    %1299 = vmatprep.subr.mxu0 0.0
    %1300 = vmatpush1.msra.mxu0 0.0
    %1301 = vmatprep.subr.mxu0 0.0
    %1302 = vmatpush1.msra.mxu0 0.0
    %1303 = vmatprep.subr.mxu0 0.0
    %1304 = vmatpush1.msra.mxu0 0.0
    %1305 = vmatprep.subr.mxu0 0.0
    %1306 = vmatpush1.msra.mxu0 0.0
    %1307 = vmatprep.subr.mxu0 0.0
    %1308 = vmatpush1.msra.mxu0 0.0
    %1309 = vmatprep.subr.mxu0 0.0
    %1310 = vmatpush1.msra.mxu0 0.0
    %1311 = vmatprep.mubr.f32.mxu0 0.0
    %1312 = vmatmul.mubr.f32.gmra.mrb[0].mxu0 %v1245
    %v1313 = vpop.f32.mrb[0].mxu0
    %v1314 = vadd.f32 0.0, %v1313
    %v1315 = vpop.f32.mrb[0].mxu0
    %v1316 = vadd.f32 0.0, %v1315
    %1317 = vdwg.mxu0
    %v1318 = vld [vmem:[%s640] sm:$0xff]
    %v1319 = vadd.f32 %v1318, %v1314
    %v1320 = vxor.u32 %v1319, 2147483648
    %v1321 = vmul.f32 %v1320, 1.442695
    %v1322 = vpow.pop %v1321
    %v1323 = vadd.f32 %v1322, 1.0
    %v1324 = vrcp.pop %v1323
    %v1325 = vmul.f32 1.0, %v1324
    %v1326 = vtanh.pop %v1319
    %v1327 = vmul.f32 %v1325, %v1200
    %1329 = vrot.lane.b32.xlu0 %v1326, 32
    %v1330 = vpop.permute.xlu0 %1329
    %v1332 = vmul.f32 %v1325, %v1330
    %1334 = vrot.lane.b32.xlu0 %v1332, 32
    %v1335 = vpop.permute.xlu0 %1334
    %v1337 = vadd.f32 %v1327, %v1335
    %v1338 = vtanh.pop %v1337
    %1340 = vrot.lane.b32.xlu0 %v1338, 32
    %v1341 = vpop.permute.xlu0 %1340
    %v1343 = vmul.f32 %v1325, %v1341
    %v1344 = vld [vmem:[%s611 + $0x8] sm:$0xff]
    %v1345 = vadd.f32 %v1344, %v1316
    %v1346 = vxor.u32 %v1345, 2147483648
    %v1347 = vmul.f32 %v1346, 1.442695
    %v1348 = vpow.pop %v1347
    %v1349 = vadd.f32 %v1348, 1.0
    %v1350 = vrcp.pop %v1349
    %v1351 = vmul.f32 1.0, %v1350
    %v1352 = vtanh.pop %v1345
    %v1353 = vmul.f32 %v1351, %v1226
    %1355 = vrot.lane.b32.xlu0 %v1352, 32
    %v1356 = vpop.permute.xlu0 %1355
    %v1358 = vmul.f32 %v1351, %v1356
    %1360 = vrot.lane.b32.xlu0 %v1358, 32
    %v1361 = vpop.permute.xlu0 %1360
    %v1363 = vadd.f32 %v1353, %v1361
    %v1364 = vtanh.pop %v1363
    %1366 = vrot.lane.b32.xlu0 %v1364, 32
    %v1367 = vpop.permute.xlu0 %1366
    %v1369 = vmul.f32 %v1351, %v1367
    %1371 = vrot.lane.b32.xlu0 %v1343, 64
    %v1372 = vpop.permute.xlu0 %1371
    %1374 = vst.msk [vmem:[%s677] sm:$0xff] %vm219, %v1372
    %1376 = vrot.lane.b32.xlu0 %v1369, 96
    %v1377 = vpop.permute.xlu0 %1376
    %1379 = vst.msk [vmem:[%s671] sm:$0xff] %vm532, %v1377
    %v1380 = vsel %vm219, %v1372, %v1377
    %v1382 = vsel %vm389, %v1380, 0
    %1384 = vmatprep.subr.mxu0 %v374
    %1385 = vmatpush1.msra.mxu0 %v373
    %1386 = vmatprep.subr.mxu0 %v376
    %1387 = vmatpush1.msra.mxu0 %v375
    %1388 = vmatprep.subr.mxu0 %v378
    %1389 = vmatpush1.msra.mxu0 %v377
    %1390 = vmatprep.subr.mxu0 %v380
    %1391 = vmatpush1.msra.mxu0 %v379
    %1392 = vmatprep.subr.mxu0 %v382
    %1393 = vmatpush1.msra.mxu0 %v381
    %1394 = vmatprep.subr.mxu0 %v384
    %1395 = vmatpush1.msra.mxu0 %v383
    %1396 = vmatprep.subr.mxu0 %v386
    %1397 = vmatpush1.msra.mxu0 %v385
    %1398 = vmatprep.subr.mxu0 %v388
    %1399 = vmatpush1.msra.mxu0 %v387
    %1400 = vmatprep.subr.mxu0 0.0
    %1401 = vmatpush1.msra.mxu0 0.0
    %1402 = vmatprep.subr.mxu0 0.0
    %1403 = vmatpush1.msra.mxu0 0.0
    %1404 = vmatprep.subr.mxu0 0.0
    %1405 = vmatpush1.msra.mxu0 0.0
    %1406 = vmatprep.subr.mxu0 0.0
    %1407 = vmatpush1.msra.mxu0 0.0
    %1408 = vmatprep.subr.mxu0 0.0
    %1409 = vmatpush1.msra.mxu0 0.0
    %1410 = vmatprep.subr.mxu0 0.0
    %1411 = vmatpush1.msra.mxu0 0.0
    %1412 = vmatprep.subr.mxu0 0.0
    %1413 = vmatpush1.msra.mxu0 0.0
    %1414 = vmatprep.subr.mxu0 0.0
    %1415 = vmatpush1.msra.mxu0 0.0
    %1416 = vmatprep.subr.mxu0 0.0
    %1417 = vmatpush1.msra.mxu0 0.0
    %1418 = vmatprep.subr.mxu0 0.0
    %1419 = vmatpush1.msra.mxu0 0.0
    %1420 = vmatprep.subr.mxu0 0.0
    %1421 = vmatpush1.msra.mxu0 0.0
    %1422 = vmatprep.subr.mxu0 0.0
    %1423 = vmatpush1.msra.mxu0 0.0
    %1424 = vmatprep.subr.mxu0 0.0
    %1425 = vmatpush1.msra.mxu0 0.0
    %1426 = vmatprep.subr.mxu0 0.0
    %1427 = vmatpush1.msra.mxu0 0.0
    %1428 = vmatprep.subr.mxu0 0.0
    %1429 = vmatpush1.msra.mxu0 0.0
    %1430 = vmatprep.subr.mxu0 0.0
    %1431 = vmatpush1.msra.mxu0 0.0
    %1432 = vmatprep.subr.mxu0 0.0
    %1433 = vmatpush1.msra.mxu0 0.0
    %1434 = vmatprep.subr.mxu0 0.0
    %1435 = vmatpush1.msra.mxu0 0.0
    %1436 = vmatprep.subr.mxu0 0.0
    %1437 = vmatpush1.msra.mxu0 0.0
    %1438 = vmatprep.subr.mxu0 0.0
    %1439 = vmatpush1.msra.mxu0 0.0
    %1440 = vmatprep.subr.mxu0 0.0
    %1441 = vmatpush1.msra.mxu0 0.0
    %1442 = vmatprep.subr.mxu0 0.0
    %1443 = vmatpush1.msra.mxu0 0.0
    %1444 = vmatprep.subr.mxu0 0.0
    %1445 = vmatpush1.msra.mxu0 0.0
    %1446 = vmatprep.subr.mxu0 0.0
    %1447 = vmatpush1.msra.mxu0 0.0
    %1448 = vmatprep.mubr.f32.mxu0 0.0
    %1449 = vmatmul.mubr.f32.gmra.mrb[0].mxu0 %v1382
    %v1450 = vpop.f32.mrb[0].mxu0
    %v1451 = vadd.f32 0.0, %v1450
    %v1452 = vpop.f32.mrb[0].mxu0
    %v1453 = vadd.f32 0.0, %v1452
    %1454 = vdwg.mxu0
    %v1455 = vld [vmem:[%s495] sm:$0xff]
    %v1456 = vadd.f32 %v1455, %v1451
    %v1457 = vxor.u32 %v1456, 2147483648
    %v1458 = vmul.f32 %v1457, 1.442695
    %v1459 = vpow.pop %v1458
    %v1460 = vadd.f32 %v1459, 1.0
    %v1461 = vrcp.pop %v1460
    %v1462 = vmul.f32 1.0, %v1461
    %v1463 = vtanh.pop %v1456
    %v1464 = vmul.f32 %v1462, %v1337
    %1466 = vrot.lane.b32.xlu0 %v1463, 32
    %v1467 = vpop.permute.xlu0 %1466
    %v1469 = vmul.f32 %v1462, %v1467
    %1471 = vrot.lane.b32.xlu0 %v1469, 32
    %v1472 = vpop.permute.xlu0 %1471
    %v1474 = vadd.f32 %v1464, %v1472
    %v1475 = vtanh.pop %v1474
    %1477 = vrot.lane.b32.xlu0 %v1475, 32
    %v1478 = vpop.permute.xlu0 %1477
    %v1480 = vmul.f32 %v1462, %v1478
    %v1481 = vld [vmem:[%s466 + $0x8] sm:$0xff]
    %v1482 = vadd.f32 %v1481, %v1453
    %v1483 = vxor.u32 %v1482, 2147483648
    %v1484 = vmul.f32 %v1483, 1.442695
    %v1485 = vpow.pop %v1484
    %v1486 = vadd.f32 %v1485, 1.0
    %v1487 = vrcp.pop %v1486
    %v1488 = vmul.f32 1.0, %v1487
    %v1489 = vtanh.pop %v1482
    %v1490 = vmul.f32 %v1488, %v1363
    %1492 = vrot.lane.b32.xlu0 %v1489, 32
    %v1493 = vpop.permute.xlu0 %1492
    %v1495 = vmul.f32 %v1488, %v1493
    %1497 = vrot.lane.b32.xlu0 %v1495, 32
    %v1498 = vpop.permute.xlu0 %1497
    %v1500 = vadd.f32 %v1490, %v1498
    %v1501 = vtanh.pop %v1500
    %1503 = vrot.lane.b32.xlu0 %v1501, 32
    %v1504 = vpop.permute.xlu0 %1503
    %v1506 = vmul.f32 %v1488, %v1504
    %1508 = vrot.lane.b32.xlu0 %v1480, 64
    %v1509 = vpop.permute.xlu0 %1508
    %1511 = vst.msk [vmem:[%s531] sm:$0xff] %vm219, %v1509
    %1513 = vrot.lane.b32.xlu0 %v1506, 96
    %v1514 = vpop.permute.xlu0 %1513
    %1516 = vst.msk [vmem:[%s6] sm:$0xff] %vm532, %v1514
    %v1517 = vsel %vm219, %v1509, %v1514
    %vm1518 = vcmask 254976
    %1519 = vst.msk [vmem:[%s7] sm:$0x3] %vm1518, %v1517
    %1521 = vrot.lane.b32.xlu0 %v1517, 96
    %v1522 = vpop.permute.xlu0 %1521
    %s1524 = scalar_lea.vmem %s7, 2
    %1525 = vst.msk [vmem:[%s1524] sm:$0x3] %vm1518, %v1522
    %1527 = vrot.lane.b32.xlu0 %v1474, 96
    %v1528 = vpop.permute.xlu0 %1527
    %1530 = vst.msk [vmem:[%s8] sm:$0x3] %vm1518, %v1528
    %1532 = vrot.lane.b32.xlu0 %v1500, 96
    %v1533 = vpop.permute.xlu0 %1532
    %s1535 = scalar_lea.vmem %s8, 2
    %1536 = vst.msk [vmem:[%s1535] sm:$0x3] %vm1518, %v1533
    // Predicated region
    $region30: #{rnn_forward.2} parent=1 // pred_check
      _
    $region31: #{rnn_forward.2} parent=1 // pred_check_branch
      %1538 = sbr.rel (0) target = $region33
    $region32: #{rnn_forward.2} parent=1 // pred_region
      _
    $region33: #{rnn_forward.2} parent=1 // pred_fallthru
      _
    // Predicated region
    $region34: #{rnn_forward.2} parent=1 // pred_check
      _
    $region35: #{rnn_forward.2} parent=1 // pred_check_branch
      %1540 = sbr.rel (0) target = $region37
    $region36: #{rnn_forward.2} parent=1 // pred_region
      _
    $region37: #{rnn_forward.2} parent=1 // pred_fallthru
      _
    // Predicated region
    $region38: #{rnn_forward.2} parent=1 // pred_check
      _
    $region39: #{rnn_forward.2} parent=1 // pred_check_branch
      %1542 = sbr.rel (0) target = $region41
    $region40: #{rnn_forward.2} parent=1 // pred_region
      _
    $region41: #{rnn_forward.2} parent=1 // pred_fallthru
      _
    // Predicated region
    $region42: #{rnn_forward.2} parent=1 // pred_check
      _
    $region43: #{rnn_forward.2} parent=1 // pred_check_branch
      %1544 = sbr.rel (0) target = $region45
    $region44: #{rnn_forward.2} parent=1 // pred_region
      _
    $region45: #{rnn_forward.2} parent=1 // pred_fallthru
      _
    // Predicated region
    $region46: #{rnn_forward.2} parent=1 // pred_check
      _
    $region47: #{rnn_forward.2} parent=1 // pred_check_branch
      %1546 = sbr.rel (0) target = $region49
    $region48: #{rnn_forward.2} parent=1 // pred_region
      _
    $region49: #{rnn_forward.2} parent=1 // pred_fallthru
      _
    // Predicated region
    $region50: #{rnn_forward.2} parent=1 // pred_check
      _
    $region51: #{rnn_forward.2} parent=1 // pred_check_branch
      %1548 = sbr.rel (0) target = $region53
    $region52: #{rnn_forward.2} parent=1 // pred_region
      _
    $region53: #{rnn_forward.2} parent=1 // pred_fallthru
      _
    %1549 = vsyncpa [#allocation4], 1

</llo_original>
